<compile_context>
chip_gen: v7x
topology: tpu7x:2x2x1
jax: 0.10.0
libtpu: 0.0.40
codegen_flags: <defaults>
</compile_context>

<pallas_src>
import functools
import math

import numpy as np
import jax
import jax.numpy as jnp
from jax import lax
from jax.experimental import pallas as pl
from jax.experimental.pallas import tpu as pltpu


def _layernorm(v, gamma, beta, eps=1e-5):
    # matches the tutorial LayerNormalization: biased variance, eps inside rsqrt
    mean = jnp.mean(v, axis=-1, keepdims=True)
    var = jnp.mean((v - mean) ** 2, axis=-1, keepdims=True)
    return gamma * ((v - mean) * lax.rsqrt(var + eps)) + beta


def _softmax_lastdim(s):
    m = jnp.max(s, axis=-1, keepdims=True)
    e = jnp.exp(s - m)
    # EUP reciprocal (free slot) instead of a VALU divide
    return e * pl.reciprocal(jnp.sum(e, axis=-1, keepdims=True), approx=True)


def _decoder_layer_kernel(
    x_ref, y_ref,
    w_qkv_ref, b_qkv_ref, w_os_ref, b_os_ref, g1_ref, be1_ref,
    w_kv_ref, b_kv_ref, w_q_ref, b_q_ref, w_oc_ref, b_oc_ref, g2_ref, be2_ref,
    w_f1_ref, b_f1_ref, w_f2_ref, b_f2_ref, g3_ref, be3_ref,
    out_ref,
    ks_sc, vs_sc, kc_sc, vc_sc,
    *, num_heads, q_tile,
):
    f32 = jnp.float32
    H = num_heads
    S = y_ref.shape[1]
    D = y_ref.shape[2]
    hd = D // H
    scale = 1.0 / math.sqrt(hd)
    md = w_qkv_ref.dtype          # MXU operand dtype (bf16 by default, f32 optional)

    qi = pl.program_id(1)
    q0 = pl.multiple_of(qi * q_tile, q_tile)

    def mm(a, w):                                # MXU matmul, f32 accumulation
        return jnp.dot(a.astype(md), w.astype(md), preferred_element_type=f32)

    def heads_lead(t):                           # (rows, D) -> (H, rows, hd)
        return t.reshape(t.shape[0], H, hd).transpose(1, 0, 2)

    # ---- K/V projections: computed ONCE per batch element (qi == 0), reused by all q tiles ----
    @pl.when(qi == 0)
    def _():
        y_full = y_ref[0]                        # (S, D) decoder stream (self-attn K/V source)
        x_full = x_ref[0]                        # (S, D) encoder output (cross-attn K/V source)
        k_s = mm(y_full, w_qkv_ref[:, 1 * D:2 * D]) + b_qkv_ref[:, 1 * D:2 * D]
        v_s = mm(y_full, w_qkv_ref[:, 2 * D:3 * D]) + b_qkv_ref[:, 2 * D:3 * D]
        k_c = mm(x_full, w_kv_ref[:, 0 * D:1 * D]) + b_kv_ref[:, 0 * D:1 * D]
        v_c = mm(x_full, w_kv_ref[:, 1 * D:2 * D]) + b_kv_ref[:, 1 * D:2 * D]
        # head-leading relayout done once per sequence, stored in MXU dtype
        ks_sc[...] = heads_lead(k_s).astype(md)
        vs_sc[...] = heads_lead(v_s).astype(md)
        kc_sc[...] = heads_lead(k_c).astype(md)
        vc_sc[...] = heads_lead(v_c).astype(md)

    y_q = y_ref[0, pl.ds(q0, q_tile), :]         # (TQ, D) this step's query rows / residual

    def attend(q2d, kh, vh, causal):
        # kh/vh already head-leading (H, SK, hd); only small Q/O relayouts per tile
        sk = kh.shape[1]
        qh = q2d.reshape(q_tile, H, hd).transpose(1, 0, 2).astype(md)   # (H, TQ, hd)
        s = jnp.einsum("hqd,hkd->hqk", qh, kh,
                       preferred_element_type=f32) * scale
        if causal:
            # in-kernel additive causal mask (no (S,S) HBM->VMEM DMA)
            row = q0 + lax.broadcasted_iota(jnp.int32, (q_tile, sk), 0)
            col = lax.broadcasted_iota(jnp.int32, (q_tile, sk), 1)
            s = s + jnp.where(col > row, f32(-1e9), f32(0.0))[None, :, :]
        p = _softmax_lastdim(s)
        o = jnp.einsum("hqk,hkd->hqd", p.astype(md), vh,
                       preferred_element_type=f32)                      # (H, TQ, hd)
        # head-major concat: matches torch reshape(B,S,H,hd) -> (B,S,D)
        return o.transpose(1, 0, 2).reshape(q_tile, D)

    # ---------------- self attention (K/V over the full decoder sequence) ----------------
    q_s = mm(y_q, w_qkv_ref[:, 0:D]) + b_qkv_ref[:, 0:D]
    sa = mm(attend(q_s, ks_sc[...], vs_sc[...], causal=True), w_os_ref[...]) + b_os_ref[...]
    # dropout1: identity (eval mode)
    y1 = _layernorm(sa + y_q, g1_ref[...], be1_ref[...])

    # ---------------- encoder-decoder (cross) attention ----------------
    q_c = mm(y1, w_q_ref[...]) + b_q_ref[...]
    ca = mm(attend(q_c, kc_sc[...], vc_sc[...], causal=False), w_oc_ref[...]) + b_oc_ref[...]
    # dropout2: identity (eval mode)
    y2 = _layernorm(ca + y1, g2_ref[...], be2_ref[...])

    # ---------------- position-wise FFN ----------------
    h1 = jnp.maximum(mm(y2, w_f1_ref[...]) + b_f1_ref[...], 0.0)   # ReLU (ffn dropout = identity)
    ff = mm(h1, w_f2_ref[...]) + b_f2_ref[...]
    # dropout3: identity (eval mode)
    y3 = _layernorm(ff + y2, g3_ref[...], be3_ref[...])

    out_ref[0] = y3.astype(out_ref.dtype)


_PARAM_ORDER = [
    "w_qkv", "b_qkv", "w_os", "b_os", "g1", "be1",
    "w_kv", "b_kv", "w_q", "b_q", "w_oc", "b_oc", "g2", "be2",
    "w_f1", "b_f1", "w_f2", "b_f2", "g3", "be3",
]


def _head_group_perm(d_model, num_heads, parts):
    """Column permutation: per-head interleaved [q|k|v] chunks -> [all-Q|all-K|all-V]."""
    hd = d_model // num_heads
    cols = []
    for part in range(parts):
        for h in range(num_heads):
            base = h * parts * hd + part * hd
            cols.extend(range(base, base + hd))
    return np.asarray(cols, dtype=np.int32)


def _device_kind():
    try:
        return jax.devices()[0].device_kind.lower()
    except Exception:
        return ""


def _vmem_capacity_bytes():
    """Physical VMEM per TensorCore, generation-aware."""
    try:
        cap = int(pltpu.get_tpu_info().vmem_capacity_bytes)
        if cap > 0:
            return cap
    except Exception:
        pass
    kind = _device_kind()
    if "v7" in kind or "7x" in kind:
        return 64 << 20            # v7x: 64 MiB per TC
    return 128 << 20               # v5e / v6e


def _q_tile_target():
    kind = _device_kind()
    if "v5 lite" in kind or "v5lite" in kind or "v5e" in kind:
        return 128                 # v5e: 128-wide MXU, lowest HBM BW -> smaller working set
    return 256                     # v6e / v7x: 2x256^2 MXU height


def _pick_q_tile(seq_len, target):
    if seq_len <= target:
        return seq_len
    for t in (target, 256, 128):   # MXU-height-aligned candidates first
        if t <= seq_len and seq_len % t == 0:
            return t
    for t in range((min(target, seq_len) // 8) * 8, 7, -8):   # largest multiple-of-8 divisor
        if seq_len % t == 0:
            return t
    return seq_len


def _buffered_supported():
    """Construction-time feature check only (no runtime retry with a larger footprint)."""
    try:
        pl.BlockSpec((8, 128), lambda b, qi: (0, 0), pipeline_mode=pl.Buffered(1))
        return True
    except Exception:
        return False


def decoder_layer(x, y, params, num_heads, *, mxu_dtype=jnp.bfloat16, q_tile=None):
    """Forward pass of DecoderLayer (eval mode) as a single Pallas TPU kernel."""
    B, S, D = y.shape
    assert x.shape == (B, S, D)
    assert D % num_heads == 0, "d_model must be divisible by num_heads"
    hd = D // num_heads

    if q_tile is None:
        q_tile = _pick_q_tile(S, _q_tile_target())
    assert S % q_tile == 0 and (q_tile % 8 == 0 or q_tile == S)
    # TODO(synk): if activations move to bf16, q_tile must become a multiple of 16 (sublane packing).

    # --- one-time wrapper-side weight plumbing (kept out of the kernel) ---
    p = dict(params)
    perm3 = _head_group_perm(D, num_heads, 3)
    perm2 = _head_group_perm(D, num_heads, 2)
    p["w_qkv"] = jnp.take(p["w_qkv"], perm3, axis=1)
    p["b_qkv"] = jnp.take(p["b_qkv"], perm3, axis=1)
    p["w_kv"] = jnp.take(p["w_kv"], perm2, axis=1)
    p["b_kv"] = jnp.take(p["b_kv"], perm2, axis=1)
    for k in p:                                  # bf16 MXU operands by default (f32 accumulation in-kernel)
        if k.startswith("w_"):
            p[k] = p[k].astype(mxu_dtype)
    param_arrays = [p[k] for k in _PARAM_ORDER]

    kernel = functools.partial(_decoder_layer_kernel, num_heads=num_heads, q_tile=q_tile)

    seq_spec = pl.BlockSpec((1, S, D), lambda b, qi: (b, 0, 0))
    out_spec = pl.BlockSpec((1, q_tile, D), lambda b, qi: (b, qi, 0))

    buffered_ok = _buffered_supported()

    def const_spec(shape):
        nd = len(shape)
        idx = lambda b, qi, _nd=nd: (0,) * _nd
        if buffered_ok:
            # constant index map -> weights don't need double buffering
            return pl.BlockSpec(shape, idx, pipeline_mode=pl.Buffered(1))
        return pl.BlockSpec(shape, idx)

    in_specs = [seq_spec, seq_spec] + [const_spec(a.shape) for a in param_arrays]

    # persistent head-leading K/V scratch (self K, self V, cross K, cross V)
    scratch_shapes = [pltpu.VMEM((num_heads, S, hd), mxu_dtype) for _ in range(4)]

    # --- generation-aware VMEM budget (single-buffered params counted once) ---
    itemsize = x.dtype.itemsize
    md_bytes = jnp.dtype(mxu_dtype).itemsize
    ffn_hidden = params["w_f1"].shape[1]
    param_bytes = sum(a.size * a.dtype.itemsize for a in param_arrays)
    param_bytes *= (1 if buffered_ok else 2)
    io_bytes = 2 * 2 * S * D * itemsize          # x & y full-seq blocks, double-buffered
    out_bytes = 2 * q_tile * D * itemsize        # output tile, double-buffered
    kv_scratch = 4 * S * D * md_bytes            # persistent K/V scratch
    act_bytes = (num_heads * q_tile * S * 4      # attention logits/probs (f32)
                 + q_tile * (4 * D + ffn_hidden) * 4
                 + 5 * S * D * 4)                # transient full-seq projections at qi == 0
    est = int(1.25 * (param_bytes + io_bytes + out_bytes + kv_scratch + 2 * act_bytes))
    cap = _vmem_capacity_bytes()
    vmem_limit = int(min(max(est, 32 << 20), cap - (8 << 20)))
    # TODO(synk): when resident weights + K/V scratch exceed `cap` (huge D/ffn_hidden on v7x),
    #             stream FFN weight slabs and tile KV (flash) instead of keeping them resident.

    return pl.pallas_call(
        kernel,
        out_shape=jax.ShapeDtypeStruct((B, S, D), y.dtype),
        grid=(B, S // q_tile),
        in_specs=in_specs,
        out_specs=out_spec,
        scratch_shapes=scratch_shapes,
        compiler_params=pltpu.CompilerParams(
            # batch "parallel" (megacore/v7x); qi "arbitrary" so the K/V scratch written at
            # qi == 0 is reused by the later q tiles of the same batch element.
            dimension_semantics=("parallel", "arbitrary"),
            vmem_limit_bytes=vmem_limit),
    )(x, y, *param_arrays)


def init_params(key, d_model, ffn_hidden):
    def linear(k, fan_in, fan_out):
        k1, k2 = jax.random.split(k)
        w = jax.random.normal(k1, (fan_in, fan_out), jnp.float32) / math.sqrt(fan_in)
        b = jax.random.normal(k2, (1, fan_out), jnp.float32) * 0.02
        return w, b

    ks = jax.random.split(key, 8)
    p = {}
    p["w_qkv"], p["b_qkv"] = linear(ks[0], d_model, 3 * d_model)   # self-attn qkv (per-head [q|k|v])
    p["w_os"], p["b_os"] = linear(ks[1], d_model, d_model)         # self-attn out proj
    p["w_kv"], p["b_kv"] = linear(ks[2], d_model, 2 * d_model)     # cross-attn kv (per-head [k|v])
    p["w_q"], p["b_q"] = linear(ks[3], d_model, d_model)           # cross-attn q_layer
    p["w_oc"], p["b_oc"] = linear(ks[4], d_model, d_model)         # cross-attn out proj
    p["w_f1"], p["b_f1"] = linear(ks[5], d_model, ffn_hidden)      # ffn linear1
    p["w_f2"], p["b_f2"] = linear(ks[6], ffn_hidden, d_model)      # ffn linear2
    for i in (1, 2, 3):
        p[f"g{i}"] = jnp.ones((1, d_model), jnp.float32)           # LayerNorm gamma
        p[f"be{i}"] = jnp.zeros((1, d_model), jnp.float32)         # LayerNorm beta
    return p


def _reference(x, y, params, num_heads):
    """Pure-JAX port of the PyTorch DecoderLayer (eval mode), per-head interleaved layout."""
    B, S, D = y.shape
    hd = D // num_heads
    scale = 1.0 / math.sqrt(hd)
    mask = jnp.where(jnp.triu(jnp.ones((S, S), dtype=bool), k=1), -1e9, 0.0).astype(jnp.float32)

    def ln(v, g, b):
        m = jnp.mean(v, -1, keepdims=True)
        var = jnp.mean((v - m) ** 2, -1, keepdims=True)
        return g * ((v - m) * lax.rsqrt(var + 1e-5)) + b

    def smax(s):
        e = jnp.exp(s - jnp.max(s, -1, keepdims=True))
        return e / jnp.sum(e, -1, keepdims=True)

    def one(xb, yb):
        resid = yb
        qkv = yb @ params["w_qkv"] + params["b_qkv"]
        heads = []
        for h in range(num_heads):
            b0 = h * 3 * hd
            qh = qkv[:, b0:b0 + hd]
            kh = qkv[:, b0 + hd:b0 + 2 * hd]
            vh = qkv[:, b0 + 2 * hd:b0 + 3 * hd]
            heads.append(smax(qh @ kh.T * scale + mask) @ vh)
        yb = ln(jnp.concatenate(heads, -1) @ params["w_os"] + params["b_os"] + resid,
                params["g1"], params["be1"])
        resid = yb
        kv = xb @ params["w_kv"] + params["b_kv"]
        q = yb @ params["w_q"] + params["b_q"]
        heads = []
        for h in range(num_heads):
            b0 = h * 2 * hd
            kh = kv[:, b0:b0 + hd]
            vh = kv[:, b0 + hd:b0 + 2 * hd]
            qh = q[:, h * hd:(h + 1) * hd]
            heads.append(smax(qh @ kh.T * scale) @ vh)
        yb = ln(jnp.concatenate(heads, -1) @ params["w_oc"] + params["b_oc"] + resid,
                params["g2"], params["be2"])
        resid = yb
        h1 = jnp.maximum(yb @ params["w_f1"] + params["b_f1"], 0.0)
        return ln(h1 @ params["w_f2"] + params["b_f2"] + resid, params["g3"], params["be3"])

    return jnp.stack([one(x[b], y[b]) for b in range(B)], axis=0)


if __name__ == "__main__":
    B, S, D, NUM_HEADS, FFN_HIDDEN = 2, 8, 32, 4, 64

    key = jax.random.PRNGKey(0)
    kx, ky, kp = jax.random.split(key, 3)
    x = jax.random.normal(kx, (B, S, D), jnp.float32)   # encoder output
    y = jax.random.normal(ky, (B, S, D), jnp.float32)   # decoder input
    params = init_params(kp, D, FFN_HIDDEN)

    out = decoder_layer(x, y, params, NUM_HEADS)        # causal decoder mask generated in-kernel
    out = jax.block_until_ready(out)

    assert out.shape == (B, S, D)
    assert bool(jnp.all(jnp.isfinite(out)))

    ref = _reference(x, y, params, NUM_HEADS)
    err = float(jnp.max(jnp.abs(out - ref)))
    # bf16 MXU operands (f32 accumulation) + approx reciprocal vs exact f32 reference
    assert err < 5e-2, f"kernel deviates from reference by {err}"
    print("KERNEL_OK")
</pallas_src>

<mosaic_0001>
module attributes {stable_mosaic.version = 11 : i64} {
  func.func @_decoder_layer_kernel(%arg0: i32, %arg1: i32, %arg2: memref<1x8x32xf32, #tpu.memory_space<vmem>>, %arg3: memref<1x8x32xf32, #tpu.memory_space<vmem>>, %arg4: memref<32x96xbf16, #tpu.memory_space<vmem>>, %arg5: memref<1x96xf32, #tpu.memory_space<vmem>>, %arg6: memref<32x32xbf16, #tpu.memory_space<vmem>>, %arg7: memref<1x32xf32, #tpu.memory_space<vmem>>, %arg8: memref<1x32xf32, #tpu.memory_space<vmem>>, %arg9: memref<1x32xf32, #tpu.memory_space<vmem>>, %arg10: memref<32x64xbf16, #tpu.memory_space<vmem>>, %arg11: memref<1x64xf32, #tpu.memory_space<vmem>>, %arg12: memref<32x32xbf16, #tpu.memory_space<vmem>>, %arg13: memref<1x32xf32, #tpu.memory_space<vmem>>, %arg14: memref<32x32xbf16, #tpu.memory_space<vmem>>, %arg15: memref<1x32xf32, #tpu.memory_space<vmem>>, %arg16: memref<1x32xf32, #tpu.memory_space<vmem>>, %arg17: memref<1x32xf32, #tpu.memory_space<vmem>>, %arg18: memref<32x64xbf16, #tpu.memory_space<vmem>>, %arg19: memref<1x64xf32, #tpu.memory_space<vmem>>, %arg20: memref<64x32xbf16, #tpu.memory_space<vmem>>, %arg21: memref<1x32xf32, #tpu.memory_space<vmem>>, %arg22: memref<1x32xf32, #tpu.memory_space<vmem>>, %arg23: memref<1x32xf32, #tpu.memory_space<vmem>>, %arg24: memref<1x8x32xf32, #tpu.memory_space<vmem>>, %arg25: memref<4x8x8xbf16, #tpu.memory_space<vmem>>, %arg26: memref<4x8x8xbf16, #tpu.memory_space<vmem>>, %arg27: memref<4x8x8xbf16, #tpu.memory_space<vmem>>, %arg28: memref<4x8x8xbf16, #tpu.memory_space<vmem>>) attributes {dimension_semantics = [#tpu.dimension_semantics<parallel>, #tpu.dimension_semantics<arbitrary>], iteration_bounds = array<i64: 2, 1>, scalar_prefetch = 0 : i64, scratch_operands = 4 : i64, tpu.core_type = #tpu.core_type<tc>, window_params = [{transform_indices = @transform_0, window_bounds = array<i64: 1, 8, 32>}, {transform_indices = @transform_1, window_bounds = array<i64: 1, 8, 32>}, {pipeline_mode = #tpu.pipeline_mode<synchronous>, transform_indices = @transform_2, window_bounds = array<i64: 32, 96>}, {pipeline_mode = #tpu.pipeline_mode<synchronous>, transform_indices = @transform_3, window_bounds = array<i64: 1, 96>}, {pipeline_mode = #tpu.pipeline_mode<synchronous>, transform_indices = @transform_4, window_bounds = array<i64: 32, 32>}, {pipeline_mode = #tpu.pipeline_mode<synchronous>, transform_indices = @transform_5, window_bounds = array<i64: 1, 32>}, {pipeline_mode = #tpu.pipeline_mode<synchronous>, transform_indices = @transform_6, window_bounds = array<i64: 1, 32>}, {pipeline_mode = #tpu.pipeline_mode<synchronous>, transform_indices = @transform_7, window_bounds = array<i64: 1, 32>}, {pipeline_mode = #tpu.pipeline_mode<synchronous>, transform_indices = @transform_8, window_bounds = array<i64: 32, 64>}, {pipeline_mode = #tpu.pipeline_mode<synchronous>, transform_indices = @transform_9, window_bounds = array<i64: 1, 64>}, {pipeline_mode = #tpu.pipeline_mode<synchronous>, transform_indices = @transform_10, window_bounds = array<i64: 32, 32>}, {pipeline_mode = #tpu.pipeline_mode<synchronous>, transform_indices = @transform_11, window_bounds = array<i64: 1, 32>}, {pipeline_mode = #tpu.pipeline_mode<synchronous>, transform_indices = @transform_12, window_bounds = array<i64: 32, 32>}, {pipeline_mode = #tpu.pipeline_mode<synchronous>, transform_indices = @transform_13, window_bounds = array<i64: 1, 32>}, {pipeline_mode = #tpu.pipeline_mode<synchronous>, transform_indices = @transform_14, window_bounds = array<i64: 1, 32>}, {pipeline_mode = #tpu.pipeline_mode<synchronous>, transform_indices = @transform_15, window_bounds = array<i64: 1, 32>}, {pipeline_mode = #tpu.pipeline_mode<synchronous>, transform_indices = @transform_16, window_bounds = array<i64: 32, 64>}, {pipeline_mode = #tpu.pipeline_mode<synchronous>, transform_indices = @transform_17, window_bounds = array<i64: 1, 64>}, {pipeline_mode = #tpu.pipeline_mode<synchronous>, transform_indices = @transform_18, window_bounds = array<i64: 64, 32>}, {pipeline_mode = #tpu.pipeline_mode<synchronous>, transform_indices = @transform_19, window_bounds = array<i64: 1, 32>}, {pipeline_mode = #tpu.pipeline_mode<synchronous>, transform_indices = @transform_20, window_bounds = array<i64: 1, 32>}, {pipeline_mode = #tpu.pipeline_mode<synchronous>, transform_indices = @transform_21, window_bounds = array<i64: 1, 32>}, {transform_indices = @transform_22, window_bounds = array<i64: 1, 8, 32>}]} {
    %c8_i32 = arith.constant 8 : i32
    %0 = arith.muli %arg1, %c8_i32 : i32
    %1 = tpu.assume_multiple %0, 8 : i32
    %c0_i32 = arith.constant 0 : i32
    %2 = arith.cmpi eq, %arg1, %c0_i32 : i32
    %3 = arith.extui %2 : i1 to i32
    %c0_i32_0 = arith.constant 0 : i32
    %4 = arith.cmpi ne, %3, %c0_i32_0 : i32
    scf.if %4 {
      %c0_86 = arith.constant 0 : index
      %c0_87 = arith.constant 0 : index
      %c0_88 = arith.constant 0 : index
      %179 = vector.load %arg3[%c0_86, %c0_87, %c0_88] : memref<1x8x32xf32, #tpu.memory_space<vmem>>, vector<1x8x32xf32>
      %180 = vector.shape_cast %179 : vector<1x8x32xf32> to vector<8x32xf32>
      %c0_89 = arith.constant 0 : index
      %c0_90 = arith.constant 0 : index
      %c0_91 = arith.constant 0 : index
      %181 = vector.load %arg2[%c0_89, %c0_90, %c0_91] : memref<1x8x32xf32, #tpu.memory_space<vmem>>, vector<1x8x32xf32>
      %182 = vector.shape_cast %181 : vector<1x8x32xf32> to vector<8x32xf32>
      %c0_92 = arith.constant 0 : index
      %c32 = arith.constant 32 : index
      %183 = vector.load %arg4[%c0_92, %c32] : memref<32x96xbf16, #tpu.memory_space<vmem>>, vector<32x32xbf16>
      %184 = arith.truncf %180 : vector<8x32xf32> to vector<8x32xbf16>
      %cst_93 = arith.constant dense<0.000000e+00> : vector<8x32xf32>
      %185 = tpu.matmul %184, %183, %cst_93 {dimension_numbers = #tpu.dot_dimension_numbers<[1], [0], [0], [1], [0, 0, 1, 1], [], []>} : vector<8x32xbf16>, vector<32x32xbf16>, vector<8x32xf32> -> vector<8x32xf32>
      %c0_94 = arith.constant 0 : index
      %c32_95 = arith.constant 32 : index
      %186 = vector.load %arg5[%c0_94, %c32_95] : memref<1x96xf32, #tpu.memory_space<vmem>>, vector<1x32xf32>
      %187 = vector.broadcast %186 : vector<1x32xf32> to vector<8x32xf32>
      %188 = arith.addf %185, %187 : vector<8x32xf32>
      %c0_96 = arith.constant 0 : index
      %c64 = arith.constant 64 : index
      %189 = vector.load %arg4[%c0_96, %c64] : memref<32x96xbf16, #tpu.memory_space<vmem>>, vector<32x32xbf16>
      %190 = arith.truncf %180 : vector<8x32xf32> to vector<8x32xbf16>
      %cst_97 = arith.constant dense<0.000000e+00> : vector<8x32xf32>
      %191 = tpu.matmul %190, %189, %cst_97 {dimension_numbers = #tpu.dot_dimension_numbers<[1], [0], [0], [1], [0, 0, 1, 1], [], []>} : vector<8x32xbf16>, vector<32x32xbf16>, vector<8x32xf32> -> vector<8x32xf32>
      %c0_98 = arith.constant 0 : index
      %c64_99 = arith.constant 64 : index
      %192 = vector.load %arg5[%c0_98, %c64_99] : memref<1x96xf32, #tpu.memory_space<vmem>>, vector<1x32xf32>
      %193 = vector.broadcast %192 : vector<1x32xf32> to vector<8x32xf32>
      %194 = arith.addf %191, %193 : vector<8x32xf32>
      %c0_100 = arith.constant 0 : index
      %c0_101 = arith.constant 0 : index
      %195 = vector.load %arg10[%c0_100, %c0_101] : memref<32x64xbf16, #tpu.memory_space<vmem>>, vector<32x32xbf16>
      %196 = arith.truncf %182 : vector<8x32xf32> to vector<8x32xbf16>
      %cst_102 = arith.constant dense<0.000000e+00> : vector<8x32xf32>
      %197 = tpu.matmul %196, %195, %cst_102 {dimension_numbers = #tpu.dot_dimension_numbers<[1], [0], [0], [1], [0, 0, 1, 1], [], []>} : vector<8x32xbf16>, vector<32x32xbf16>, vector<8x32xf32> -> vector<8x32xf32>
      %c0_103 = arith.constant 0 : index
      %c0_104 = arith.constant 0 : index
      %198 = vector.load %arg11[%c0_103, %c0_104] : memref<1x64xf32, #tpu.memory_space<vmem>>, vector<1x32xf32>
      %199 = vector.broadcast %198 : vector<1x32xf32> to vector<8x32xf32>
      %200 = arith.addf %197, %199 : vector<8x32xf32>
      %c0_105 = arith.constant 0 : index
      %c32_106 = arith.constant 32 : index
      %201 = vector.load %arg10[%c0_105, %c32_106] : memref<32x64xbf16, #tpu.memory_space<vmem>>, vector<32x32xbf16>
      %202 = arith.truncf %182 : vector<8x32xf32> to vector<8x32xbf16>
      %cst_107 = arith.constant dense<0.000000e+00> : vector<8x32xf32>
      %203 = tpu.matmul %202, %201, %cst_107 {dimension_numbers = #tpu.dot_dimension_numbers<[1], [0], [0], [1], [0, 0, 1, 1], [], []>} : vector<8x32xbf16>, vector<32x32xbf16>, vector<8x32xf32> -> vector<8x32xf32>
      %c0_108 = arith.constant 0 : index
      %c32_109 = arith.constant 32 : index
      %204 = vector.load %arg11[%c0_108, %c32_109] : memref<1x64xf32, #tpu.memory_space<vmem>>, vector<1x32xf32>
      %205 = vector.broadcast %204 : vector<1x32xf32> to vector<8x32xf32>
      %206 = arith.addf %203, %205 : vector<8x32xf32>
      %207 = vector.shape_cast %188 : vector<8x32xf32> to vector<8x4x8xf32>
      %208 = tpu.transpose %207, [1, 0, 2] : vector<8x4x8xf32> -> vector<4x8x8xf32>
      %209 = arith.truncf %208 : vector<4x8x8xf32> to vector<4x8x8xbf16>
      %c0_110 = arith.constant 0 : index
      %c0_111 = arith.constant 0 : index
      %c0_112 = arith.constant 0 : index
      %210 = vector.load %arg25[%c0_110, %c0_111, %c0_112] : memref<4x8x8xbf16, #tpu.memory_space<vmem>>, vector<4x8x8xbf16>
      tpu.vector_store %arg25[%c0_110, %c0_111, %c0_112], %209 {strides = array<i32>} : memref<4x8x8xbf16, #tpu.memory_space<vmem>>, vector<4x8x8xbf16>,
      %211 = vector.shape_cast %194 : vector<8x32xf32> to vector<8x4x8xf32>
      %212 = tpu.transpose %211, [1, 0, 2] : vector<8x4x8xf32> -> vector<4x8x8xf32>
      %213 = arith.truncf %212 : vector<4x8x8xf32> to vector<4x8x8xbf16>
      %c0_113 = arith.constant 0 : index
      %c0_114 = arith.constant 0 : index
      %c0_115 = arith.constant 0 : index
      %214 = vector.load %arg26[%c0_113, %c0_114, %c0_115] : memref<4x8x8xbf16, #tpu.memory_space<vmem>>, vector<4x8x8xbf16>
      tpu.vector_store %arg26[%c0_113, %c0_114, %c0_115], %213 {strides = array<i32>} : memref<4x8x8xbf16, #tpu.memory_space<vmem>>, vector<4x8x8xbf16>,
      %215 = vector.shape_cast %200 : vector<8x32xf32> to vector<8x4x8xf32>
      %216 = tpu.transpose %215, [1, 0, 2] : vector<8x4x8xf32> -> vector<4x8x8xf32>
      %217 = arith.truncf %216 : vector<4x8x8xf32> to vector<4x8x8xbf16>
      %c0_116 = arith.constant 0 : index
      %c0_117 = arith.constant 0 : index
      %c0_118 = arith.constant 0 : index
      %218 = vector.load %arg27[%c0_116, %c0_117, %c0_118] : memref<4x8x8xbf16, #tpu.memory_space<vmem>>, vector<4x8x8xbf16>
      tpu.vector_store %arg27[%c0_116, %c0_117, %c0_118], %217 {strides = array<i32>} : memref<4x8x8xbf16, #tpu.memory_space<vmem>>, vector<4x8x8xbf16>,
      %219 = vector.shape_cast %206 : vector<8x32xf32> to vector<8x4x8xf32>
      %220 = tpu.transpose %219, [1, 0, 2] : vector<8x4x8xf32> -> vector<4x8x8xf32>
      %221 = arith.truncf %220 : vector<4x8x8xf32> to vector<4x8x8xbf16>
      %c0_119 = arith.constant 0 : index
      %c0_120 = arith.constant 0 : index
      %c0_121 = arith.constant 0 : index
      %222 = vector.load %arg28[%c0_119, %c0_120, %c0_121] : memref<4x8x8xbf16, #tpu.memory_space<vmem>>, vector<4x8x8xbf16>
      tpu.vector_store %arg28[%c0_119, %c0_120, %c0_121], %221 {strides = array<i32>} : memref<4x8x8xbf16, #tpu.memory_space<vmem>>, vector<4x8x8xbf16>,
    } else {
    }
    %c0 = arith.constant 0 : index
    %5 = arith.index_cast %1 : i32 to index
    %c0_1 = arith.constant 0 : index
    %6 = vector.load %arg3[%c0, %5, %c0_1] : memref<1x8x32xf32, #tpu.memory_space<vmem>>, vector<1x8x32xf32>
    %7 = vector.shape_cast %6 : vector<1x8x32xf32> to vector<8x32xf32>
    %c0_2 = arith.constant 0 : index
    %c0_3 = arith.constant 0 : index
    %8 = vector.load %arg4[%c0_2, %c0_3] : memref<32x96xbf16, #tpu.memory_space<vmem>>, vector<32x32xbf16>
    %9 = arith.truncf %7 : vector<8x32xf32> to vector<8x32xbf16>
    %cst = arith.constant dense<0.000000e+00> : vector<8x32xf32>
    %10 = tpu.matmul %9, %8, %cst {dimension_numbers = #tpu.dot_dimension_numbers<[1], [0], [0], [1], [0, 0, 1, 1], [], []>} : vector<8x32xbf16>, vector<32x32xbf16>, vector<8x32xf32> -> vector<8x32xf32>
    %c0_4 = arith.constant 0 : index
    %c0_5 = arith.constant 0 : index
    %11 = vector.load %arg5[%c0_4, %c0_5] : memref<1x96xf32, #tpu.memory_space<vmem>>, vector<1x32xf32>
    %12 = vector.broadcast %11 : vector<1x32xf32> to vector<8x32xf32>
    %13 = arith.addf %10, %12 : vector<8x32xf32>
    %c0_6 = arith.constant 0 : index
    %c0_7 = arith.constant 0 : index
    %c0_8 = arith.constant 0 : index
    %14 = vector.load %arg25[%c0_6, %c0_7, %c0_8] : memref<4x8x8xbf16, #tpu.memory_space<vmem>>, vector<4x8x8xbf16>
    %c0_9 = arith.constant 0 : index
    %c0_10 = arith.constant 0 : index
    %c0_11 = arith.constant 0 : index
    %15 = vector.load %arg26[%c0_9, %c0_10, %c0_11] : memref<4x8x8xbf16, #tpu.memory_space<vmem>>, vector<4x8x8xbf16>
    %16 = vector.shape_cast %13 : vector<8x32xf32> to vector<8x4x8xf32>
    %17 = tpu.transpose %16, [1, 0, 2] : vector<8x4x8xf32> -> vector<4x8x8xf32>
    %18 = arith.truncf %17 : vector<4x8x8xf32> to vector<4x8x8xbf16>
    "tpu.trace_start"() <{level = 10 : i32, message = "hqd,hkd->hqk"}> : () -> ()
    %cst_12 = arith.constant dense<0.000000e+00> : vector<4x8x8xf32>
    %19 = tpu.matmul %18, %14, %cst_12 {dimension_numbers = #tpu.dot_dimension_numbers<[2], [2], [1], [1], [0, 0, 0, 1, 1, 1], [0], [0]>} : vector<4x8x8xbf16>, vector<4x8x8xbf16>, vector<4x8x8xf32> -> vector<4x8x8xf32>
    "tpu.trace_stop"() : () -> ()
    %cst_13 = arith.constant 0.353553385 : f32
    %20 = vector.broadcast %cst_13 : f32 to vector<4x8x8xf32>
    %21 = arith.mulf %19, %20 : vector<4x8x8xf32>
    %22 = tpu.iota {dimensions = array<i32: 0>} : vector<8x8xi32>
    %23 = vector.broadcast %1 : i32 to vector<8x8xi32>
    %24 = arith.addi %23, %22 : vector<8x8xi32>
    %25 = tpu.iota {dimensions = array<i32: 1>} : vector<8x8xi32>
    %26 = arith.cmpi sgt, %25, %24 : vector<8x8xi32>
    %cst_14 = arith.constant -1.000000e+09 : f32
    %cst_15 = arith.constant 0.000000e+00 : f32
    %27 = vector.broadcast %cst_14 : f32 to vector<8x8xf32>
    %28 = vector.broadcast %cst_15 : f32 to vector<8x8xf32>
    %29 = arith.select %26, %27, %28 : vector<8x8xi1>, vector<8x8xf32>
    %30 = vector.shape_cast %29 : vector<8x8xf32> to vector<1x8x8xf32>
    %31 = vector.broadcast %30 : vector<1x8x8xf32> to vector<4x8x8xf32>
    %32 = arith.addf %21, %31 : vector<4x8x8xf32>
    %cst_16 = arith.constant dense<0xFF800000> : vector<4x8xf32>
    %33 = vector.multi_reduction <maximumf>, %32, %cst_16 [2] : vector<4x8x8xf32> to vector<4x8xf32>
    %34 = vector.shape_cast %33 : vector<4x8xf32> to vector<4x8x1xf32>
    %35 = vector.broadcast %34 : vector<4x8x1xf32> to vector<4x8x8xf32>
    %36 = arith.subf %32, %35 : vector<4x8x8xf32>
    %37 = math.exp %36 : vector<4x8x8xf32>
    %cst_17 = arith.constant dense<0.000000e+00> : vector<4x8xf32>
    %38 = vector.multi_reduction <add>, %37, %cst_17 [2] : vector<4x8x8xf32> to vector<4x8xf32>
    %39 = vector.shape_cast %38 : vector<4x8xf32> to vector<4x8x1xf32>
    %40 = tpu.reciprocal %39 {approx = true} : vector<4x8x1xf32> -> vector<4x8x1xf32>
    %41 = vector.broadcast %40 : vector<4x8x1xf32> to vector<4x8x8xf32>
    %42 = arith.mulf %37, %41 : vector<4x8x8xf32>
    %43 = arith.truncf %42 : vector<4x8x8xf32> to vector<4x8x8xbf16>
    "tpu.trace_start"() <{level = 10 : i32, message = "hqk,hkd->hqd"}> : () -> ()
    %cst_18 = arith.constant dense<0.000000e+00> : vector<4x8x8xf32>
    %44 = tpu.matmul %43, %15, %cst_18 {dimension_numbers = #tpu.dot_dimension_numbers<[2], [1], [1], [2], [0, 0, 0, 1, 1, 2], [0], [0]>} : vector<4x8x8xbf16>, vector<4x8x8xbf16>, vector<4x8x8xf32> -> vector<4x8x8xf32>
    "tpu.trace_stop"() : () -> ()
    %45 = tpu.transpose %44, [1, 0, 2] : vector<4x8x8xf32> -> vector<8x4x8xf32>
    %46 = vector.shape_cast %45 : vector<8x4x8xf32> to vector<8x32xf32>
    %c0_19 = arith.constant 0 : index
    %c0_20 = arith.constant 0 : index
    %47 = vector.load %arg6[%c0_19, %c0_20] : memref<32x32xbf16, #tpu.memory_space<vmem>>, vector<32x32xbf16>
    %48 = arith.truncf %46 : vector<8x32xf32> to vector<8x32xbf16>
    %cst_21 = arith.constant dense<0.000000e+00> : vector<8x32xf32>
    %49 = tpu.matmul %48, %47, %cst_21 {dimension_numbers = #tpu.dot_dimension_numbers<[1], [0], [0], [1], [0, 0, 1, 1], [], []>} : vector<8x32xbf16>, vector<32x32xbf16>, vector<8x32xf32> -> vector<8x32xf32>
    %c0_22 = arith.constant 0 : index
    %c0_23 = arith.constant 0 : index
    %50 = vector.load %arg7[%c0_22, %c0_23] : memref<1x32xf32, #tpu.memory_space<vmem>>, vector<1x32xf32>
    %51 = vector.broadcast %50 : vector<1x32xf32> to vector<8x32xf32>
    %52 = arith.addf %49, %51 : vector<8x32xf32>
    %53 = arith.addf %52, %7 : vector<8x32xf32>
    %c0_24 = arith.constant 0 : index
    %c0_25 = arith.constant 0 : index
    %54 = vector.load %arg8[%c0_24, %c0_25] : memref<1x32xf32, #tpu.memory_space<vmem>>, vector<1x32xf32>
    %c0_26 = arith.constant 0 : index
    %c0_27 = arith.constant 0 : index
    %55 = vector.load %arg9[%c0_26, %c0_27] : memref<1x32xf32, #tpu.memory_space<vmem>>, vector<1x32xf32>
    %cst_28 = arith.constant dense<0.000000e+00> : vector<8xf32>
    %56 = vector.multi_reduction <add>, %53, %cst_28 [1] : vector<8x32xf32> to vector<8xf32>
    %57 = vector.shape_cast %56 : vector<8xf32> to vector<8x1xf32>
    %cst_29 = arith.constant 3.200000e+01 : f32
    %58 = vector.broadcast %cst_29 : f32 to vector<8x1xf32>
    %59 = arith.divf %57, %58 : vector<8x1xf32>
    %60 = vector.broadcast %59 : vector<8x1xf32> to vector<8x32xf32>
    %61 = arith.subf %53, %60 : vector<8x32xf32>
    %62 = arith.mulf %61, %61 : vector<8x32xf32>
    %cst_30 = arith.constant dense<0.000000e+00> : vector<8xf32>
    %63 = vector.multi_reduction <add>, %62, %cst_30 [1] : vector<8x32xf32> to vector<8xf32>
    %64 = vector.shape_cast %63 : vector<8xf32> to vector<8x1xf32>
    %cst_31 = arith.constant 3.200000e+01 : f32
    %65 = vector.broadcast %cst_31 : f32 to vector<8x1xf32>
    %66 = arith.divf %64, %65 : vector<8x1xf32>
    %67 = vector.broadcast %59 : vector<8x1xf32> to vector<8x32xf32>
    %68 = arith.subf %53, %67 : vector<8x32xf32>
    %cst_32 = arith.constant 9.99999974E-6 : f32
    %69 = vector.broadcast %cst_32 : f32 to vector<8x1xf32>
    %70 = arith.addf %66, %69 : vector<8x1xf32>
    %71 = math.rsqrt %70 : vector<8x1xf32>
    %72 = vector.broadcast %71 : vector<8x1xf32> to vector<8x32xf32>
    %73 = arith.mulf %68, %72 : vector<8x32xf32>
    %74 = vector.broadcast %54 : vector<1x32xf32> to vector<8x32xf32>
    %75 = arith.mulf %74, %73 : vector<8x32xf32>
    %76 = vector.broadcast %55 : vector<1x32xf32> to vector<8x32xf32>
    %77 = arith.addf %75, %76 : vector<8x32xf32>
    %c0_33 = arith.constant 0 : index
    %c0_34 = arith.constant 0 : index
    %78 = vector.load %arg12[%c0_33, %c0_34] : memref<32x32xbf16, #tpu.memory_space<vmem>>, vector<32x32xbf16>
    %79 = arith.truncf %77 : vector<8x32xf32> to vector<8x32xbf16>
    %cst_35 = arith.constant dense<0.000000e+00> : vector<8x32xf32>
    %80 = tpu.matmul %79, %78, %cst_35 {dimension_numbers = #tpu.dot_dimension_numbers<[1], [0], [0], [1], [0, 0, 1, 1], [], []>} : vector<8x32xbf16>, vector<32x32xbf16>, vector<8x32xf32> -> vector<8x32xf32>
    %c0_36 = arith.constant 0 : index
    %c0_37 = arith.constant 0 : index
    %81 = vector.load %arg13[%c0_36, %c0_37] : memref<1x32xf32, #tpu.memory_space<vmem>>, vector<1x32xf32>
    %82 = vector.broadcast %81 : vector<1x32xf32> to vector<8x32xf32>
    %83 = arith.addf %80, %82 : vector<8x32xf32>
    %c0_38 = arith.constant 0 : index
    %c0_39 = arith.constant 0 : index
    %c0_40 = arith.constant 0 : index
    %84 = vector.load %arg27[%c0_38, %c0_39, %c0_40] : memref<4x8x8xbf16, #tpu.memory_space<vmem>>, vector<4x8x8xbf16>
    %c0_41 = arith.constant 0 : index
    %c0_42 = arith.constant 0 : index
    %c0_43 = arith.constant 0 : index
    %85 = vector.load %arg28[%c0_41, %c0_42, %c0_43] : memref<4x8x8xbf16, #tpu.memory_space<vmem>>, vector<4x8x8xbf16>
    %86 = vector.shape_cast %83 : vector<8x32xf32> to vector<8x4x8xf32>
    %87 = tpu.transpose %86, [1, 0, 2] : vector<8x4x8xf32> -> vector<4x8x8xf32>
    %88 = arith.truncf %87 : vector<4x8x8xf32> to vector<4x8x8xbf16>
    "tpu.trace_start"() <{level = 10 : i32, message = "hqd,hkd->hqk"}> : () -> ()
    %cst_44 = arith.constant dense<0.000000e+00> : vector<4x8x8xf32>
    %89 = tpu.matmul %88, %84, %cst_44 {dimension_numbers = #tpu.dot_dimension_numbers<[2], [2], [1], [1], [0, 0, 0, 1, 1, 1], [0], [0]>} : vector<4x8x8xbf16>, vector<4x8x8xbf16>, vector<4x8x8xf32> -> vector<4x8x8xf32>
    "tpu.trace_stop"() : () -> ()
    %cst_45 = arith.constant 0.353553385 : f32
    %90 = vector.broadcast %cst_45 : f32 to vector<4x8x8xf32>
    %91 = arith.mulf %89, %90 : vector<4x8x8xf32>
    %cst_46 = arith.constant dense<0xFF800000> : vector<4x8xf32>
    %92 = vector.multi_reduction <maximumf>, %91, %cst_46 [2] : vector<4x8x8xf32> to vector<4x8xf32>
    %93 = vector.shape_cast %92 : vector<4x8xf32> to vector<4x8x1xf32>
    %94 = vector.broadcast %93 : vector<4x8x1xf32> to vector<4x8x8xf32>
    %95 = arith.subf %91, %94 : vector<4x8x8xf32>
    %96 = math.exp %95 : vector<4x8x8xf32>
    %cst_47 = arith.constant dense<0.000000e+00> : vector<4x8xf32>
    %97 = vector.multi_reduction <add>, %96, %cst_47 [2] : vector<4x8x8xf32> to vector<4x8xf32>
    %98 = vector.shape_cast %97 : vector<4x8xf32> to vector<4x8x1xf32>
    %99 = tpu.reciprocal %98 {approx = true} : vector<4x8x1xf32> -> vector<4x8x1xf32>
    %100 = vector.broadcast %99 : vector<4x8x1xf32> to vector<4x8x8xf32>
    %101 = arith.mulf %96, %100 : vector<4x8x8xf32>
    %102 = arith.truncf %101 : vector<4x8x8xf32> to vector<4x8x8xbf16>
    "tpu.trace_start"() <{level = 10 : i32, message = "hqk,hkd->hqd"}> : () -> ()
    %cst_48 = arith.constant dense<0.000000e+00> : vector<4x8x8xf32>
    %103 = tpu.matmul %102, %85, %cst_48 {dimension_numbers = #tpu.dot_dimension_numbers<[2], [1], [1], [2], [0, 0, 0, 1, 1, 2], [0], [0]>} : vector<4x8x8xbf16>, vector<4x8x8xbf16>, vector<4x8x8xf32> -> vector<4x8x8xf32>
    "tpu.trace_stop"() : () -> ()
    %104 = tpu.transpose %103, [1, 0, 2] : vector<4x8x8xf32> -> vector<8x4x8xf32>
    %105 = vector.shape_cast %104 : vector<8x4x8xf32> to vector<8x32xf32>
    %c0_49 = arith.constant 0 : index
    %c0_50 = arith.constant 0 : index
    %106 = vector.load %arg14[%c0_49, %c0_50] : memref<32x32xbf16, #tpu.memory_space<vmem>>, vector<32x32xbf16>
    %107 = arith.truncf %105 : vector<8x32xf32> to vector<8x32xbf16>
    %cst_51 = arith.constant dense<0.000000e+00> : vector<8x32xf32>
    %108 = tpu.matmul %107, %106, %cst_51 {dimension_numbers = #tpu.dot_dimension_numbers<[1], [0], [0], [1], [0, 0, 1, 1], [], []>} : vector<8x32xbf16>, vector<32x32xbf16>, vector<8x32xf32> -> vector<8x32xf32>
    %c0_52 = arith.constant 0 : index
    %c0_53 = arith.constant 0 : index
    %109 = vector.load %arg15[%c0_52, %c0_53] : memref<1x32xf32, #tpu.memory_space<vmem>>, vector<1x32xf32>
    %110 = vector.broadcast %109 : vector<1x32xf32> to vector<8x32xf32>
    %111 = arith.addf %108, %110 : vector<8x32xf32>
    %112 = arith.addf %111, %77 : vector<8x32xf32>
    %c0_54 = arith.constant 0 : index
    %c0_55 = arith.constant 0 : index
    %113 = vector.load %arg16[%c0_54, %c0_55] : memref<1x32xf32, #tpu.memory_space<vmem>>, vector<1x32xf32>
    %c0_56 = arith.constant 0 : index
    %c0_57 = arith.constant 0 : index
    %114 = vector.load %arg17[%c0_56, %c0_57] : memref<1x32xf32, #tpu.memory_space<vmem>>, vector<1x32xf32>
    %cst_58 = arith.constant dense<0.000000e+00> : vector<8xf32>
    %115 = vector.multi_reduction <add>, %112, %cst_58 [1] : vector<8x32xf32> to vector<8xf32>
    %116 = vector.shape_cast %115 : vector<8xf32> to vector<8x1xf32>
    %cst_59 = arith.constant 3.200000e+01 : f32
    %117 = vector.broadcast %cst_59 : f32 to vector<8x1xf32>
    %118 = arith.divf %116, %117 : vector<8x1xf32>
    %119 = vector.broadcast %118 : vector<8x1xf32> to vector<8x32xf32>
    %120 = arith.subf %112, %119 : vector<8x32xf32>
    %121 = arith.mulf %120, %120 : vector<8x32xf32>
    %cst_60 = arith.constant dense<0.000000e+00> : vector<8xf32>
    %122 = vector.multi_reduction <add>, %121, %cst_60 [1] : vector<8x32xf32> to vector<8xf32>
    %123 = vector.shape_cast %122 : vector<8xf32> to vector<8x1xf32>
    %cst_61 = arith.constant 3.200000e+01 : f32
    %124 = vector.broadcast %cst_61 : f32 to vector<8x1xf32>
    %125 = arith.divf %123, %124 : vector<8x1xf32>
    %126 = vector.broadcast %118 : vector<8x1xf32> to vector<8x32xf32>
    %127 = arith.subf %112, %126 : vector<8x32xf32>
    %cst_62 = arith.constant 9.99999974E-6 : f32
    %128 = vector.broadcast %cst_62 : f32 to vector<8x1xf32>
    %129 = arith.addf %125, %128 : vector<8x1xf32>
    %130 = math.rsqrt %129 : vector<8x1xf32>
    %131 = vector.broadcast %130 : vector<8x1xf32> to vector<8x32xf32>
    %132 = arith.mulf %127, %131 : vector<8x32xf32>
    %133 = vector.broadcast %113 : vector<1x32xf32> to vector<8x32xf32>
    %134 = arith.mulf %133, %132 : vector<8x32xf32>
    %135 = vector.broadcast %114 : vector<1x32xf32> to vector<8x32xf32>
    %136 = arith.addf %134, %135 : vector<8x32xf32>
    %c0_63 = arith.constant 0 : index
    %c0_64 = arith.constant 0 : index
    %137 = vector.load %arg18[%c0_63, %c0_64] : memref<32x64xbf16, #tpu.memory_space<vmem>>, vector<32x64xbf16>
    %138 = arith.truncf %136 : vector<8x32xf32> to vector<8x32xbf16>
    %cst_65 = arith.constant dense<0.000000e+00> : vector<8x64xf32>
    %139 = tpu.matmul %138, %137, %cst_65 {dimension_numbers = #tpu.dot_dimension_numbers<[1], [0], [0], [1], [0, 0, 1, 1], [], []>} : vector<8x32xbf16>, vector<32x64xbf16>, vector<8x64xf32> -> vector<8x64xf32>
    %c0_66 = arith.constant 0 : index
    %c0_67 = arith.constant 0 : index
    %140 = vector.load %arg19[%c0_66, %c0_67] : memref<1x64xf32, #tpu.memory_space<vmem>>, vector<1x64xf32>
    %141 = vector.broadcast %140 : vector<1x64xf32> to vector<8x64xf32>
    %142 = arith.addf %139, %141 : vector<8x64xf32>
    %cst_68 = arith.constant 0.000000e+00 : f32
    %143 = vector.broadcast %cst_68 : f32 to vector<8x64xf32>
    %144 = arith.maximumf %142, %143 : vector<8x64xf32>
    %c0_69 = arith.constant 0 : index
    %c0_70 = arith.constant 0 : index
    %145 = vector.load %arg20[%c0_69, %c0_70] : memref<64x32xbf16, #tpu.memory_space<vmem>>, vector<64x32xbf16>
    %146 = arith.truncf %144 : vector<8x64xf32> to vector<8x64xbf16>
    %cst_71 = arith.constant dense<0.000000e+00> : vector<8x32xf32>
    %147 = tpu.matmul %146, %145, %cst_71 {dimension_numbers = #tpu.dot_dimension_numbers<[1], [0], [0], [1], [0, 0, 1, 1], [], []>} : vector<8x64xbf16>, vector<64x32xbf16>, vector<8x32xf32> -> vector<8x32xf32>
    %c0_72 = arith.constant 0 : index
    %c0_73 = arith.constant 0 : index
    %148 = vector.load %arg21[%c0_72, %c0_73] : memref<1x32xf32, #tpu.memory_space<vmem>>, vector<1x32xf32>
    %149 = vector.broadcast %148 : vector<1x32xf32> to vector<8x32xf32>
    %150 = arith.addf %147, %149 : vector<8x32xf32>
    %151 = arith.addf %150, %136 : vector<8x32xf32>
    %c0_74 = arith.constant 0 : index
    %c0_75 = arith.constant 0 : index
    %152 = vector.load %arg22[%c0_74, %c0_75] : memref<1x32xf32, #tpu.memory_space<vmem>>, vector<1x32xf32>
    %c0_76 = arith.constant 0 : index
    %c0_77 = arith.constant 0 : index
    %153 = vector.load %arg23[%c0_76, %c0_77] : memref<1x32xf32, #tpu.memory_space<vmem>>, vector<1x32xf32>
    %cst_78 = arith.constant dense<0.000000e+00> : vector<8xf32>
    %154 = vector.multi_reduction <add>, %151, %cst_78 [1] : vector<8x32xf32> to vector<8xf32>
    %155 = vector.shape_cast %154 : vector<8xf32> to vector<8x1xf32>
    %cst_79 = arith.constant 3.200000e+01 : f32
    %156 = vector.broadcast %cst_79 : f32 to vector<8x1xf32>
    %157 = arith.divf %155, %156 : vector<8x1xf32>
    %158 = vector.broadcast %157 : vector<8x1xf32> to vector<8x32xf32>
    %159 = arith.subf %151, %158 : vector<8x32xf32>
    %160 = arith.mulf %159, %159 : vector<8x32xf32>
    %cst_80 = arith.constant dense<0.000000e+00> : vector<8xf32>
    %161 = vector.multi_reduction <add>, %160, %cst_80 [1] : vector<8x32xf32> to vector<8xf32>
    %162 = vector.shape_cast %161 : vector<8xf32> to vector<8x1xf32>
    %cst_81 = arith.constant 3.200000e+01 : f32
    %163 = vector.broadcast %cst_81 : f32 to vector<8x1xf32>
    %164 = arith.divf %162, %163 : vector<8x1xf32>
    %165 = vector.broadcast %157 : vector<8x1xf32> to vector<8x32xf32>
    %166 = arith.subf %151, %165 : vector<8x32xf32>
    %cst_82 = arith.constant 9.99999974E-6 : f32
    %167 = vector.broadcast %cst_82 : f32 to vector<8x1xf32>
    %168 = arith.addf %164, %167 : vector<8x1xf32>
    %169 = math.rsqrt %168 : vector<8x1xf32>
    %170 = vector.broadcast %169 : vector<8x1xf32> to vector<8x32xf32>
    %171 = arith.mulf %166, %170 : vector<8x32xf32>
    %172 = vector.broadcast %152 : vector<1x32xf32> to vector<8x32xf32>
    %173 = arith.mulf %172, %171 : vector<8x32xf32>
    %174 = vector.broadcast %153 : vector<1x32xf32> to vector<8x32xf32>
    %175 = arith.addf %173, %174 : vector<8x32xf32>
    %c0_83 = arith.constant 0 : index
    %c0_84 = arith.constant 0 : index
    %c0_85 = arith.constant 0 : index
    %176 = vector.load %arg24[%c0_83, %c0_84, %c0_85] : memref<1x8x32xf32, #tpu.memory_space<vmem>>, vector<1x8x32xf32>
    %177 = vector.shape_cast %176 : vector<1x8x32xf32> to vector<8x32xf32>
    %178 = vector.shape_cast %175 : vector<8x32xf32> to vector<1x8x32xf32>
    tpu.vector_store %arg24[%c0_83, %c0_84, %c0_85], %178 {strides = array<i32>} : memref<1x8x32xf32, #tpu.memory_space<vmem>>, vector<1x8x32xf32>,
    return
  }
  func.func @transform_0(%arg0: i32, %arg1: i32) -> (i32, i32, i32) {
    %c0_i32 = arith.constant 0 : i32
    %c0_i32_0 = arith.constant 0 : i32
    %c0_i32_1 = arith.constant 0 : i32
    return %arg0, %c0_i32, %c0_i32_0 : i32, i32, i32
  }
  func.func @transform_1(%arg0: i32, %arg1: i32) -> (i32, i32, i32) {
    %c0_i32 = arith.constant 0 : i32
    %c0_i32_0 = arith.constant 0 : i32
    %c0_i32_1 = arith.constant 0 : i32
    return %arg0, %c0_i32, %c0_i32_0 : i32, i32, i32
  }
  func.func @transform_2(%arg0: i32, %arg1: i32) -> (i32, i32) {
    %c0_i32 = arith.constant 0 : i32
    %c0_i32_0 = arith.constant 0 : i32
    %c0_i32_1 = arith.constant 0 : i32
    return %c0_i32, %c0_i32_0 : i32, i32
  }
  func.func @transform_3(%arg0: i32, %arg1: i32) -> (i32, i32) {
    %c0_i32 = arith.constant 0 : i32
    %c0_i32_0 = arith.constant 0 : i32
    %c0_i32_1 = arith.constant 0 : i32
    return %c0_i32, %c0_i32_0 : i32, i32
  }
  func.func @transform_4(%arg0: i32, %arg1: i32) -> (i32, i32) {
    %c0_i32 = arith.constant 0 : i32
    %c0_i32_0 = arith.constant 0 : i32
    %c0_i32_1 = arith.constant 0 : i32
    return %c0_i32, %c0_i32_0 : i32, i32
  }
  func.func @transform_5(%arg0: i32, %arg1: i32) -> (i32, i32) {
    %c0_i32 = arith.constant 0 : i32
    %c0_i32_0 = arith.constant 0 : i32
    %c0_i32_1 = arith.constant 0 : i32
    return %c0_i32, %c0_i32_0 : i32, i32
  }
  func.func @transform_6(%arg0: i32, %arg1: i32) -> (i32, i32) {
    %c0_i32 = arith.constant 0 : i32
    %c0_i32_0 = arith.constant 0 : i32
    %c0_i32_1 = arith.constant 0 : i32
    return %c0_i32, %c0_i32_0 : i32, i32
  }
  func.func @transform_7(%arg0: i32, %arg1: i32) -> (i32, i32) {
    %c0_i32 = arith.constant 0 : i32
    %c0_i32_0 = arith.constant 0 : i32
    %c0_i32_1 = arith.constant 0 : i32
    return %c0_i32, %c0_i32_0 : i32, i32
  }
  func.func @transform_8(%arg0: i32, %arg1: i32) -> (i32, i32) {
    %c0_i32 = arith.constant 0 : i32
    %c0_i32_0 = arith.constant 0 : i32
    %c0_i32_1 = arith.constant 0 : i32
    return %c0_i32, %c0_i32_0 : i32, i32
  }
  func.func @transform_9(%arg0: i32, %arg1: i32) -> (i32, i32) {
    %c0_i32 = arith.constant 0 : i32
    %c0_i32_0 = arith.constant 0 : i32
    %c0_i32_1 = arith.constant 0 : i32
    return %c0_i32, %c0_i32_0 : i32, i32
  }
  func.func @transform_10(%arg0: i32, %arg1: i32) -> (i32, i32) {
    %c0_i32 = arith.constant 0 : i32
    %c0_i32_0 = arith.constant 0 : i32
    %c0_i32_1 = arith.constant 0 : i32
    return %c0_i32, %c0_i32_0 : i32, i32
  }
  func.func @transform_11(%arg0: i32, %arg1: i32) -> (i32, i32) {
    %c0_i32 = arith.constant 0 : i32
    %c0_i32_0 = arith.constant 0 : i32
    %c0_i32_1 = arith.constant 0 : i32
    return %c0_i32, %c0_i32_0 : i32, i32
  }
  func.func @transform_12(%arg0: i32, %arg1: i32) -> (i32, i32) {
    %c0_i32 = arith.constant 0 : i32
    %c0_i32_0 = arith.constant 0 : i32
    %c0_i32_1 = arith.constant 0 : i32
    return %c0_i32, %c0_i32_0 : i32, i32
  }
  func.func @transform_13(%arg0: i32, %arg1: i32) -> (i32, i32) {
    %c0_i32 = arith.constant 0 : i32
    %c0_i32_0 = arith.constant 0 : i32
    %c0_i32_1 = arith.constant 0 : i32
    return %c0_i32, %c0_i32_0 : i32, i32
  }
  func.func @transform_14(%arg0: i32, %arg1: i32) -> (i32, i32) {
    %c0_i32 = arith.constant 0 : i32
    %c0_i32_0 = arith.constant 0 : i32
    %c0_i32_1 = arith.constant 0 : i32
    return %c0_i32, %c0_i32_0 : i32, i32
  }
  func.func @transform_15(%arg0: i32, %arg1: i32) -> (i32, i32) {
    %c0_i32 = arith.constant 0 : i32
    %c0_i32_0 = arith.constant 0 : i32
    %c0_i32_1 = arith.constant 0 : i32
    return %c0_i32, %c0_i32_0 : i32, i32
  }
  func.func @transform_16(%arg0: i32, %arg1: i32) -> (i32, i32) {
    %c0_i32 = arith.constant 0 : i32
    %c0_i32_0 = arith.constant 0 : i32
    %c0_i32_1 = arith.constant 0 : i32
    return %c0_i32, %c0_i32_0 : i32, i32
  }
  func.func @transform_17(%arg0: i32, %arg1: i32) -> (i32, i32) {
    %c0_i32 = arith.constant 0 : i32
    %c0_i32_0 = arith.constant 0 : i32
    %c0_i32_1 = arith.constant 0 : i32
    return %c0_i32, %c0_i32_0 : i32, i32
  }
  func.func @transform_18(%arg0: i32, %arg1: i32) -> (i32, i32) {
    %c0_i32 = arith.constant 0 : i32
    %c0_i32_0 = arith.constant 0 : i32
    %c0_i32_1 = arith.constant 0 : i32
    return %c0_i32, %c0_i32_0 : i32, i32
  }
  func.func @transform_19(%arg0: i32, %arg1: i32) -> (i32, i32) {
    %c0_i32 = arith.constant 0 : i32
    %c0_i32_0 = arith.constant 0 : i32
    %c0_i32_1 = arith.constant 0 : i32
    return %c0_i32, %c0_i32_0 : i32, i32
  }
  func.func @transform_20(%arg0: i32, %arg1: i32) -> (i32, i32) {
    %c0_i32 = arith.constant 0 : i32
    %c0_i32_0 = arith.constant 0 : i32
    %c0_i32_1 = arith.constant 0 : i32
    return %c0_i32, %c0_i32_0 : i32, i32
  }
  func.func @transform_21(%arg0: i32, %arg1: i32) -> (i32, i32) {
    %c0_i32 = arith.constant 0 : i32
    %c0_i32_0 = arith.constant 0 : i32
    %c0_i32_1 = arith.constant 0 : i32
    return %c0_i32, %c0_i32_0 : i32, i32
  }
  func.func @transform_22(%arg0: i32, %arg1: i32) -> (i32, i32, i32) {
    %c0_i32 = arith.constant 0 : i32
    %c0_i32_0 = arith.constant 0 : i32
    return %arg0, %arg1, %c0_i32 : i32, i32, i32
  }
}

</mosaic_0001>

<llo_original>
// kernel: tpu_custom_call.1
$region0: #{tpu_custom_call.1}
  #allocation0 [shape = 'u32[]', space=smem, size = 0x4, offset = 0x4, fixed_abs, tag = 'smem constant byte address 0x4 - core index']
  #allocation1 [shape = 'u32[144,128]{1,0:T(1,128)}', space=vmem, size = 0x12000, scoped, tag = 'internal scratch']
  #allocation2 [shape = 'bf16[4,8,8]{2,1,0:T(8,128)(2,1)}', space=vmem, size = 0x2000, scoped, tag = 'scratch operand']
  #allocation3 [shape = 'bf16[4,8,8]{2,1,0:T(8,128)(2,1)}', space=vmem, size = 0x2000, scoped, tag = 'scratch operand']
  #allocation4 [shape = 'bf16[4,8,8]{2,1,0:T(8,128)(2,1)}', space=vmem, size = 0x2000, scoped, tag = 'scratch operand']
  #allocation5 [shape = 'bf16[4,8,8]{2,1,0:T(8,128)(2,1)}', space=vmem, size = 0x2000, scoped, tag = 'scratch operand']
  %s0 = inlined_call_operand.vmem [shape: f32[2,8,32], index: 0, kind: input, shape index: {}]
  %s1 = inlined_call_operand.vmem [shape: f32[2,8,32], index: 1, kind: input, shape index: {}]
  %s2 = inlined_call_operand.vmem [shape: bf16[32,96], index: 2, kind: input, shape index: {}]
  %s3 = inlined_call_operand.vmem [shape: f32[1,96], index: 3, kind: input, shape index: {}]
  %s4 = inlined_call_operand.hbm [shape: bf16[32,32], index: 4, kind: input, shape index: {}]
  %s5 = inlined_call_operand.hbm [shape: f32[1,32], index: 5, kind: input, shape index: {}]
  %s6 = inlined_call_operand.hbm [shape: f32[1,32], index: 6, kind: input, shape index: {}]
  %s7 = inlined_call_operand.hbm [shape: f32[1,32], index: 7, kind: input, shape index: {}]
  %s8 = inlined_call_operand.hbm [shape: bf16[32,64], index: 8, kind: input, shape index: {}]
  %s9 = inlined_call_operand.hbm [shape: f32[1,64], index: 9, kind: input, shape index: {}]
  %s10 = inlined_call_operand.vmem [shape: bf16[32,32], index: 10, kind: input, shape index: {}]
  %s11 = inlined_call_operand.hbm [shape: f32[1,32], index: 11, kind: input, shape index: {}]
  %s12 = inlined_call_operand.hbm [shape: bf16[32,32], index: 12, kind: input, shape index: {}]
  %s13 = inlined_call_operand.hbm [shape: f32[1,32], index: 13, kind: input, shape index: {}]
  %s14 = inlined_call_operand.vmem [shape: f32[1,32], index: 14, kind: input, shape index: {}]
  %s15 = inlined_call_operand.vmem [shape: f32[1,32], index: 15, kind: input, shape index: {}]
  %s16 = inlined_call_operand.vmem [shape: bf16[32,64], index: 16, kind: input, shape index: {}]
  %s17 = inlined_call_operand.vmem [shape: f32[1,64], index: 17, kind: input, shape index: {}]
  %s18 = inlined_call_operand.vmem [shape: bf16[64,32], index: 18, kind: input, shape index: {}]
  %s19 = inlined_call_operand.vmem [shape: f32[1,32], index: 19, kind: input, shape index: {}]
  %s20 = inlined_call_operand.vmem [shape: f32[1,32], index: 20, kind: input, shape index: {}]
  %s21 = inlined_call_operand.vmem [shape: f32[1,32], index: 21, kind: input, shape index: {}]
  %s22 = inlined_call_operand.hbm [shape: f32[2,8,32], index: 22, kind: output, shape index: {}]
  %s23 = sld [smem:[#allocation0]]
  $region161: #{tpu_custom_call.1} parent=0
    _
  %s25 = ssub.s32 1, %s23
  %s26 = scalar_select 0, %s25, %s23
  $region1: #{tpu_custom_call.1} parent=0
    #allocation6 [shape = 'u8[8192]{0}', space=vmem, size = 0x2000, scoped, tag = 'input window, operand 4, single buffered']
    #allocation7 [shape = 's32[2]{0}', space=sflag, size = 0x8, scoped, tag = 'scoped memory for tpu_custom_call.1']
    #allocation8 [shape = 's32[2]{0}', space=sflag, size = 0x8, scoped, tag = 'scoped memory for tpu_custom_call.1']
    #allocation9 [shape = 'u8[512]{0}', space=vmem, size = 0x400, scoped, tag = 'input window, operand 5, single buffered']
    #allocation10 [shape = 's32[1]{0}', space=sflag, size = 0x4, scoped, tag = 'scoped memory for tpu_custom_call.1']
    #allocation11 [shape = 'u8[512]{0}', space=vmem, size = 0x400, scoped, tag = 'input window, operand 6, single buffered']
    #allocation12 [shape = 'u8[512]{0}', space=vmem, size = 0x400, scoped, tag = 'input window, operand 7, single buffered']
    #allocation13 [shape = 's32[1]{0}', space=sflag, size = 0x4, scoped, tag = 'scoped memory for tpu_custom_call.1']
    #allocation14 [shape = 'u8[8192]{0}', space=vmem, size = 0x2000, scoped, tag = 'input window, operand 8, single buffered']
    #allocation15 [shape = 'u8[512]{0}', space=vmem, size = 0x400, scoped, tag = 'input window, operand 9, single buffered']
    #allocation16 [shape = 's32[1]{0}', space=sflag, size = 0x4, scoped, tag = 'scoped memory for tpu_custom_call.1']
    #allocation17 [shape = 'u8[512]{0}', space=vmem, size = 0x400, scoped, tag = 'input window, operand 11, single buffered']
    #allocation18 [shape = 'u8[8192]{0}', space=vmem, size = 0x2000, scoped, tag = 'input window, operand 12, single buffered']
    #allocation19 [shape = 's32[1]{0}', space=sflag, size = 0x4, scoped, tag = 'scoped memory for tpu_custom_call.1']
    #allocation20 [shape = 'u8[512]{0}', space=vmem, size = 0x400, scoped, tag = 'input window, operand 13, single buffered']
    #allocation21 [shape = 'u8[8192]{0}', space=vmem, size = 0x2000, scoped, tag = 'output window, operand 0']
    %27 = vsyncpa [#allocation7], 0
    %28 = vsyncpa [#allocation10], 0
    %29 = vsyncpa [#allocation13], 0
    %30 = vsyncpa [#allocation16], 0
    %31 = vsyncpa [#allocation19], 0
    %32 = vsyncpa [#allocation8], 0
    %s33 = scalar_lea.sflag [#allocation8], 1
    %34 = vsyncpa %s33, 0
    loop: start=0, step=1, limit=4
    $region2: #{tpu_custom_call.1} parent=1 // loop_pre_header
      _
    $region3: #{tpu_custom_call.1} parent=1 // loop_header
      %s36 = sphi 0, %s40
      %p37 = scmp.ge.s32.totalorder %s36, 4
      %s43 = sphi 0, %s55
      %s44 = sphi 0, %s51
      %s45 = sphi 0, %s43
      %s46 = sphi 0, %s44
      %s47 = sphi 0, %s45
      %s48 = sphi 0, %s46
      %s58 = sphi 0, %s60
      %s61 = sphi 0, %s58
      %s62 = sphi 0, %s61
      %s78 = sphi 0, %s62
      %s84 = sphi 0, %s86
      %s87 = sphi 0, %s84
      %s88 = sphi 0, %s87
      %s104 = sphi 0, %s88
      %s108 = sphi 0, %s108
      %s110 = sphi 0, %s108
      %s111 = sphi 0, %s110
      %s125 = sphi 0, %s111
      %s129 = sphi 0, %s129
      %s131 = sphi 0, %s129
      %s132 = sphi 0, %s131
      %s146 = sphi 0, %s132
      %s150 = sphi 0, %s150
      %s152 = sphi 0, %s150
      %s153 = sphi 0, %s152
      %s167 = sphi 0, %s153
      %s171 = sphi 0, %s171
      %s173 = sphi 0, %s171
      %s174 = sphi 0, %s173
      %s188 = sphi 0, %s174
      %s192 = sphi 0, %s192
      %s194 = sphi 0, %s192
      %s195 = sphi 0, %s194
      %s209 = sphi 0, %s195
      %s213 = sphi 0, %s213
      %s215 = sphi 0, %s213
      %s216 = sphi 0, %s215
      %s230 = sphi 0, %s216
      %s234 = sphi 0, %s234
      %s236 = sphi 0, %s234
      %s237 = sphi 0, %s236
      %s251 = sphi 0, %s237
      %s255 = sphi 0, %s255
      %s257 = sphi 0, %s255
      %s258 = sphi 0, %s257
      %s272 = sphi 0, %s258
      %s276 = sphi 0, %s276
      %s278 = sphi 0, %s276
      %s279 = sphi 0, %s278
      %s293 = sphi 0, %s279
      %s297 = sphi 0, %s297
      %s299 = sphi 0, %s297
      %s300 = sphi 0, %s299
      %s314 = sphi 0, %s300
      %s318 = sphi 0, %s318
      %s320 = sphi 0, %s318
      %s321 = sphi 0, %s320
      %s335 = sphi 0, %s321
      %s339 = sphi 0, %s339
      %s341 = sphi 0, %s339
      %s342 = sphi 0, %s341
      %s356 = sphi 0, %s342
      %s360 = sphi 0, %s360
      %s362 = sphi 0, %s360
      %s363 = sphi 0, %s362
      %s377 = sphi 0, %s363
      %s381 = sphi 0, %s381
      %s383 = sphi 0, %s381
      %s384 = sphi 0, %s383
      %s398 = sphi 0, %s384
      %s402 = sphi 0, %s402
      %s404 = sphi 0, %s402
      %s405 = sphi 0, %s404
      %s419 = sphi 0, %s405
      %s423 = sphi 0, %s423
      %s425 = sphi 0, %s423
      %s426 = sphi 0, %s425
      %s440 = sphi 0, %s426
      %s444 = sphi 0, %s444
      %s446 = sphi 0, %s444
      %s447 = sphi 0, %s446
      %s461 = sphi 0, %s447
      %s465 = sphi 0, %s465
      %s467 = sphi 0, %s465
      %s468 = sphi 0, %s467
      %s482 = sphi 0, %s468
      %s486 = sphi 0, %s486
      %s488 = sphi 0, %s486
      %s489 = sphi 0, %s488
      %s503 = sphi 0, %s489
      %s507 = sphi 0, %s507
      %s509 = sphi 0, %s507
      %s510 = sphi 0, %s509
      %s524 = sphi 0, %s510
      %s532 = sphi 0, %s534
      %s535 = sphi 0, %s532
      %s536 = sphi 0, %s535
      %s552 = sphi 0, %s536
    $region4: #{tpu_custom_call.1} parent=1 // loop_header_branch
      %39 = sbr.rel (%p37) target = $region8
    $region5: #{tpu_custom_call.1} parent=1 // loop_body
      %s41 = ssub.s32 %s36, 1
      %s42 = ssub.s32 %s36, 2
      %s49 = sadd.s32 1, %s44
      %p50 = scmp.ge.s32.totalorder %s49, 1
      %s51 = scalar_select %p50, 0, %s49
      %s52 = sadd.s32 1, %s43
      %s53 = scalar_select %p50, %s52, %s43
      %p54 = scmp.ge.s32.totalorder %s53, 2
      %s55 = scalar_select %p54, 0, %s53
      %s56 = ssub.s32 %s43, %s55
      %p57 = scmp.eq.s32.totalorder %s56, 0
      %s59 = sadd.s32 %s58, 1
      %s60 = scalar_select %p57, %s58, %s59
      %p63 = pneg %p57
      %p64 = scmp.eq.s32.totalorder %s36, 1
      %p65 = por %p63, %p64
      %p66 = scmp.ne.s32.totalorder %s58, %s61
      %p67 = scmp.eq.s32.totalorder %s36, 0
      %p68 = por %p66, %p67
      %p69 = scmp.ne.s32.totalorder %s58, %s61
      %p70 = scmp.eq.s32.totalorder %s41, 1
      %p71 = por %p69, %p70
      %p72 = scmp.ne.s32.totalorder %s61, %s62
      %p73 = scmp.eq.s32.totalorder %s41, 0
      %p74 = por %p72, %p73
      %p75 = scmp.ne.s32.totalorder %s61, %s62
      %p76 = scmp.eq.s32.totalorder %s42, 1
      %p77 = por %p75, %p76
      %p79 = scmp.ne.s32.totalorder %s62, %s78
      %p80 = scmp.eq.s32.totalorder %s42, 0
      %p81 = por %p79, %p80
      %s82 = ssub.s32 %s43, %s55
      %p83 = scmp.eq.s32.totalorder %s82, 0
      %s85 = sadd.s32 %s84, 1
      %s86 = scalar_select %p83, %s84, %s85
      %p89 = pneg %p83
      %p90 = scmp.eq.s32.totalorder %s36, 1
      %p91 = por %p89, %p90
      %p92 = scmp.ne.s32.totalorder %s84, %s87
      %p93 = scmp.eq.s32.totalorder %s36, 0
      %p94 = por %p92, %p93
      %p95 = scmp.ne.s32.totalorder %s84, %s87
      %p96 = scmp.eq.s32.totalorder %s41, 1
      %p97 = por %p95, %p96
      %p98 = scmp.ne.s32.totalorder %s87, %s88
      %p99 = scmp.eq.s32.totalorder %s41, 0
      %p100 = por %p98, %p99
      %p101 = scmp.ne.s32.totalorder %s87, %s88
      %p102 = scmp.eq.s32.totalorder %s42, 1
      %p103 = por %p101, %p102
      %p105 = scmp.ne.s32.totalorder %s88, %s104
      %p106 = scmp.eq.s32.totalorder %s42, 0
      %p107 = por %p105, %p106
      %s109 = sadd.s32 %s108, 1
      %p112 = scmp.eq.s32.totalorder %s36, 1
      %p113 = scmp.ne.s32.totalorder %s108, %s110
      %p114 = scmp.eq.s32.totalorder %s36, 0
      %p115 = por %p113, %p114
      %p116 = scmp.ne.s32.totalorder %s108, %s110
      %p117 = scmp.eq.s32.totalorder %s41, 1
      %p118 = por %p116, %p117
      %p119 = scmp.ne.s32.totalorder %s110, %s111
      %p120 = scmp.eq.s32.totalorder %s41, 0
      %p121 = por %p119, %p120
      %p122 = scmp.ne.s32.totalorder %s110, %s111
      %p123 = scmp.eq.s32.totalorder %s42, 1
      %p124 = por %p122, %p123
      %p126 = scmp.ne.s32.totalorder %s111, %s125
      %p127 = scmp.eq.s32.totalorder %s42, 0
      %p128 = por %p126, %p127
      %s130 = sadd.s32 %s129, 1
      %p133 = scmp.eq.s32.totalorder %s36, 1
      %p134 = scmp.ne.s32.totalorder %s129, %s131
      %p135 = scmp.eq.s32.totalorder %s36, 0
      %p136 = por %p134, %p135
      %p137 = scmp.ne.s32.totalorder %s129, %s131
      %p138 = scmp.eq.s32.totalorder %s41, 1
      %p139 = por %p137, %p138
      %p140 = scmp.ne.s32.totalorder %s131, %s132
      %p141 = scmp.eq.s32.totalorder %s41, 0
      %p142 = por %p140, %p141
      %p143 = scmp.ne.s32.totalorder %s131, %s132
      %p144 = scmp.eq.s32.totalorder %s42, 1
      %p145 = por %p143, %p144
      %p147 = scmp.ne.s32.totalorder %s132, %s146
      %p148 = scmp.eq.s32.totalorder %s42, 0
      %p149 = por %p147, %p148
      %s151 = sadd.s32 %s150, 1
      %p154 = scmp.eq.s32.totalorder %s36, 1
      %p155 = scmp.ne.s32.totalorder %s150, %s152
      %p156 = scmp.eq.s32.totalorder %s36, 0
      %p157 = por %p155, %p156
      %p158 = scmp.ne.s32.totalorder %s150, %s152
      %p159 = scmp.eq.s32.totalorder %s41, 1
      %p160 = por %p158, %p159
      %p161 = scmp.ne.s32.totalorder %s152, %s153
      %p162 = scmp.eq.s32.totalorder %s41, 0
      %p163 = por %p161, %p162
      %p164 = scmp.ne.s32.totalorder %s152, %s153
      %p165 = scmp.eq.s32.totalorder %s42, 1
      %p166 = por %p164, %p165
      %p168 = scmp.ne.s32.totalorder %s153, %s167
      %p169 = scmp.eq.s32.totalorder %s42, 0
      %p170 = por %p168, %p169
      %s172 = sadd.s32 %s171, 1
      %p175 = scmp.eq.s32.totalorder %s36, 1
      %p176 = scmp.ne.s32.totalorder %s171, %s173
      %p177 = scmp.eq.s32.totalorder %s36, 0
      %p178 = por %p176, %p177
      %p179 = scmp.ne.s32.totalorder %s171, %s173
      %p180 = scmp.eq.s32.totalorder %s41, 1
      %p181 = por %p179, %p180
      %p182 = scmp.ne.s32.totalorder %s173, %s174
      %p183 = scmp.eq.s32.totalorder %s41, 0
      %p184 = por %p182, %p183
      %p185 = scmp.ne.s32.totalorder %s173, %s174
      %p186 = scmp.eq.s32.totalorder %s42, 1
      %p187 = por %p185, %p186
      %p189 = scmp.ne.s32.totalorder %s174, %s188
      %p190 = scmp.eq.s32.totalorder %s42, 0
      %p191 = por %p189, %p190
      %s193 = sadd.s32 %s192, 1
      %p196 = scmp.eq.s32.totalorder %s36, 1
      %p197 = scmp.ne.s32.totalorder %s192, %s194
      %p198 = scmp.eq.s32.totalorder %s36, 0
      %p199 = por %p197, %p198
      %p200 = scmp.ne.s32.totalorder %s192, %s194
      %p201 = scmp.eq.s32.totalorder %s41, 1
      %p202 = por %p200, %p201
      %p203 = scmp.ne.s32.totalorder %s194, %s195
      %p204 = scmp.eq.s32.totalorder %s41, 0
      %p205 = por %p203, %p204
      %p206 = scmp.ne.s32.totalorder %s194, %s195
      %p207 = scmp.eq.s32.totalorder %s42, 1
      %p208 = por %p206, %p207
      %p210 = scmp.ne.s32.totalorder %s195, %s209
      %p211 = scmp.eq.s32.totalorder %s42, 0
      %p212 = por %p210, %p211
      %s214 = sadd.s32 %s213, 1
      %p217 = scmp.eq.s32.totalorder %s36, 1
      %p218 = scmp.ne.s32.totalorder %s213, %s215
      %p219 = scmp.eq.s32.totalorder %s36, 0
      %p220 = por %p218, %p219
      %p221 = scmp.ne.s32.totalorder %s213, %s215
      %p222 = scmp.eq.s32.totalorder %s41, 1
      %p223 = por %p221, %p222
      %p224 = scmp.ne.s32.totalorder %s215, %s216
      %p225 = scmp.eq.s32.totalorder %s41, 0
      %p226 = por %p224, %p225
      %p227 = scmp.ne.s32.totalorder %s215, %s216
      %p228 = scmp.eq.s32.totalorder %s42, 1
      %p229 = por %p227, %p228
      %p231 = scmp.ne.s32.totalorder %s216, %s230
      %p232 = scmp.eq.s32.totalorder %s42, 0
      %p233 = por %p231, %p232
      %s235 = sadd.s32 %s234, 1
      %p238 = scmp.eq.s32.totalorder %s36, 1
      %p239 = scmp.ne.s32.totalorder %s234, %s236
      %p240 = scmp.eq.s32.totalorder %s36, 0
      %p241 = por %p239, %p240
      %p242 = scmp.ne.s32.totalorder %s234, %s236
      %p243 = scmp.eq.s32.totalorder %s41, 1
      %p244 = por %p242, %p243
      %p245 = scmp.ne.s32.totalorder %s236, %s237
      %p246 = scmp.eq.s32.totalorder %s41, 0
      %p247 = por %p245, %p246
      %p248 = scmp.ne.s32.totalorder %s236, %s237
      %p249 = scmp.eq.s32.totalorder %s42, 1
      %p250 = por %p248, %p249
      %p252 = scmp.ne.s32.totalorder %s237, %s251
      %p253 = scmp.eq.s32.totalorder %s42, 0
      %p254 = por %p252, %p253
      %s256 = sadd.s32 %s255, 1
      %p259 = scmp.eq.s32.totalorder %s36, 1
      %p260 = scmp.ne.s32.totalorder %s255, %s257
      %p261 = scmp.eq.s32.totalorder %s36, 0
      %p262 = por %p260, %p261
      %p263 = scmp.ne.s32.totalorder %s255, %s257
      %p264 = scmp.eq.s32.totalorder %s41, 1
      %p265 = por %p263, %p264
      %p266 = scmp.ne.s32.totalorder %s257, %s258
      %p267 = scmp.eq.s32.totalorder %s41, 0
      %p268 = por %p266, %p267
      %p269 = scmp.ne.s32.totalorder %s257, %s258
      %p270 = scmp.eq.s32.totalorder %s42, 1
      %p271 = por %p269, %p270
      %p273 = scmp.ne.s32.totalorder %s258, %s272
      %p274 = scmp.eq.s32.totalorder %s42, 0
      %p275 = por %p273, %p274
      %s277 = sadd.s32 %s276, 1
      %p280 = scmp.eq.s32.totalorder %s36, 1
      %p281 = scmp.ne.s32.totalorder %s276, %s278
      %p282 = scmp.eq.s32.totalorder %s36, 0
      %p283 = por %p281, %p282
      %p284 = scmp.ne.s32.totalorder %s276, %s278
      %p285 = scmp.eq.s32.totalorder %s41, 1
      %p286 = por %p284, %p285
      %p287 = scmp.ne.s32.totalorder %s278, %s279
      %p288 = scmp.eq.s32.totalorder %s41, 0
      %p289 = por %p287, %p288
      %p290 = scmp.ne.s32.totalorder %s278, %s279
      %p291 = scmp.eq.s32.totalorder %s42, 1
      %p292 = por %p290, %p291
      %p294 = scmp.ne.s32.totalorder %s279, %s293
      %p295 = scmp.eq.s32.totalorder %s42, 0
      %p296 = por %p294, %p295
      %s298 = sadd.s32 %s297, 1
      %p301 = scmp.eq.s32.totalorder %s36, 1
      %p302 = scmp.ne.s32.totalorder %s297, %s299
      %p303 = scmp.eq.s32.totalorder %s36, 0
      %p304 = por %p302, %p303
      %p305 = scmp.ne.s32.totalorder %s297, %s299
      %p306 = scmp.eq.s32.totalorder %s41, 1
      %p307 = por %p305, %p306
      %p308 = scmp.ne.s32.totalorder %s299, %s300
      %p309 = scmp.eq.s32.totalorder %s41, 0
      %p310 = por %p308, %p309
      %p311 = scmp.ne.s32.totalorder %s299, %s300
      %p312 = scmp.eq.s32.totalorder %s42, 1
      %p313 = por %p311, %p312
      %p315 = scmp.ne.s32.totalorder %s300, %s314
      %p316 = scmp.eq.s32.totalorder %s42, 0
      %p317 = por %p315, %p316
      %s319 = sadd.s32 %s318, 1
      %p322 = scmp.eq.s32.totalorder %s36, 1
      %p323 = scmp.ne.s32.totalorder %s318, %s320
      %p324 = scmp.eq.s32.totalorder %s36, 0
      %p325 = por %p323, %p324
      %p326 = scmp.ne.s32.totalorder %s318, %s320
      %p327 = scmp.eq.s32.totalorder %s41, 1
      %p328 = por %p326, %p327
      %p329 = scmp.ne.s32.totalorder %s320, %s321
      %p330 = scmp.eq.s32.totalorder %s41, 0
      %p331 = por %p329, %p330
      %p332 = scmp.ne.s32.totalorder %s320, %s321
      %p333 = scmp.eq.s32.totalorder %s42, 1
      %p334 = por %p332, %p333
      %p336 = scmp.ne.s32.totalorder %s321, %s335
      %p337 = scmp.eq.s32.totalorder %s42, 0
      %p338 = por %p336, %p337
      %s340 = sadd.s32 %s339, 1
      %p343 = scmp.eq.s32.totalorder %s36, 1
      %p344 = scmp.ne.s32.totalorder %s339, %s341
      %p345 = scmp.eq.s32.totalorder %s36, 0
      %p346 = por %p344, %p345
      %p347 = scmp.ne.s32.totalorder %s339, %s341
      %p348 = scmp.eq.s32.totalorder %s41, 1
      %p349 = por %p347, %p348
      %p350 = scmp.ne.s32.totalorder %s341, %s342
      %p351 = scmp.eq.s32.totalorder %s41, 0
      %p352 = por %p350, %p351
      %p353 = scmp.ne.s32.totalorder %s341, %s342
      %p354 = scmp.eq.s32.totalorder %s42, 1
      %p355 = por %p353, %p354
      %p357 = scmp.ne.s32.totalorder %s342, %s356
      %p358 = scmp.eq.s32.totalorder %s42, 0
      %p359 = por %p357, %p358
      %s361 = sadd.s32 %s360, 1
      %p364 = scmp.eq.s32.totalorder %s36, 1
      %p365 = scmp.ne.s32.totalorder %s360, %s362
      %p366 = scmp.eq.s32.totalorder %s36, 0
      %p367 = por %p365, %p366
      %p368 = scmp.ne.s32.totalorder %s360, %s362
      %p369 = scmp.eq.s32.totalorder %s41, 1
      %p370 = por %p368, %p369
      %p371 = scmp.ne.s32.totalorder %s362, %s363
      %p372 = scmp.eq.s32.totalorder %s41, 0
      %p373 = por %p371, %p372
      %p374 = scmp.ne.s32.totalorder %s362, %s363
      %p375 = scmp.eq.s32.totalorder %s42, 1
      %p376 = por %p374, %p375
      %p378 = scmp.ne.s32.totalorder %s363, %s377
      %p379 = scmp.eq.s32.totalorder %s42, 0
      %p380 = por %p378, %p379
      %s382 = sadd.s32 %s381, 1
      %p385 = scmp.eq.s32.totalorder %s36, 1
      %p386 = scmp.ne.s32.totalorder %s381, %s383
      %p387 = scmp.eq.s32.totalorder %s36, 0
      %p388 = por %p386, %p387
      %p389 = scmp.ne.s32.totalorder %s381, %s383
      %p390 = scmp.eq.s32.totalorder %s41, 1
      %p391 = por %p389, %p390
      %p392 = scmp.ne.s32.totalorder %s383, %s384
      %p393 = scmp.eq.s32.totalorder %s41, 0
      %p394 = por %p392, %p393
      %p395 = scmp.ne.s32.totalorder %s383, %s384
      %p396 = scmp.eq.s32.totalorder %s42, 1
      %p397 = por %p395, %p396
      %p399 = scmp.ne.s32.totalorder %s384, %s398
      %p400 = scmp.eq.s32.totalorder %s42, 0
      %p401 = por %p399, %p400
      %s403 = sadd.s32 %s402, 1
      %p406 = scmp.eq.s32.totalorder %s36, 1
      %p407 = scmp.ne.s32.totalorder %s402, %s404
      %p408 = scmp.eq.s32.totalorder %s36, 0
      %p409 = por %p407, %p408
      %p410 = scmp.ne.s32.totalorder %s402, %s404
      %p411 = scmp.eq.s32.totalorder %s41, 1
      %p412 = por %p410, %p411
      %p413 = scmp.ne.s32.totalorder %s404, %s405
      %p414 = scmp.eq.s32.totalorder %s41, 0
      %p415 = por %p413, %p414
      %p416 = scmp.ne.s32.totalorder %s404, %s405
      %p417 = scmp.eq.s32.totalorder %s42, 1
      %p418 = por %p416, %p417
      %p420 = scmp.ne.s32.totalorder %s405, %s419
      %p421 = scmp.eq.s32.totalorder %s42, 0
      %p422 = por %p420, %p421
      %s424 = sadd.s32 %s423, 1
      %p427 = scmp.eq.s32.totalorder %s36, 1
      %p428 = scmp.ne.s32.totalorder %s423, %s425
      %p429 = scmp.eq.s32.totalorder %s36, 0
      %p430 = por %p428, %p429
      %p431 = scmp.ne.s32.totalorder %s423, %s425
      %p432 = scmp.eq.s32.totalorder %s41, 1
      %p433 = por %p431, %p432
      %p434 = scmp.ne.s32.totalorder %s425, %s426
      %p435 = scmp.eq.s32.totalorder %s41, 0
      %p436 = por %p434, %p435
      %p437 = scmp.ne.s32.totalorder %s425, %s426
      %p438 = scmp.eq.s32.totalorder %s42, 1
      %p439 = por %p437, %p438
      %p441 = scmp.ne.s32.totalorder %s426, %s440
      %p442 = scmp.eq.s32.totalorder %s42, 0
      %p443 = por %p441, %p442
      %s445 = sadd.s32 %s444, 1
      %p448 = scmp.eq.s32.totalorder %s36, 1
      %p449 = scmp.ne.s32.totalorder %s444, %s446
      %p450 = scmp.eq.s32.totalorder %s36, 0
      %p451 = por %p449, %p450
      %p452 = scmp.ne.s32.totalorder %s444, %s446
      %p453 = scmp.eq.s32.totalorder %s41, 1
      %p454 = por %p452, %p453
      %p455 = scmp.ne.s32.totalorder %s446, %s447
      %p456 = scmp.eq.s32.totalorder %s41, 0
      %p457 = por %p455, %p456
      %p458 = scmp.ne.s32.totalorder %s446, %s447
      %p459 = scmp.eq.s32.totalorder %s42, 1
      %p460 = por %p458, %p459
      %p462 = scmp.ne.s32.totalorder %s447, %s461
      %p463 = scmp.eq.s32.totalorder %s42, 0
      %p464 = por %p462, %p463
      %s466 = sadd.s32 %s465, 1
      %p469 = scmp.eq.s32.totalorder %s36, 1
      %p470 = scmp.ne.s32.totalorder %s465, %s467
      %p471 = scmp.eq.s32.totalorder %s36, 0
      %p472 = por %p470, %p471
      %p473 = scmp.ne.s32.totalorder %s465, %s467
      %p474 = scmp.eq.s32.totalorder %s41, 1
      %p475 = por %p473, %p474
      %p476 = scmp.ne.s32.totalorder %s467, %s468
      %p477 = scmp.eq.s32.totalorder %s41, 0
      %p478 = por %p476, %p477
      %p479 = scmp.ne.s32.totalorder %s467, %s468
      %p480 = scmp.eq.s32.totalorder %s42, 1
      %p481 = por %p479, %p480
      %p483 = scmp.ne.s32.totalorder %s468, %s482
      %p484 = scmp.eq.s32.totalorder %s42, 0
      %p485 = por %p483, %p484
      %s487 = sadd.s32 %s486, 1
      %p490 = scmp.eq.s32.totalorder %s36, 1
      %p491 = scmp.ne.s32.totalorder %s486, %s488
      %p492 = scmp.eq.s32.totalorder %s36, 0
      %p493 = por %p491, %p492
      %p494 = scmp.ne.s32.totalorder %s486, %s488
      %p495 = scmp.eq.s32.totalorder %s41, 1
      %p496 = por %p494, %p495
      %p497 = scmp.ne.s32.totalorder %s488, %s489
      %p498 = scmp.eq.s32.totalorder %s41, 0
      %p499 = por %p497, %p498
      %p500 = scmp.ne.s32.totalorder %s488, %s489
      %p501 = scmp.eq.s32.totalorder %s42, 1
      %p502 = por %p500, %p501
      %p504 = scmp.ne.s32.totalorder %s489, %s503
      %p505 = scmp.eq.s32.totalorder %s42, 0
      %p506 = por %p504, %p505
      %s508 = sadd.s32 %s507, 1
      %p511 = scmp.eq.s32.totalorder %s36, 1
      %p512 = scmp.ne.s32.totalorder %s507, %s509
      %p513 = scmp.eq.s32.totalorder %s36, 0
      %p514 = por %p512, %p513
      %p515 = scmp.ne.s32.totalorder %s507, %s509
      %p516 = scmp.eq.s32.totalorder %s41, 1
      %p517 = por %p515, %p516
      %p518 = scmp.ne.s32.totalorder %s509, %s510
      %p519 = scmp.eq.s32.totalorder %s41, 0
      %p520 = por %p518, %p519
      %p521 = scmp.ne.s32.totalorder %s509, %s510
      %p522 = scmp.eq.s32.totalorder %s42, 1
      %p523 = por %p521, %p522
      %p525 = scmp.ne.s32.totalorder %s510, %s524
      %p526 = scmp.eq.s32.totalorder %s42, 0
      %p527 = por %p525, %p526
      %s528 = ssub.s32 %s43, %s55
      %s529 = ssub.s32 %s44, %s51
      %s530 = sor.u32 %s528, %s529
      %p531 = scmp.eq.s32.totalorder %s530, 0
      %s533 = sadd.s32 %s532, 1
      %s534 = scalar_select %p531, %s532, %s533
      %p537 = pneg %p531
      %p538 = scmp.eq.s32.totalorder %s36, 1
      %p539 = por %p537, %p538
      %p540 = scmp.ne.s32.totalorder %s532, %s535
      %p541 = scmp.eq.s32.totalorder %s36, 0
      %p542 = por %p540, %p541
      %p543 = scmp.ne.s32.totalorder %s532, %s535
      %p544 = scmp.eq.s32.totalorder %s41, 1
      %p545 = por %p543, %p544
      %p546 = scmp.ne.s32.totalorder %s535, %s536
      %p547 = scmp.eq.s32.totalorder %s41, 0
      %p548 = por %p546, %p547
      %p549 = scmp.ne.s32.totalorder %s535, %s536
      %p550 = scmp.eq.s32.totalorder %s42, 1
      %p551 = por %p549, %p550
      %p553 = scmp.ne.s32.totalorder %s536, %s552
      %p554 = scmp.eq.s32.totalorder %s42, 0
      %p555 = por %p553, %p554
      %p556 = scmp.le.s32.totalorder 1, %s36
      %p557 = scmp.lt.s32.totalorder %s36, 3
      %p558 = pnand %p556, %p557
      %p559 = pneg %p558
      // Predicated region
      $region9: #{tpu_custom_call.1} parent=5 // pred_check
        _
      $region10: #{tpu_custom_call.1} parent=5 // pred_check_branch
        %561 = sbr.rel (%p558) target = $region12
      $region11: #{tpu_custom_call.1} parent=5 // pred_region
        %s562 = ssub.s32 %s36, 1
        // Predicated region
        $region13: #{tpu_custom_call.1} parent=11 // pred_check
          %p563 = pneg %p121
        $region14: #{tpu_custom_call.1} parent=11 // pred_check_branch
          %565 = sbr.rel (%p563) target = $region16
        $region15: #{tpu_custom_call.1} parent=11 // pred_region
          _
        $region16: #{tpu_custom_call.1} parent=11 // pred_fallthru
          _
        // Predicated region
        $region17: #{tpu_custom_call.1} parent=11 // pred_check
          %p566 = pneg %p142
        $region18: #{tpu_custom_call.1} parent=11 // pred_check_branch
          %568 = sbr.rel (%p566) target = $region20
        $region19: #{tpu_custom_call.1} parent=11 // pred_region
          _
        $region20: #{tpu_custom_call.1} parent=11 // pred_fallthru
          _
        // Predicated region
        $region21: #{tpu_custom_call.1} parent=11 // pred_check
          %p569 = pneg %p163
        $region22: #{tpu_custom_call.1} parent=11 // pred_check_branch
          %571 = sbr.rel (%p569) target = $region24
        $region23: #{tpu_custom_call.1} parent=11 // pred_region
          %s573 = ssub.s32 256, 256
          %574 = vsyncadd [#allocation7], %s573
          %s575 = sshll.u32 [#allocation6], 4
          %s576 = int_to_ptr.vmem [resolvable:$true] %s575
          %581 = dma.hbm_to_vmem [thread:$0]  %s4, 256, %s576, [#allocation7], 64, 64, 4
        $region24: #{tpu_custom_call.1} parent=11 // pred_fallthru
          _
        // Predicated region
        $region25: #{tpu_custom_call.1} parent=11 // pred_check
          %p582 = pneg %p184
        $region26: #{tpu_custom_call.1} parent=11 // pred_check_branch
          %584 = sbr.rel (%p582) target = $region28
        $region27: #{tpu_custom_call.1} parent=11 // pred_region
          %s586 = ssub.s32 16, 16
          %587 = vsyncadd [#allocation10], %s586
          %s589 = sshll.u32 [#allocation9], 4
          %s590 = int_to_ptr.vmem [resolvable:$true] %s589
          %592 = dma.hbm_to_vmem [thread:$0]  %s5, 16, %s590, [#allocation10]
        $region28: #{tpu_custom_call.1} parent=11 // pred_fallthru
          _
        // Predicated region
        $region29: #{tpu_custom_call.1} parent=11 // pred_check
          %p593 = pneg %p205
        $region30: #{tpu_custom_call.1} parent=11 // pred_check_branch
          %595 = sbr.rel (%p593) target = $region32
        $region31: #{tpu_custom_call.1} parent=11 // pred_region
          %s597 = ssub.s32 16, 16
          %598 = vsyncadd [#allocation10], %s597
          %s600 = sshll.u32 [#allocation11], 4
          %s601 = int_to_ptr.vmem [resolvable:$true] %s600
          %603 = dma.hbm_to_vmem [thread:$0]  %s6, 16, %s601, [#allocation10]
        $region32: #{tpu_custom_call.1} parent=11 // pred_fallthru
          _
        // Predicated region
        $region33: #{tpu_custom_call.1} parent=11 // pred_check
          %p604 = pneg %p226
        $region34: #{tpu_custom_call.1} parent=11 // pred_check_branch
          %606 = sbr.rel (%p604) target = $region36
        $region35: #{tpu_custom_call.1} parent=11 // pred_region
          %s608 = ssub.s32 16, 16
          %609 = vsyncadd [#allocation13], %s608
          %s611 = sshll.u32 [#allocation12], 4
          %s612 = int_to_ptr.vmem [resolvable:$true] %s611
          %614 = dma.hbm_to_vmem [thread:$0]  %s7, 16, %s612, [#allocation13]
        $region36: #{tpu_custom_call.1} parent=11 // pred_fallthru
          _
        // Predicated region
        $region37: #{tpu_custom_call.1} parent=11 // pred_check
          %p615 = pneg %p247
        $region38: #{tpu_custom_call.1} parent=11 // pred_check_branch
          %617 = sbr.rel (%p615) target = $region40
        $region39: #{tpu_custom_call.1} parent=11 // pred_region
          %s619 = ssub.s32 256, 256
          %620 = vsyncadd [#allocation13], %s619
          %s621 = sshll.u32 [#allocation14], 4
          %s622 = int_to_ptr.vmem [resolvable:$true] %s621
          %627 = dma.hbm_to_vmem [thread:$0]  %s8, 256, %s622, [#allocation13], 64, 64, 4
        $region40: #{tpu_custom_call.1} parent=11 // pred_fallthru
          _
        // Predicated region
        $region41: #{tpu_custom_call.1} parent=11 // pred_check
          %p628 = pneg %p268
        $region42: #{tpu_custom_call.1} parent=11 // pred_check_branch
          %630 = sbr.rel (%p628) target = $region44
        $region43: #{tpu_custom_call.1} parent=11 // pred_region
          %s632 = ssub.s32 16, 16
          %633 = vsyncadd [#allocation16], %s632
          %s635 = sshll.u32 [#allocation15], 4
          %s636 = int_to_ptr.vmem [resolvable:$true] %s635
          %638 = dma.hbm_to_vmem [thread:$0]  %s9, 16, %s636, [#allocation16]
        $region44: #{tpu_custom_call.1} parent=11 // pred_fallthru
          _
        // Predicated region
        $region45: #{tpu_custom_call.1} parent=11 // pred_check
          %p639 = pneg %p289
        $region46: #{tpu_custom_call.1} parent=11 // pred_check_branch
          %641 = sbr.rel (%p639) target = $region48
        $region47: #{tpu_custom_call.1} parent=11 // pred_region
          _
        $region48: #{tpu_custom_call.1} parent=11 // pred_fallthru
          _
        // Predicated region
        $region49: #{tpu_custom_call.1} parent=11 // pred_check
          %p642 = pneg %p310
        $region50: #{tpu_custom_call.1} parent=11 // pred_check_branch
          %644 = sbr.rel (%p642) target = $region52
        $region51: #{tpu_custom_call.1} parent=11 // pred_region
          %s646 = ssub.s32 16, 16
          %647 = vsyncadd [#allocation16], %s646
          %s649 = sshll.u32 [#allocation17], 4
          %s650 = int_to_ptr.vmem [resolvable:$true] %s649
          %652 = dma.hbm_to_vmem [thread:$0]  %s11, 16, %s650, [#allocation16]
        $region52: #{tpu_custom_call.1} parent=11 // pred_fallthru
          _
        // Predicated region
        $region53: #{tpu_custom_call.1} parent=11 // pred_check
          %p653 = pneg %p331
        $region54: #{tpu_custom_call.1} parent=11 // pred_check_branch
          %655 = sbr.rel (%p653) target = $region56
        $region55: #{tpu_custom_call.1} parent=11 // pred_region
          %s657 = ssub.s32 256, 256
          %658 = vsyncadd [#allocation19], %s657
          %s659 = sshll.u32 [#allocation18], 4
          %s660 = int_to_ptr.vmem [resolvable:$true] %s659
          %665 = dma.hbm_to_vmem [thread:$0]  %s12, 256, %s660, [#allocation19], 64, 64, 4
        $region56: #{tpu_custom_call.1} parent=11 // pred_fallthru
          _
        // Predicated region
        $region57: #{tpu_custom_call.1} parent=11 // pred_check
          %p666 = pneg %p352
        $region58: #{tpu_custom_call.1} parent=11 // pred_check_branch
          %668 = sbr.rel (%p666) target = $region60
        $region59: #{tpu_custom_call.1} parent=11 // pred_region
          %s670 = ssub.s32 16, 16
          %671 = vsyncadd [#allocation19], %s670
          %s673 = sshll.u32 [#allocation20], 4
          %s674 = int_to_ptr.vmem [resolvable:$true] %s673
          %676 = dma.hbm_to_vmem [thread:$0]  %s13, 16, %s674, [#allocation19]
        $region60: #{tpu_custom_call.1} parent=11 // pred_fallthru
          _
        // Predicated region
        $region61: #{tpu_custom_call.1} parent=11 // pred_check
          %p677 = pneg %p373
        $region62: #{tpu_custom_call.1} parent=11 // pred_check_branch
          %679 = sbr.rel (%p677) target = $region64
        $region63: #{tpu_custom_call.1} parent=11 // pred_region
          _
        $region64: #{tpu_custom_call.1} parent=11 // pred_fallthru
          _
        // Predicated region
        $region65: #{tpu_custom_call.1} parent=11 // pred_check
          %p680 = pneg %p394
        $region66: #{tpu_custom_call.1} parent=11 // pred_check_branch
          %682 = sbr.rel (%p680) target = $region68
        $region67: #{tpu_custom_call.1} parent=11 // pred_region
          _
        $region68: #{tpu_custom_call.1} parent=11 // pred_fallthru
          _
        // Predicated region
        $region69: #{tpu_custom_call.1} parent=11 // pred_check
          %p683 = pneg %p415
        $region70: #{tpu_custom_call.1} parent=11 // pred_check_branch
          %685 = sbr.rel (%p683) target = $region72
        $region71: #{tpu_custom_call.1} parent=11 // pred_region
          _
        $region72: #{tpu_custom_call.1} parent=11 // pred_fallthru
          _
        // Predicated region
        $region73: #{tpu_custom_call.1} parent=11 // pred_check
          %p686 = pneg %p436
        $region74: #{tpu_custom_call.1} parent=11 // pred_check_branch
          %688 = sbr.rel (%p686) target = $region76
        $region75: #{tpu_custom_call.1} parent=11 // pred_region
          _
        $region76: #{tpu_custom_call.1} parent=11 // pred_fallthru
          _
        // Predicated region
        $region77: #{tpu_custom_call.1} parent=11 // pred_check
          %p689 = pneg %p457
        $region78: #{tpu_custom_call.1} parent=11 // pred_check_branch
          %691 = sbr.rel (%p689) target = $region80
        $region79: #{tpu_custom_call.1} parent=11 // pred_region
          _
        $region80: #{tpu_custom_call.1} parent=11 // pred_fallthru
          _
        // Predicated region
        $region81: #{tpu_custom_call.1} parent=11 // pred_check
          %p692 = pneg %p478
        $region82: #{tpu_custom_call.1} parent=11 // pred_check_branch
          %694 = sbr.rel (%p692) target = $region84
        $region83: #{tpu_custom_call.1} parent=11 // pred_region
          _
        $region84: #{tpu_custom_call.1} parent=11 // pred_fallthru
          _
        // Predicated region
        $region85: #{tpu_custom_call.1} parent=11 // pred_check
          %p695 = pneg %p499
        $region86: #{tpu_custom_call.1} parent=11 // pred_check_branch
          %697 = sbr.rel (%p695) target = $region88
        $region87: #{tpu_custom_call.1} parent=11 // pred_region
          _
        $region88: #{tpu_custom_call.1} parent=11 // pred_fallthru
          _
        // Predicated region
        $region89: #{tpu_custom_call.1} parent=11 // pred_check
          %p698 = pneg %p520
        $region90: #{tpu_custom_call.1} parent=11 // pred_check_branch
          %700 = sbr.rel (%p698) target = $region92
        $region91: #{tpu_custom_call.1} parent=11 // pred_region
          _
        $region92: #{tpu_custom_call.1} parent=11 // pred_fallthru
          _
      $region12: #{tpu_custom_call.1} parent=5 // pred_fallthru
        _
      %p701 = scmp.lt.s32.totalorder %s36, 2
      // Predicated region
      $region93: #{tpu_custom_call.1} parent=5 // pred_check
        %p702 = pneg %p701
      $region94: #{tpu_custom_call.1} parent=5 // pred_check_branch
        %704 = sbr.rel (%p702) target = $region96
      $region95: #{tpu_custom_call.1} parent=5 // pred_region
        // Predicated region
        $region97: #{tpu_custom_call.1} parent=95 // pred_check
          %p705 = pneg %p68
        $region98: #{tpu_custom_call.1} parent=95 // pred_check_branch
          %707 = sbr.rel (%p705) target = $region100
        $region99: #{tpu_custom_call.1} parent=95 // pred_region
          %p708 = scmp.lt.s32.totalorder %s43, 1
          %s709 = scalar_select %p708, %s43, 1
          %s710 = smul.addr %s709, 8
          %s711 = scalar_lea.vmem %s0, %s710
        $region100: #{tpu_custom_call.1} parent=95 // pred_fallthru
          _
        // Predicated region
        $region101: #{tpu_custom_call.1} parent=95 // pred_check
          %p712 = pneg %p94
        $region102: #{tpu_custom_call.1} parent=95 // pred_check_branch
          %714 = sbr.rel (%p712) target = $region104
        $region103: #{tpu_custom_call.1} parent=95 // pred_region
          %p715 = scmp.lt.s32.totalorder %s43, 1
          %s716 = scalar_select %p715, %s43, 1
          %s717 = smul.addr %s716, 8
          %s718 = scalar_lea.vmem %s1, %s717
        $region104: #{tpu_custom_call.1} parent=95 // pred_fallthru
          _
      $region96: #{tpu_custom_call.1} parent=5 // pred_fallthru
        _
      %p719 = scmp.le.s32.totalorder 1, %s36
      %p720 = scmp.lt.s32.totalorder %s36, 3
      %p721 = pnand %p719, %p720
      %p722 = pneg %p721
      // Predicated region
      $region105: #{tpu_custom_call.1} parent=5 // pred_check
        _
      $region106: #{tpu_custom_call.1} parent=5 // pred_check_branch
        %724 = sbr.rel (%p721) target = $region108
      $region107: #{tpu_custom_call.1} parent=5 // pred_region
        %s725 = ssub.s32 %s36, 1
        // Predicated region
        $region109: #{tpu_custom_call.1} parent=107 // pred_check
          %p726 = pneg %p163
        $region110: #{tpu_custom_call.1} parent=107 // pred_check_branch
          %728 = sbr.rel (%p726) target = $region112
        $region111: #{tpu_custom_call.1} parent=107 // pred_region
          %729 = dma.done [#allocation7], 256
        $region112: #{tpu_custom_call.1} parent=107 // pred_fallthru
          _
        // Predicated region
        $region113: #{tpu_custom_call.1} parent=107 // pred_check
          %p730 = pneg %p184
        $region114: #{tpu_custom_call.1} parent=107 // pred_check_branch
          %732 = sbr.rel (%p730) target = $region116
        $region115: #{tpu_custom_call.1} parent=107 // pred_region
          %733 = dma.done [#allocation10], 16
        $region116: #{tpu_custom_call.1} parent=107 // pred_fallthru
          _
        // Predicated region
        $region117: #{tpu_custom_call.1} parent=107 // pred_check
          %p734 = pneg %p205
        $region118: #{tpu_custom_call.1} parent=107 // pred_check_branch
          %736 = sbr.rel (%p734) target = $region120
        $region119: #{tpu_custom_call.1} parent=107 // pred_region
          %737 = dma.done [#allocation10], 16
        $region120: #{tpu_custom_call.1} parent=107 // pred_fallthru
          _
        // Predicated region
        $region121: #{tpu_custom_call.1} parent=107 // pred_check
          %p738 = pneg %p226
        $region122: #{tpu_custom_call.1} parent=107 // pred_check_branch
          %740 = sbr.rel (%p738) target = $region124
        $region123: #{tpu_custom_call.1} parent=107 // pred_region
          %741 = dma.done [#allocation13], 16
        $region124: #{tpu_custom_call.1} parent=107 // pred_fallthru
          _
        // Predicated region
        $region125: #{tpu_custom_call.1} parent=107 // pred_check
          %p742 = pneg %p247
        $region126: #{tpu_custom_call.1} parent=107 // pred_check_branch
          %744 = sbr.rel (%p742) target = $region128
        $region127: #{tpu_custom_call.1} parent=107 // pred_region
          %745 = dma.done [#allocation13], 256
        $region128: #{tpu_custom_call.1} parent=107 // pred_fallthru
          _
        // Predicated region
        $region129: #{tpu_custom_call.1} parent=107 // pred_check
          %p746 = pneg %p268
        $region130: #{tpu_custom_call.1} parent=107 // pred_check_branch
          %748 = sbr.rel (%p746) target = $region132
        $region131: #{tpu_custom_call.1} parent=107 // pred_region
          %749 = dma.done [#allocation16], 16
        $region132: #{tpu_custom_call.1} parent=107 // pred_fallthru
          _
        // Predicated region
        $region133: #{tpu_custom_call.1} parent=107 // pred_check
          %p750 = pneg %p310
        $region134: #{tpu_custom_call.1} parent=107 // pred_check_branch
          %752 = sbr.rel (%p750) target = $region136
        $region135: #{tpu_custom_call.1} parent=107 // pred_region
          %753 = dma.done [#allocation16], 16
        $region136: #{tpu_custom_call.1} parent=107 // pred_fallthru
          _
        // Predicated region
        $region137: #{tpu_custom_call.1} parent=107 // pred_check
          %p754 = pneg %p331
        $region138: #{tpu_custom_call.1} parent=107 // pred_check_branch
          %756 = sbr.rel (%p754) target = $region140
        $region139: #{tpu_custom_call.1} parent=107 // pred_region
          %757 = dma.done [#allocation19], 256
        $region140: #{tpu_custom_call.1} parent=107 // pred_fallthru
          _
        // Predicated region
        $region141: #{tpu_custom_call.1} parent=107 // pred_check
          %p758 = pneg %p352
        $region142: #{tpu_custom_call.1} parent=107 // pred_check_branch
          %760 = sbr.rel (%p758) target = $region144
        $region143: #{tpu_custom_call.1} parent=107 // pred_region
          %761 = dma.done [#allocation19], 16
        $region144: #{tpu_custom_call.1} parent=107 // pred_fallthru
          _
        %p762 = scmp.lt.s32.totalorder %s45, 1
        %s763 = scalar_select %p762, %s45, 1
        %s764 = smul.addr %s763, 8
        %s765 = scalar_lea.vmem %s0, %s764
        %p766 = pneg %p74
        %p767 = pneg %p71
        %p768 = scmp.lt.s32.totalorder %s45, 1
        %s769 = scalar_select %p768, %s45, 1
        %s770 = smul.addr %s769, 8
        %s771 = scalar_lea.vmem %s1, %s770
        %p772 = pneg %p100
        %p773 = pneg %p97
        %p774 = pneg %p121
        %p775 = pneg %p118
        %p776 = pneg %p142
        %p777 = pneg %p139
        %p778 = pneg %p163
        %p779 = pneg %p160
        %p780 = pneg %p184
        %p781 = pneg %p181
        %p782 = pneg %p205
        %p783 = pneg %p202
        %p784 = pneg %p226
        %p785 = pneg %p223
        %p786 = pneg %p247
        %p787 = pneg %p244
        %p788 = pneg %p268
        %p789 = pneg %p265
        %p790 = pneg %p289
        %p791 = pneg %p286
        %p792 = pneg %p310
        %p793 = pneg %p307
        %p794 = pneg %p331
        %p795 = pneg %p328
        %p796 = pneg %p352
        %p797 = pneg %p349
        %p798 = pneg %p373
        %p799 = pneg %p370
        %p800 = pneg %p394
        %p801 = pneg %p391
        %p802 = pneg %p415
        %p803 = pneg %p412
        %p804 = pneg %p436
        %p805 = pneg %p433
        %p806 = pneg %p457
        %p807 = pneg %p454
        %p808 = pneg %p478
        %p809 = pneg %p475
        %p810 = pneg %p499
        %p811 = pneg %p496
        %p812 = pneg %p520
        %p813 = pneg %p517
        %p814 = pneg %p548
        %p815 = pneg %p545
        %s816 = sand.u32 %s535, 1
        %s817 = scalar_lea.sflag [#allocation8], %s816
        %s818 = sand.u32 %s535, 1
        %s819 = smul.addr %s818, 8
        %s820 = scalar_lea.vmem [#allocation21], %s819
        %p821 = scmp.lt.s32.totalorder %s45, 1
        %s822 = scalar_select %p821, %s45, 1
        %s823 = smul.addr %s822, 8
        %s824 = scalar_lea.vmem %s0, %s823
        %p825 = scmp.lt.s32.totalorder %s45, 1
        %s826 = scalar_select %p825, %s45, 1
        %s827 = smul.addr %s826, 8
        %s828 = scalar_lea.vmem %s1, %s827
        %s830 = smul.u32 %s46, 8
        %p831 = scmp.eq.s32.totalorder %s46, 0
        // Predicated region
        $region145: #{tpu_custom_call.1} parent=107 // pred_check
          %p832 = pneg %p831
        $region146: #{tpu_custom_call.1} parent=107 // pred_check_branch
          %834 = sbr.rel (%p832) target = $region148
        $region147: #{tpu_custom_call.1} parent=107 // pred_region
          %v835 = vld [vmem:[%s828] sm:$0xff]
          %v836 = vld [vmem:[%s824] sm:$0xff]
          %v837 = vld [vmem:[%s2] sm:$0xf]
          %v838 = vld [vmem:[%s2 + $0x4] sm:$0xf]
          %v839 = vld [vmem:[%s2 + $0x8] sm:$0xf]
          %v840 = vld [vmem:[%s2 + $0xc] sm:$0xf]
          %v841 = vpack.c.bf16 %v835, %v835
          %v842 = vld [vmem:[%s3] sm:$0x1]
          %v844 = vlaneseq
          %v845 = vshrl.u32 %v844, 7
          %v846 = vsub.s32 0, %v845
          %v847 = vrot.slane %v842, %v846
          %v852 = vunpack.c.l.b16 %v837
          %v853 = vunpack.c.l.b16 %v838
          %v854 = vunpack.c.l.b16 %v839
          %v855 = vunpack.c.l.b16 %v840
          %v856 = vpack.c.b16 %v853, %v852
          %v857 = vpack.c.b16 %v855, %v854
          %858 = vrot.lane.b32.xlu0 %v856, 96
          %v859 = vpop.permute.xlu0 %858
          %860 = vrot.lane.b32.xlu0 %v857, 96
          %v861 = vpop.permute.xlu0 %860
          %864 = vrot.lane.b32.xlu0 %v847, 96
          %v865 = vpop.permute.xlu0 %864
          %vm867 = vcmask 261120
          %v869 = vsel %vm867, %v841, 0
          %871 = vmatprep.subr.bf16.mxu0 0
          %872 = vmatpush1.bf16.msra.mxu0 %v859
          %873 = vmatprep.subr.bf16.mxu0 0
          %874 = vmatpush1.bf16.msra.mxu0 %v861
          %875 = vmatprep.subr.bf16.mxu0 0
          %876 = vmatpush1.bf16.msra.mxu0 0
          %877 = vmatprep.subr.bf16.mxu0 0
          %878 = vmatpush1.bf16.msra.mxu0 0
          %879 = vmatprep.subr.bf16.mxu0 0
          %880 = vmatpush1.bf16.msra.mxu0 0
          %881 = vmatprep.subr.bf16.mxu0 0
          %882 = vmatpush1.bf16.msra.mxu0 0
          %883 = vmatprep.subr.bf16.mxu0 0
          %884 = vmatpush1.bf16.msra.mxu0 0
          %885 = vmatprep.subr.bf16.mxu0 0
          %886 = vmatpush1.bf16.msra.mxu0 0
          %887 = vmatprep.subr.bf16.mxu0 0
          %888 = vmatpush1.bf16.msra.mxu0 0
          %889 = vmatprep.subr.bf16.mxu0 0
          %890 = vmatpush1.bf16.msra.mxu0 0
          %891 = vmatprep.subr.bf16.mxu0 0
          %892 = vmatpush1.bf16.msra.mxu0 0
          %893 = vmatprep.subr.bf16.mxu0 0
          %894 = vmatpush1.bf16.msra.mxu0 0
          %895 = vmatprep.subr.bf16.mxu0 0
          %896 = vmatpush1.bf16.msra.mxu0 0
          %897 = vmatprep.subr.bf16.mxu0 0
          %898 = vmatpush1.bf16.msra.mxu0 0
          %899 = vmatprep.subr.bf16.mxu0 0
          %900 = vmatpush1.bf16.msra.mxu0 0
          %901 = vmatprep.subr.bf16.mxu0 0
          %902 = vmatpush1.bf16.msra.mxu0 0
          %903 = vmatprep.mubr.bf16.mxu0 0
          %904 = vmatmul.mubr.bf16.gmra.mrb[0].mxu0 %v869
          %v905 = vpop.f32.mrb[0].mxu0
          %v906 = vadd.f32 %v865, %v905
          %v907 = vpop.f32.mrb[0].mxu0
          %v908 = vpop.f32.mrb[0].mxu0
          %v909 = vpop.f32.mrb[0].mxu0
          %910 = vdwg.mxu0
          %911 = vrot.lane.b32.xlu0 %v856, 64
          %v912 = vpop.permute.xlu0 %911
          %913 = vrot.lane.b32.xlu0 %v857, 64
          %v914 = vpop.permute.xlu0 %913
          %917 = vrot.lane.b32.xlu0 %v847, 64
          %v918 = vpop.permute.xlu0 %917
          %920 = vmatprep.subr.bf16.mxu0 0
          %921 = vmatpush1.bf16.msra.mxu0 %v912
          %922 = vmatprep.subr.bf16.mxu0 0
          %923 = vmatpush1.bf16.msra.mxu0 %v914
          %924 = vmatprep.subr.bf16.mxu0 0
          %925 = vmatpush1.bf16.msra.mxu0 0
          %926 = vmatprep.subr.bf16.mxu0 0
          %927 = vmatpush1.bf16.msra.mxu0 0
          %928 = vmatprep.subr.bf16.mxu0 0
          %929 = vmatpush1.bf16.msra.mxu0 0
          %930 = vmatprep.subr.bf16.mxu0 0
          %931 = vmatpush1.bf16.msra.mxu0 0
          %932 = vmatprep.subr.bf16.mxu0 0
          %933 = vmatpush1.bf16.msra.mxu0 0
          %934 = vmatprep.subr.bf16.mxu0 0
          %935 = vmatpush1.bf16.msra.mxu0 0
          %936 = vmatprep.subr.bf16.mxu0 0
          %937 = vmatpush1.bf16.msra.mxu0 0
          %938 = vmatprep.subr.bf16.mxu0 0
          %939 = vmatpush1.bf16.msra.mxu0 0
          %940 = vmatprep.subr.bf16.mxu0 0
          %941 = vmatpush1.bf16.msra.mxu0 0
          %942 = vmatprep.subr.bf16.mxu0 0
          %943 = vmatpush1.bf16.msra.mxu0 0
          %944 = vmatprep.subr.bf16.mxu0 0
          %945 = vmatpush1.bf16.msra.mxu0 0
          %946 = vmatprep.subr.bf16.mxu0 0
          %947 = vmatpush1.bf16.msra.mxu0 0
          %948 = vmatprep.subr.bf16.mxu0 0
          %949 = vmatpush1.bf16.msra.mxu0 0
          %950 = vmatprep.subr.bf16.mxu0 0
          %951 = vmatpush1.bf16.msra.mxu0 0
          %952 = vmatprep.mubr.bf16.mxu0 0
          %953 = vmatmul.mubr.bf16.gmra.mrb[0].mxu0 %v869
          %v954 = vpop.f32.mrb[0].mxu0
          %v955 = vadd.f32 %v918, %v954
          %v956 = vpop.f32.mrb[0].mxu0
          %v957 = vpop.f32.mrb[0].mxu0
          %v958 = vpop.f32.mrb[0].mxu0
          %959 = vdwg.mxu0
          %v960 = vld [vmem:[#allocation14] sm:$0xf]
          %v961 = vld [vmem:[#allocation14 + $0x4] sm:$0xf]
          %v962 = vld [vmem:[#allocation14 + $0x8] sm:$0xf]
          %v963 = vld [vmem:[#allocation14 + $0xc] sm:$0xf]
          %v964 = vpack.c.bf16 %v836, %v836
          %v965 = vld [vmem:[#allocation15] sm:$0x1]
          %v967 = vlaneseq
          %v968 = vshrl.u32 %v967, 7
          %v969 = vsub.s32 0, %v968
          %v970 = vrot.slane %v965, %v969
          %v976 = vunpack.c.l.b16 %v960
          %v977 = vunpack.c.l.b16 %v961
          %v978 = vunpack.c.l.b16 %v962
          %v979 = vunpack.c.l.b16 %v963
          %v980 = vpack.c.b16 %v977, %v976
          %v981 = vpack.c.b16 %v979, %v978
          %v985 = vsel %vm867, %v964, 0
          %987 = vmatprep.subr.bf16.mxu0 0
          %988 = vmatpush1.bf16.msra.mxu0 %v980
          %989 = vmatprep.subr.bf16.mxu0 0
          %990 = vmatpush1.bf16.msra.mxu0 %v981
          %991 = vmatprep.subr.bf16.mxu0 0
          %992 = vmatpush1.bf16.msra.mxu0 0
          %993 = vmatprep.subr.bf16.mxu0 0
          %994 = vmatpush1.bf16.msra.mxu0 0
          %995 = vmatprep.subr.bf16.mxu0 0
          %996 = vmatpush1.bf16.msra.mxu0 0
          %997 = vmatprep.subr.bf16.mxu0 0
          %998 = vmatpush1.bf16.msra.mxu0 0
          %999 = vmatprep.subr.bf16.mxu0 0
          %1000 = vmatpush1.bf16.msra.mxu0 0
          %1001 = vmatprep.subr.bf16.mxu0 0
          %1002 = vmatpush1.bf16.msra.mxu0 0
          %1003 = vmatprep.subr.bf16.mxu0 0
          %1004 = vmatpush1.bf16.msra.mxu0 0
          %1005 = vmatprep.subr.bf16.mxu0 0
          %1006 = vmatpush1.bf16.msra.mxu0 0
          %1007 = vmatprep.subr.bf16.mxu0 0
          %1008 = vmatpush1.bf16.msra.mxu0 0
          %1009 = vmatprep.subr.bf16.mxu0 0
          %1010 = vmatpush1.bf16.msra.mxu0 0
          %1011 = vmatprep.subr.bf16.mxu0 0
          %1012 = vmatpush1.bf16.msra.mxu0 0
          %1013 = vmatprep.subr.bf16.mxu0 0
          %1014 = vmatpush1.bf16.msra.mxu0 0
          %1015 = vmatprep.subr.bf16.mxu0 0
          %1016 = vmatpush1.bf16.msra.mxu0 0
          %1017 = vmatprep.subr.bf16.mxu0 0
          %1018 = vmatpush1.bf16.msra.mxu0 0
          %1019 = vmatprep.mubr.bf16.mxu0 0
          %1020 = vmatmul.mubr.bf16.gmra.mrb[0].mxu0 %v985
          %v1021 = vpop.f32.mrb[0].mxu0
          %v1022 = vadd.f32 %v970, %v1021
          %v1023 = vpop.f32.mrb[0].mxu0
          %v1024 = vpop.f32.mrb[0].mxu0
          %v1025 = vpop.f32.mrb[0].mxu0
          %1026 = vdwg.mxu0
          %1027 = vrot.lane.b32.xlu0 %v980, 96
          %v1028 = vpop.permute.xlu0 %1027
          %1029 = vrot.lane.b32.xlu0 %v981, 96
          %v1030 = vpop.permute.xlu0 %1029
          %1033 = vrot.lane.b32.xlu0 %v970, 96
          %v1034 = vpop.permute.xlu0 %1033
          %1036 = vmatprep.subr.bf16.mxu0 0
          %1037 = vmatpush1.bf16.msra.mxu0 %v1028
          %1038 = vmatprep.subr.bf16.mxu0 0
          %1039 = vmatpush1.bf16.msra.mxu0 %v1030
          %1040 = vmatprep.subr.bf16.mxu0 0
          %1041 = vmatpush1.bf16.msra.mxu0 0
          %1042 = vmatprep.subr.bf16.mxu0 0
          %1043 = vmatpush1.bf16.msra.mxu0 0
          %1044 = vmatprep.subr.bf16.mxu0 0
          %1045 = vmatpush1.bf16.msra.mxu0 0
          %1046 = vmatprep.subr.bf16.mxu0 0
          %1047 = vmatpush1.bf16.msra.mxu0 0
          %1048 = vmatprep.subr.bf16.mxu0 0
          %1049 = vmatpush1.bf16.msra.mxu0 0
          %1050 = vmatprep.subr.bf16.mxu0 0
          %1051 = vmatpush1.bf16.msra.mxu0 0
          %1052 = vmatprep.subr.bf16.mxu0 0
          %1053 = vmatpush1.bf16.msra.mxu0 0
          %1054 = vmatprep.subr.bf16.mxu0 0
          %1055 = vmatpush1.bf16.msra.mxu0 0
          %1056 = vmatprep.subr.bf16.mxu0 0
          %1057 = vmatpush1.bf16.msra.mxu0 0
          %1058 = vmatprep.subr.bf16.mxu0 0
          %1059 = vmatpush1.bf16.msra.mxu0 0
          %1060 = vmatprep.subr.bf16.mxu0 0
          %1061 = vmatpush1.bf16.msra.mxu0 0
          %1062 = vmatprep.subr.bf16.mxu0 0
          %1063 = vmatpush1.bf16.msra.mxu0 0
          %1064 = vmatprep.subr.bf16.mxu0 0
          %1065 = vmatpush1.bf16.msra.mxu0 0
          %1066 = vmatprep.subr.bf16.mxu0 0
          %1067 = vmatpush1.bf16.msra.mxu0 0
          %1068 = vmatprep.mubr.bf16.mxu0 0
          %1069 = vmatmul.mubr.bf16.gmra.mrb[0].mxu0 %v985
          %v1070 = vpop.f32.mrb[0].mxu0
          %v1071 = vadd.f32 %v1034, %v1070
          %v1072 = vpop.f32.mrb[0].mxu0
          %v1073 = vpop.f32.mrb[0].mxu0
          %v1074 = vpop.f32.mrb[0].mxu0
          %1075 = vdwg.mxu0
          %1077 = vrot.lane.b32.xlu0 %v906, 120
          %v1078 = vpop.permute.xlu0 %1077
          %1080 = vrot.lane.b32.xlu0 %v906, 112
          %v1081 = vpop.permute.xlu0 %1080
          %1083 = vrot.lane.b32.xlu0 %v906, 104
          %v1084 = vpop.permute.xlu0 %1083
          %v1086 = vcombine.low %v906, %v1081
          %v1087 = vcombine.high %v906, %v1081
          %v1089 = vunpack.c.l.s4 1983009808
          %v1090 = vunpack.c.0.s8 %v1089
          %v1091 = vlaneseq
          %v1092 = vshrl.u32 %v1091, 7
          %v1093 = vsub.s32 %v1090, %v1092
          %v1094 = vrot.slane %v1086, %v1093
          %v1096 = vunpack.c.l.s4 1983009808
          %v1097 = vunpack.c.0.s8 %v1096
          %v1098 = vlaneseq
          %v1099 = vshrl.u32 %v1098, 7
          %v1100 = vsub.s32 %v1097, %v1099
          %v1101 = vrot.slane %v1087, %v1100
          %v1102 = vcombine.low %v1078, %v1084
          %v1103 = vcombine.high %v1078, %v1084
          %v1105 = vunpack.c.l.s4 1983009808
          %v1106 = vunpack.c.0.s8 %v1105
          %v1107 = vlaneseq
          %v1108 = vshrl.u32 %v1107, 7
          %v1109 = vsub.s32 %v1106, %v1108
          %v1110 = vrot.slane %v1102, %v1109
          %v1112 = vunpack.c.l.s4 1983009808
          %v1113 = vunpack.c.0.s8 %v1112
          %v1114 = vlaneseq
          %v1115 = vshrl.u32 %v1114, 7
          %v1116 = vsub.s32 %v1113, %v1115
          %v1117 = vrot.slane %v1103, %v1116
          %v1118 = vcombine.low %v1094, %v1110
          %v1119 = vcombine.high %v1094, %v1110
          %v1121 = vunpack.c.l.s4 1934713408
          %v1122 = vunpack.c.0.s8 %v1121
          %v1123 = vlaneseq
          %v1124 = vshrl.u32 %v1123, 7
          %v1125 = vsub.s32 %v1122, %v1124
          %v1126 = vrot.slane %v1118, %v1125
          %v1128 = vunpack.c.l.s4 1934713408
          %v1129 = vunpack.c.0.s8 %v1128
          %v1130 = vlaneseq
          %v1131 = vshrl.u32 %v1130, 7
          %v1132 = vsub.s32 %v1129, %v1131
          %v1133 = vrot.slane %v1119, %v1132
          %v1134 = vcombine.low %v1101, %v1117
          %v1135 = vcombine.high %v1101, %v1117
          %v1137 = vunpack.c.l.s4 1934713408
          %v1138 = vunpack.c.0.s8 %v1137
          %v1139 = vlaneseq
          %v1140 = vshrl.u32 %v1139, 7
          %v1141 = vsub.s32 %v1138, %v1140
          %v1142 = vrot.slane %v1134, %v1141
          %v1144 = vunpack.c.l.s4 1934713408
          %v1145 = vunpack.c.0.s8 %v1144
          %v1146 = vlaneseq
          %v1147 = vshrl.u32 %v1146, 7
          %v1148 = vsub.s32 %v1145, %v1147
          %v1149 = vrot.slane %v1135, %v1148
          %v1150 = vcombine.high %v1126, 0.0
          %v1151 = vcombine.high %v1133, 0.0
          %v1152 = vcombine.high %v1142, 0.0
          %v1153 = vcombine.high %v1149, 0.0
          %v1154 = vcombine.low %v1126, %v1133
          %v1156 = vunpack.c.l.s4 1983009808
          %v1157 = vunpack.c.0.s8 %v1156
          %v1158 = vlaneseq
          %v1159 = vshrl.u32 %v1158, 7
          %v1160 = vsub.s32 %v1157, %v1159
          %v1161 = vrot.slane %v1154, %v1160
          %v1162 = vcombine.low %v1150, %v1151
          %v1164 = vunpack.c.l.s4 1983009808
          %v1165 = vunpack.c.0.s8 %v1164
          %v1166 = vlaneseq
          %v1167 = vshrl.u32 %v1166, 7
          %v1168 = vsub.s32 %v1165, %v1167
          %v1169 = vrot.slane %v1162, %v1168
          %v1170 = vcombine.low %v1142, %v1149
          %v1172 = vunpack.c.l.s4 1983009808
          %v1173 = vunpack.c.0.s8 %v1172
          %v1174 = vlaneseq
          %v1175 = vshrl.u32 %v1174, 7
          %v1176 = vsub.s32 %v1173, %v1175
          %v1177 = vrot.slane %v1170, %v1176
          %v1178 = vcombine.low %v1152, %v1153
          %v1180 = vunpack.c.l.s4 1983009808
          %v1181 = vunpack.c.0.s8 %v1180
          %v1182 = vlaneseq
          %v1183 = vshrl.u32 %v1182, 7
          %v1184 = vsub.s32 %v1181, %v1183
          %v1185 = vrot.slane %v1178, %v1184
          %v1186 = vcombine.low %v1161, %v1169
          %v1187 = vcombine.high %v1161, %v1169
          %v1189 = vunpack.c.l.s4 1934713408
          %v1190 = vunpack.c.0.s8 %v1189
          %v1191 = vlaneseq
          %v1192 = vshrl.u32 %v1191, 7
          %v1193 = vsub.s32 %v1190, %v1192
          %v1194 = vrot.slane %v1186, %v1193
          %v1196 = vunpack.c.l.s4 1934713408
          %v1197 = vunpack.c.0.s8 %v1196
          %v1198 = vlaneseq
          %v1199 = vshrl.u32 %v1198, 7
          %v1200 = vsub.s32 %v1197, %v1199
          %v1201 = vrot.slane %v1187, %v1200
          %v1202 = vcombine.low %v1177, %v1185
          %v1203 = vcombine.high %v1177, %v1185
          %v1205 = vunpack.c.l.s4 1934713408
          %v1206 = vunpack.c.0.s8 %v1205
          %v1207 = vlaneseq
          %v1208 = vshrl.u32 %v1207, 7
          %v1209 = vsub.s32 %v1206, %v1208
          %v1210 = vrot.slane %v1202, %v1209
          %v1212 = vunpack.c.l.s4 1934713408
          %v1213 = vunpack.c.0.s8 %v1212
          %v1214 = vlaneseq
          %v1215 = vshrl.u32 %v1214, 7
          %v1216 = vsub.s32 %v1213, %v1215
          %v1217 = vrot.slane %v1203, %v1216
          %v1218 = vcombine.low %v1194, %v1210
          %v1219 = vcombine.high %v1194, %v1210
          %v1220 = vcombine.low %v1201, %v1217
          %v1221 = vcombine.high %v1201, %v1217
          %v1222 = vpack.c.bf16 %v1218, %v1218
          %v1223 = vpack.c.bf16 %v1219, %v1219
          %v1224 = vpack.c.bf16 %v1220, %v1220
          %v1225 = vpack.c.bf16 %v1221, %v1221
          %vm1226 = vcmask 60416
          %1227 = vst.msk [vmem:[#allocation2] sm:$0xf] %vm1226, %v1222
          %1228 = vst.msk [vmem:[#allocation2 + $0x4] sm:$0xf] %vm1226, %v1223
          %1229 = vst.msk [vmem:[#allocation2 + $0x8] sm:$0xf] %vm1226, %v1224
          %1230 = vst.msk [vmem:[#allocation2 + $0xc] sm:$0xf] %vm1226, %v1225
          %1232 = vrot.lane.b32.xlu0 %v955, 120
          %v1233 = vpop.permute.xlu0 %1232
          %1235 = vrot.lane.b32.xlu0 %v955, 112
          %v1236 = vpop.permute.xlu0 %1235
          %1238 = vrot.lane.b32.xlu0 %v955, 104
          %v1239 = vpop.permute.xlu0 %1238
          %v1241 = vcombine.low %v955, %v1236
          %v1242 = vcombine.high %v955, %v1236
          %v1244 = vunpack.c.l.s4 1983009808
          %v1245 = vunpack.c.0.s8 %v1244
          %v1246 = vlaneseq
          %v1247 = vshrl.u32 %v1246, 7
          %v1248 = vsub.s32 %v1245, %v1247
          %v1249 = vrot.slane %v1241, %v1248
          %v1251 = vunpack.c.l.s4 1983009808
          %v1252 = vunpack.c.0.s8 %v1251
          %v1253 = vlaneseq
          %v1254 = vshrl.u32 %v1253, 7
          %v1255 = vsub.s32 %v1252, %v1254
          %v1256 = vrot.slane %v1242, %v1255
          %v1257 = vcombine.low %v1233, %v1239
          %v1258 = vcombine.high %v1233, %v1239
          %v1260 = vunpack.c.l.s4 1983009808
          %v1261 = vunpack.c.0.s8 %v1260
          %v1262 = vlaneseq
          %v1263 = vshrl.u32 %v1262, 7
          %v1264 = vsub.s32 %v1261, %v1263
          %v1265 = vrot.slane %v1257, %v1264
          %v1267 = vunpack.c.l.s4 1983009808
          %v1268 = vunpack.c.0.s8 %v1267
          %v1269 = vlaneseq
          %v1270 = vshrl.u32 %v1269, 7
          %v1271 = vsub.s32 %v1268, %v1270
          %v1272 = vrot.slane %v1258, %v1271
          %v1273 = vcombine.low %v1249, %v1265
          %v1274 = vcombine.high %v1249, %v1265
          %v1276 = vunpack.c.l.s4 1934713408
          %v1277 = vunpack.c.0.s8 %v1276
          %v1278 = vlaneseq
          %v1279 = vshrl.u32 %v1278, 7
          %v1280 = vsub.s32 %v1277, %v1279
          %v1281 = vrot.slane %v1273, %v1280
          %v1283 = vunpack.c.l.s4 1934713408
          %v1284 = vunpack.c.0.s8 %v1283
          %v1285 = vlaneseq
          %v1286 = vshrl.u32 %v1285, 7
          %v1287 = vsub.s32 %v1284, %v1286
          %v1288 = vrot.slane %v1274, %v1287
          %v1289 = vcombine.low %v1256, %v1272
          %v1290 = vcombine.high %v1256, %v1272
          %v1292 = vunpack.c.l.s4 1934713408
          %v1293 = vunpack.c.0.s8 %v1292
          %v1294 = vlaneseq
          %v1295 = vshrl.u32 %v1294, 7
          %v1296 = vsub.s32 %v1293, %v1295
          %v1297 = vrot.slane %v1289, %v1296
          %v1299 = vunpack.c.l.s4 1934713408
          %v1300 = vunpack.c.0.s8 %v1299
          %v1301 = vlaneseq
          %v1302 = vshrl.u32 %v1301, 7
          %v1303 = vsub.s32 %v1300, %v1302
          %v1304 = vrot.slane %v1290, %v1303
          %v1305 = vcombine.high %v1281, 0.0
          %v1306 = vcombine.high %v1288, 0.0
          %v1307 = vcombine.high %v1297, 0.0
          %v1308 = vcombine.high %v1304, 0.0
          %v1309 = vcombine.low %v1281, %v1288
          %v1311 = vunpack.c.l.s4 1983009808
          %v1312 = vunpack.c.0.s8 %v1311
          %v1313 = vlaneseq
          %v1314 = vshrl.u32 %v1313, 7
          %v1315 = vsub.s32 %v1312, %v1314
          %v1316 = vrot.slane %v1309, %v1315
          %v1317 = vcombine.low %v1305, %v1306
          %v1319 = vunpack.c.l.s4 1983009808
          %v1320 = vunpack.c.0.s8 %v1319
          %v1321 = vlaneseq
          %v1322 = vshrl.u32 %v1321, 7
          %v1323 = vsub.s32 %v1320, %v1322
          %v1324 = vrot.slane %v1317, %v1323
          %v1325 = vcombine.low %v1297, %v1304
          %v1327 = vunpack.c.l.s4 1983009808
          %v1328 = vunpack.c.0.s8 %v1327
          %v1329 = vlaneseq
          %v1330 = vshrl.u32 %v1329, 7
          %v1331 = vsub.s32 %v1328, %v1330
          %v1332 = vrot.slane %v1325, %v1331
          %v1333 = vcombine.low %v1307, %v1308
          %v1335 = vunpack.c.l.s4 1983009808
          %v1336 = vunpack.c.0.s8 %v1335
          %v1337 = vlaneseq
          %v1338 = vshrl.u32 %v1337, 7
          %v1339 = vsub.s32 %v1336, %v1338
          %v1340 = vrot.slane %v1333, %v1339
          %v1341 = vcombine.low %v1316, %v1324
          %v1342 = vcombine.high %v1316, %v1324
          %v1344 = vunpack.c.l.s4 1934713408
          %v1345 = vunpack.c.0.s8 %v1344
          %v1346 = vlaneseq
          %v1347 = vshrl.u32 %v1346, 7
          %v1348 = vsub.s32 %v1345, %v1347
          %v1349 = vrot.slane %v1341, %v1348
          %v1351 = vunpack.c.l.s4 1934713408
          %v1352 = vunpack.c.0.s8 %v1351
          %v1353 = vlaneseq
          %v1354 = vshrl.u32 %v1353, 7
          %v1355 = vsub.s32 %v1352, %v1354
          %v1356 = vrot.slane %v1342, %v1355
          %v1357 = vcombine.low %v1332, %v1340
          %v1358 = vcombine.high %v1332, %v1340
          %v1360 = vunpack.c.l.s4 1934713408
          %v1361 = vunpack.c.0.s8 %v1360
          %v1362 = vlaneseq
          %v1363 = vshrl.u32 %v1362, 7
          %v1364 = vsub.s32 %v1361, %v1363
          %v1365 = vrot.slane %v1357, %v1364
          %v1367 = vunpack.c.l.s4 1934713408
          %v1368 = vunpack.c.0.s8 %v1367
          %v1369 = vlaneseq
          %v1370 = vshrl.u32 %v1369, 7
          %v1371 = vsub.s32 %v1368, %v1370
          %v1372 = vrot.slane %v1358, %v1371
          %v1373 = vcombine.low %v1349, %v1365
          %v1374 = vcombine.high %v1349, %v1365
          %v1375 = vcombine.low %v1356, %v1372
          %v1376 = vcombine.high %v1356, %v1372
          %v1377 = vpack.c.bf16 %v1373, %v1373
          %v1378 = vpack.c.bf16 %v1374, %v1374
          %v1379 = vpack.c.bf16 %v1375, %v1375
          %v1380 = vpack.c.bf16 %v1376, %v1376
          %1381 = vst.msk [vmem:[#allocation3] sm:$0xf] %vm1226, %v1377
          %1382 = vst.msk [vmem:[#allocation3 + $0x4] sm:$0xf] %vm1226, %v1378
          %1383 = vst.msk [vmem:[#allocation3 + $0x8] sm:$0xf] %vm1226, %v1379
          %1384 = vst.msk [vmem:[#allocation3 + $0xc] sm:$0xf] %vm1226, %v1380
          %1386 = vrot.lane.b32.xlu0 %v1022, 120
          %v1387 = vpop.permute.xlu0 %1386
          %1389 = vrot.lane.b32.xlu0 %v1022, 112
          %v1390 = vpop.permute.xlu0 %1389
          %1392 = vrot.lane.b32.xlu0 %v1022, 104
          %v1393 = vpop.permute.xlu0 %1392
          %v1395 = vcombine.low %v1022, %v1390
          %v1396 = vcombine.high %v1022, %v1390
          %v1398 = vunpack.c.l.s4 1983009808
          %v1399 = vunpack.c.0.s8 %v1398
          %v1400 = vlaneseq
          %v1401 = vshrl.u32 %v1400, 7
          %v1402 = vsub.s32 %v1399, %v1401
          %v1403 = vrot.slane %v1395, %v1402
          %v1405 = vunpack.c.l.s4 1983009808
          %v1406 = vunpack.c.0.s8 %v1405
          %v1407 = vlaneseq
          %v1408 = vshrl.u32 %v1407, 7
          %v1409 = vsub.s32 %v1406, %v1408
          %v1410 = vrot.slane %v1396, %v1409
          %v1411 = vcombine.low %v1387, %v1393
          %v1412 = vcombine.high %v1387, %v1393
          %v1414 = vunpack.c.l.s4 1983009808
          %v1415 = vunpack.c.0.s8 %v1414
          %v1416 = vlaneseq
          %v1417 = vshrl.u32 %v1416, 7
          %v1418 = vsub.s32 %v1415, %v1417
          %v1419 = vrot.slane %v1411, %v1418
          %v1421 = vunpack.c.l.s4 1983009808
          %v1422 = vunpack.c.0.s8 %v1421
          %v1423 = vlaneseq
          %v1424 = vshrl.u32 %v1423, 7
          %v1425 = vsub.s32 %v1422, %v1424
          %v1426 = vrot.slane %v1412, %v1425
          %v1427 = vcombine.low %v1403, %v1419
          %v1428 = vcombine.high %v1403, %v1419
          %v1430 = vunpack.c.l.s4 1934713408
          %v1431 = vunpack.c.0.s8 %v1430
          %v1432 = vlaneseq
          %v1433 = vshrl.u32 %v1432, 7
          %v1434 = vsub.s32 %v1431, %v1433
          %v1435 = vrot.slane %v1427, %v1434
          %v1437 = vunpack.c.l.s4 1934713408
          %v1438 = vunpack.c.0.s8 %v1437
          %v1439 = vlaneseq
          %v1440 = vshrl.u32 %v1439, 7
          %v1441 = vsub.s32 %v1438, %v1440
          %v1442 = vrot.slane %v1428, %v1441
          %v1443 = vcombine.low %v1410, %v1426
          %v1444 = vcombine.high %v1410, %v1426
          %v1446 = vunpack.c.l.s4 1934713408
          %v1447 = vunpack.c.0.s8 %v1446
          %v1448 = vlaneseq
          %v1449 = vshrl.u32 %v1448, 7
          %v1450 = vsub.s32 %v1447, %v1449
          %v1451 = vrot.slane %v1443, %v1450
          %v1453 = vunpack.c.l.s4 1934713408
          %v1454 = vunpack.c.0.s8 %v1453
          %v1455 = vlaneseq
          %v1456 = vshrl.u32 %v1455, 7
          %v1457 = vsub.s32 %v1454, %v1456
          %v1458 = vrot.slane %v1444, %v1457
          %v1459 = vcombine.high %v1435, 0.0
          %v1460 = vcombine.high %v1442, 0.0
          %v1461 = vcombine.high %v1451, 0.0
          %v1462 = vcombine.high %v1458, 0.0
          %v1463 = vcombine.low %v1435, %v1442
          %v1465 = vunpack.c.l.s4 1983009808
          %v1466 = vunpack.c.0.s8 %v1465
          %v1467 = vlaneseq
          %v1468 = vshrl.u32 %v1467, 7
          %v1469 = vsub.s32 %v1466, %v1468
          %v1470 = vrot.slane %v1463, %v1469
          %v1471 = vcombine.low %v1459, %v1460
          %v1473 = vunpack.c.l.s4 1983009808
          %v1474 = vunpack.c.0.s8 %v1473
          %v1475 = vlaneseq
          %v1476 = vshrl.u32 %v1475, 7
          %v1477 = vsub.s32 %v1474, %v1476
          %v1478 = vrot.slane %v1471, %v1477
          %v1479 = vcombine.low %v1451, %v1458
          %v1481 = vunpack.c.l.s4 1983009808
          %v1482 = vunpack.c.0.s8 %v1481
          %v1483 = vlaneseq
          %v1484 = vshrl.u32 %v1483, 7
          %v1485 = vsub.s32 %v1482, %v1484
          %v1486 = vrot.slane %v1479, %v1485
          %v1487 = vcombine.low %v1461, %v1462
          %v1489 = vunpack.c.l.s4 1983009808
          %v1490 = vunpack.c.0.s8 %v1489
          %v1491 = vlaneseq
          %v1492 = vshrl.u32 %v1491, 7
          %v1493 = vsub.s32 %v1490, %v1492
          %v1494 = vrot.slane %v1487, %v1493
          %v1495 = vcombine.low %v1470, %v1478
          %v1496 = vcombine.high %v1470, %v1478
          %v1498 = vunpack.c.l.s4 1934713408
          %v1499 = vunpack.c.0.s8 %v1498
          %v1500 = vlaneseq
          %v1501 = vshrl.u32 %v1500, 7
          %v1502 = vsub.s32 %v1499, %v1501
          %v1503 = vrot.slane %v1495, %v1502
          %v1505 = vunpack.c.l.s4 1934713408
          %v1506 = vunpack.c.0.s8 %v1505
          %v1507 = vlaneseq
          %v1508 = vshrl.u32 %v1507, 7
          %v1509 = vsub.s32 %v1506, %v1508
          %v1510 = vrot.slane %v1496, %v1509
          %v1511 = vcombine.low %v1486, %v1494
          %v1512 = vcombine.high %v1486, %v1494
          %v1514 = vunpack.c.l.s4 1934713408
          %v1515 = vunpack.c.0.s8 %v1514
          %v1516 = vlaneseq
          %v1517 = vshrl.u32 %v1516, 7
          %v1518 = vsub.s32 %v1515, %v1517
          %v1519 = vrot.slane %v1511, %v1518
          %v1521 = vunpack.c.l.s4 1934713408
          %v1522 = vunpack.c.0.s8 %v1521
          %v1523 = vlaneseq
          %v1524 = vshrl.u32 %v1523, 7
          %v1525 = vsub.s32 %v1522, %v1524
          %v1526 = vrot.slane %v1512, %v1525
          %v1527 = vcombine.low %v1503, %v1519
          %v1528 = vcombine.high %v1503, %v1519
          %v1529 = vcombine.low %v1510, %v1526
          %v1530 = vcombine.high %v1510, %v1526
          %v1531 = vpack.c.bf16 %v1527, %v1527
          %v1532 = vpack.c.bf16 %v1528, %v1528
          %v1533 = vpack.c.bf16 %v1529, %v1529
          %v1534 = vpack.c.bf16 %v1530, %v1530
          %1535 = vst.msk [vmem:[#allocation4] sm:$0xf] %vm1226, %v1531
          %1536 = vst.msk [vmem:[#allocation4 + $0x4] sm:$0xf] %vm1226, %v1532
          %1537 = vst.msk [vmem:[#allocation4 + $0x8] sm:$0xf] %vm1226, %v1533
          %1538 = vst.msk [vmem:[#allocation4 + $0xc] sm:$0xf] %vm1226, %v1534
          %1540 = vrot.lane.b32.xlu0 %v1071, 120
          %v1541 = vpop.permute.xlu0 %1540
          %1543 = vrot.lane.b32.xlu0 %v1071, 112
          %v1544 = vpop.permute.xlu0 %1543
          %1546 = vrot.lane.b32.xlu0 %v1071, 104
          %v1547 = vpop.permute.xlu0 %1546
          %v1549 = vcombine.low %v1071, %v1544
          %v1550 = vcombine.high %v1071, %v1544
          %v1552 = vunpack.c.l.s4 1983009808
          %v1553 = vunpack.c.0.s8 %v1552
          %v1554 = vlaneseq
          %v1555 = vshrl.u32 %v1554, 7
          %v1556 = vsub.s32 %v1553, %v1555
          %v1557 = vrot.slane %v1549, %v1556
          %v1559 = vunpack.c.l.s4 1983009808
          %v1560 = vunpack.c.0.s8 %v1559
          %v1561 = vlaneseq
          %v1562 = vshrl.u32 %v1561, 7
          %v1563 = vsub.s32 %v1560, %v1562
          %v1564 = vrot.slane %v1550, %v1563
          %v1565 = vcombine.low %v1541, %v1547
          %v1566 = vcombine.high %v1541, %v1547
          %v1568 = vunpack.c.l.s4 1983009808
          %v1569 = vunpack.c.0.s8 %v1568
          %v1570 = vlaneseq
          %v1571 = vshrl.u32 %v1570, 7
          %v1572 = vsub.s32 %v1569, %v1571
          %v1573 = vrot.slane %v1565, %v1572
          %v1575 = vunpack.c.l.s4 1983009808
          %v1576 = vunpack.c.0.s8 %v1575
          %v1577 = vlaneseq
          %v1578 = vshrl.u32 %v1577, 7
          %v1579 = vsub.s32 %v1576, %v1578
          %v1580 = vrot.slane %v1566, %v1579
          %v1581 = vcombine.low %v1557, %v1573
          %v1582 = vcombine.high %v1557, %v1573
          %v1584 = vunpack.c.l.s4 1934713408
          %v1585 = vunpack.c.0.s8 %v1584
          %v1586 = vlaneseq
          %v1587 = vshrl.u32 %v1586, 7
          %v1588 = vsub.s32 %v1585, %v1587
          %v1589 = vrot.slane %v1581, %v1588
          %v1591 = vunpack.c.l.s4 1934713408
          %v1592 = vunpack.c.0.s8 %v1591
          %v1593 = vlaneseq
          %v1594 = vshrl.u32 %v1593, 7
          %v1595 = vsub.s32 %v1592, %v1594
          %v1596 = vrot.slane %v1582, %v1595
          %v1597 = vcombine.low %v1564, %v1580
          %v1598 = vcombine.high %v1564, %v1580
          %v1600 = vunpack.c.l.s4 1934713408
          %v1601 = vunpack.c.0.s8 %v1600
          %v1602 = vlaneseq
          %v1603 = vshrl.u32 %v1602, 7
          %v1604 = vsub.s32 %v1601, %v1603
          %v1605 = vrot.slane %v1597, %v1604
          %v1607 = vunpack.c.l.s4 1934713408
          %v1608 = vunpack.c.0.s8 %v1607
          %v1609 = vlaneseq
          %v1610 = vshrl.u32 %v1609, 7
          %v1611 = vsub.s32 %v1608, %v1610
          %v1612 = vrot.slane %v1598, %v1611
          %v1613 = vcombine.high %v1589, 0.0
          %v1614 = vcombine.high %v1596, 0.0
          %v1615 = vcombine.high %v1605, 0.0
          %v1616 = vcombine.high %v1612, 0.0
          %v1617 = vcombine.low %v1589, %v1596
          %v1619 = vunpack.c.l.s4 1983009808
          %v1620 = vunpack.c.0.s8 %v1619
          %v1621 = vlaneseq
          %v1622 = vshrl.u32 %v1621, 7
          %v1623 = vsub.s32 %v1620, %v1622
          %v1624 = vrot.slane %v1617, %v1623
          %v1625 = vcombine.low %v1613, %v1614
          %v1627 = vunpack.c.l.s4 1983009808
          %v1628 = vunpack.c.0.s8 %v1627
          %v1629 = vlaneseq
          %v1630 = vshrl.u32 %v1629, 7
          %v1631 = vsub.s32 %v1628, %v1630
          %v1632 = vrot.slane %v1625, %v1631
          %v1633 = vcombine.low %v1605, %v1612
          %v1635 = vunpack.c.l.s4 1983009808
          %v1636 = vunpack.c.0.s8 %v1635
          %v1637 = vlaneseq
          %v1638 = vshrl.u32 %v1637, 7
          %v1639 = vsub.s32 %v1636, %v1638
          %v1640 = vrot.slane %v1633, %v1639
          %v1641 = vcombine.low %v1615, %v1616
          %v1643 = vunpack.c.l.s4 1983009808
          %v1644 = vunpack.c.0.s8 %v1643
          %v1645 = vlaneseq
          %v1646 = vshrl.u32 %v1645, 7
          %v1647 = vsub.s32 %v1644, %v1646
          %v1648 = vrot.slane %v1641, %v1647
          %v1649 = vcombine.low %v1624, %v1632
          %v1650 = vcombine.high %v1624, %v1632
          %v1652 = vunpack.c.l.s4 1934713408
          %v1653 = vunpack.c.0.s8 %v1652
          %v1654 = vlaneseq
          %v1655 = vshrl.u32 %v1654, 7
          %v1656 = vsub.s32 %v1653, %v1655
          %v1657 = vrot.slane %v1649, %v1656
          %v1659 = vunpack.c.l.s4 1934713408
          %v1660 = vunpack.c.0.s8 %v1659
          %v1661 = vlaneseq
          %v1662 = vshrl.u32 %v1661, 7
          %v1663 = vsub.s32 %v1660, %v1662
          %v1664 = vrot.slane %v1650, %v1663
          %v1665 = vcombine.low %v1640, %v1648
          %v1666 = vcombine.high %v1640, %v1648
          %v1668 = vunpack.c.l.s4 1934713408
          %v1669 = vunpack.c.0.s8 %v1668
          %v1670 = vlaneseq
          %v1671 = vshrl.u32 %v1670, 7
          %v1672 = vsub.s32 %v1669, %v1671
          %v1673 = vrot.slane %v1665, %v1672
          %v1675 = vunpack.c.l.s4 1934713408
          %v1676 = vunpack.c.0.s8 %v1675
          %v1677 = vlaneseq
          %v1678 = vshrl.u32 %v1677, 7
          %v1679 = vsub.s32 %v1676, %v1678
          %v1680 = vrot.slane %v1666, %v1679
          %v1681 = vcombine.low %v1657, %v1673
          %v1682 = vcombine.high %v1657, %v1673
          %v1683 = vcombine.low %v1664, %v1680
          %v1684 = vcombine.high %v1664, %v1680
          %v1685 = vpack.c.bf16 %v1681, %v1681
          %v1686 = vpack.c.bf16 %v1682, %v1682
          %v1687 = vpack.c.bf16 %v1683, %v1683
          %v1688 = vpack.c.bf16 %v1684, %v1684
          %1689 = vst.msk [vmem:[#allocation5] sm:$0xf] %vm1226, %v1685
          %1690 = vst.msk [vmem:[#allocation5 + $0x4] sm:$0xf] %vm1226, %v1686
          %1691 = vst.msk [vmem:[#allocation5 + $0x8] sm:$0xf] %vm1226, %v1687
          %1692 = vst.msk [vmem:[#allocation5 + $0xc] sm:$0xf] %vm1226, %v1688
        $region148: #{tpu_custom_call.1} parent=107 // pred_fallthru
          _
        %s1693 = scalar_lea.vmem %s828, %s830
        %v1694 = vld [vmem:[%s1693] sm:$0xff]
        %v1695 = vld [vmem:[%s2] sm:$0xf]
        %v1696 = vld [vmem:[%s2 + $0x4] sm:$0xf]
        %v1697 = vld [vmem:[%s2 + $0x8] sm:$0xf]
        %v1698 = vld [vmem:[%s2 + $0xc] sm:$0xf]
        %v1699 = vpack.c.bf16 %v1694, %v1694
        %v1700 = vld [vmem:[%s3] sm:$0x1]
        %v1702 = vlaneseq
        %v1703 = vshrl.u32 %v1702, 7
        %v1704 = vsub.s32 0, %v1703
        %v1705 = vrot.slane %v1700, %v1704
        %v1711 = vunpack.c.l.b16 %v1695
        %v1712 = vunpack.c.l.b16 %v1696
        %v1713 = vunpack.c.l.b16 %v1697
        %v1714 = vunpack.c.l.b16 %v1698
        %v1715 = vpack.c.b16 %v1712, %v1711
        %v1716 = vpack.c.b16 %v1714, %v1713
        %vm1719 = vcmask 261120
        %v1721 = vsel %vm1719, %v1699, 0
        %1723 = vmatprep.subr.bf16.mxu0 0
        %1724 = vmatpush1.bf16.msra.mxu0 %v1715
        %1725 = vmatprep.subr.bf16.mxu0 0
        %1726 = vmatpush1.bf16.msra.mxu0 %v1716
        %1727 = vmatprep.subr.bf16.mxu0 0
        %1728 = vmatpush1.bf16.msra.mxu0 0
        %1729 = vmatprep.subr.bf16.mxu0 0
        %1730 = vmatpush1.bf16.msra.mxu0 0
        %1731 = vmatprep.subr.bf16.mxu0 0
        %1732 = vmatpush1.bf16.msra.mxu0 0
        %1733 = vmatprep.subr.bf16.mxu0 0
        %1734 = vmatpush1.bf16.msra.mxu0 0
        %1735 = vmatprep.subr.bf16.mxu0 0
        %1736 = vmatpush1.bf16.msra.mxu0 0
        %1737 = vmatprep.subr.bf16.mxu0 0
        %1738 = vmatpush1.bf16.msra.mxu0 0
        %1739 = vmatprep.subr.bf16.mxu0 0
        %1740 = vmatpush1.bf16.msra.mxu0 0
        %1741 = vmatprep.subr.bf16.mxu0 0
        %1742 = vmatpush1.bf16.msra.mxu0 0
        %1743 = vmatprep.subr.bf16.mxu0 0
        %1744 = vmatpush1.bf16.msra.mxu0 0
        %1745 = vmatprep.subr.bf16.mxu0 0
        %1746 = vmatpush1.bf16.msra.mxu0 0
        %1747 = vmatprep.subr.bf16.mxu0 0
        %1748 = vmatpush1.bf16.msra.mxu0 0
        %1749 = vmatprep.subr.bf16.mxu0 0
        %1750 = vmatpush1.bf16.msra.mxu0 0
        %1751 = vmatprep.subr.bf16.mxu0 0
        %1752 = vmatpush1.bf16.msra.mxu0 0
        %1753 = vmatprep.subr.bf16.mxu0 0
        %1754 = vmatpush1.bf16.msra.mxu0 0
        %1755 = vmatprep.mubr.bf16.mxu0 0
        %1756 = vmatmul.mubr.bf16.gmra.mrb[0].mxu0 %v1721
        %v1757 = vpop.f32.mrb[0].mxu0
        %v1758 = vadd.f32 %v1705, %v1757
        %v1759 = vpop.f32.mrb[0].mxu0
        %v1760 = vpop.f32.mrb[0].mxu0
        %v1761 = vpop.f32.mrb[0].mxu0
        %1762 = vdwg.mxu0
        %v1763 = vld [vmem:[#allocation2] sm:$0xf]
        %v1764 = vld [vmem:[#allocation2 + $0x4] sm:$0xf]
        %v1765 = vld [vmem:[#allocation2 + $0x8] sm:$0xf]
        %v1766 = vld [vmem:[#allocation2 + $0xc] sm:$0xf]
        %v1767 = vld [vmem:[#allocation3] sm:$0xf]
        %v1768 = vld [vmem:[#allocation3 + $0x4] sm:$0xf]
        %v1769 = vld [vmem:[#allocation3 + $0x8] sm:$0xf]
        %v1770 = vld [vmem:[#allocation3 + $0xc] sm:$0xf]
        %1772 = vrot.lane.b32.xlu0 %v1758, 120
        %v1773 = vpop.permute.xlu0 %1772
        %1775 = vrot.lane.b32.xlu0 %v1758, 112
        %v1776 = vpop.permute.xlu0 %1775
        %1778 = vrot.lane.b32.xlu0 %v1758, 104
        %v1779 = vpop.permute.xlu0 %1778
        %v1781 = vcombine.low %v1758, %v1776
        %v1782 = vcombine.high %v1758, %v1776
        %v1784 = vunpack.c.l.s4 1983009808
        %v1785 = vunpack.c.0.s8 %v1784
        %v1786 = vlaneseq
        %v1787 = vshrl.u32 %v1786, 7
        %v1788 = vsub.s32 %v1785, %v1787
        %v1789 = vrot.slane %v1781, %v1788
        %v1791 = vunpack.c.l.s4 1983009808
        %v1792 = vunpack.c.0.s8 %v1791
        %v1793 = vlaneseq
        %v1794 = vshrl.u32 %v1793, 7
        %v1795 = vsub.s32 %v1792, %v1794
        %v1796 = vrot.slane %v1782, %v1795
        %v1797 = vcombine.low %v1773, %v1779
        %v1798 = vcombine.high %v1773, %v1779
        %v1800 = vunpack.c.l.s4 1983009808
        %v1801 = vunpack.c.0.s8 %v1800
        %v1802 = vlaneseq
        %v1803 = vshrl.u32 %v1802, 7
        %v1804 = vsub.s32 %v1801, %v1803
        %v1805 = vrot.slane %v1797, %v1804
        %v1807 = vunpack.c.l.s4 1983009808
        %v1808 = vunpack.c.0.s8 %v1807
        %v1809 = vlaneseq
        %v1810 = vshrl.u32 %v1809, 7
        %v1811 = vsub.s32 %v1808, %v1810
        %v1812 = vrot.slane %v1798, %v1811
        %v1813 = vcombine.low %v1789, %v1805
        %v1814 = vcombine.high %v1789, %v1805
        %v1816 = vunpack.c.l.s4 1934713408
        %v1817 = vunpack.c.0.s8 %v1816
        %v1818 = vlaneseq
        %v1819 = vshrl.u32 %v1818, 7
        %v1820 = vsub.s32 %v1817, %v1819
        %v1821 = vrot.slane %v1813, %v1820
        %v1823 = vunpack.c.l.s4 1934713408
        %v1824 = vunpack.c.0.s8 %v1823
        %v1825 = vlaneseq
        %v1826 = vshrl.u32 %v1825, 7
        %v1827 = vsub.s32 %v1824, %v1826
        %v1828 = vrot.slane %v1814, %v1827
        %v1829 = vcombine.low %v1796, %v1812
        %v1830 = vcombine.high %v1796, %v1812
        %v1832 = vunpack.c.l.s4 1934713408
        %v1833 = vunpack.c.0.s8 %v1832
        %v1834 = vlaneseq
        %v1835 = vshrl.u32 %v1834, 7
        %v1836 = vsub.s32 %v1833, %v1835
        %v1837 = vrot.slane %v1829, %v1836
        %v1839 = vunpack.c.l.s4 1934713408
        %v1840 = vunpack.c.0.s8 %v1839
        %v1841 = vlaneseq
        %v1842 = vshrl.u32 %v1841, 7
        %v1843 = vsub.s32 %v1840, %v1842
        %v1844 = vrot.slane %v1830, %v1843
        %v1845 = vcombine.high %v1821, 0.0
        %v1846 = vcombine.high %v1828, 0.0
        %v1847 = vcombine.high %v1837, 0.0
        %v1848 = vcombine.high %v1844, 0.0
        %v1849 = vcombine.low %v1821, %v1828
        %v1851 = vunpack.c.l.s4 1983009808
        %v1852 = vunpack.c.0.s8 %v1851
        %v1853 = vlaneseq
        %v1854 = vshrl.u32 %v1853, 7
        %v1855 = vsub.s32 %v1852, %v1854
        %v1856 = vrot.slane %v1849, %v1855
        %v1857 = vcombine.low %v1845, %v1846
        %v1859 = vunpack.c.l.s4 1983009808
        %v1860 = vunpack.c.0.s8 %v1859
        %v1861 = vlaneseq
        %v1862 = vshrl.u32 %v1861, 7
        %v1863 = vsub.s32 %v1860, %v1862
        %v1864 = vrot.slane %v1857, %v1863
        %v1865 = vcombine.low %v1837, %v1844
        %v1867 = vunpack.c.l.s4 1983009808
        %v1868 = vunpack.c.0.s8 %v1867
        %v1869 = vlaneseq
        %v1870 = vshrl.u32 %v1869, 7
        %v1871 = vsub.s32 %v1868, %v1870
        %v1872 = vrot.slane %v1865, %v1871
        %v1873 = vcombine.low %v1847, %v1848
        %v1875 = vunpack.c.l.s4 1983009808
        %v1876 = vunpack.c.0.s8 %v1875
        %v1877 = vlaneseq
        %v1878 = vshrl.u32 %v1877, 7
        %v1879 = vsub.s32 %v1876, %v1878
        %v1880 = vrot.slane %v1873, %v1879
        %v1881 = vcombine.low %v1856, %v1864
        %v1882 = vcombine.high %v1856, %v1864
        %v1884 = vunpack.c.l.s4 1934713408
        %v1885 = vunpack.c.0.s8 %v1884
        %v1886 = vlaneseq
        %v1887 = vshrl.u32 %v1886, 7
        %v1888 = vsub.s32 %v1885, %v1887
        %v1889 = vrot.slane %v1881, %v1888
        %v1891 = vunpack.c.l.s4 1934713408
        %v1892 = vunpack.c.0.s8 %v1891
        %v1893 = vlaneseq
        %v1894 = vshrl.u32 %v1893, 7
        %v1895 = vsub.s32 %v1892, %v1894
        %v1896 = vrot.slane %v1882, %v1895
        %v1897 = vcombine.low %v1872, %v1880
        %v1898 = vcombine.high %v1872, %v1880
        %v1900 = vunpack.c.l.s4 1934713408
        %v1901 = vunpack.c.0.s8 %v1900
        %v1902 = vlaneseq
        %v1903 = vshrl.u32 %v1902, 7
        %v1904 = vsub.s32 %v1901, %v1903
        %v1905 = vrot.slane %v1897, %v1904
        %v1907 = vunpack.c.l.s4 1934713408
        %v1908 = vunpack.c.0.s8 %v1907
        %v1909 = vlaneseq
        %v1910 = vshrl.u32 %v1909, 7
        %v1911 = vsub.s32 %v1908, %v1910
        %v1912 = vrot.slane %v1898, %v1911
        %v1913 = vcombine.low %v1889, %v1905
        %v1914 = vcombine.high %v1889, %v1905
        %v1915 = vcombine.low %v1896, %v1912
        %v1916 = vcombine.high %v1896, %v1912
        %v1917 = vpack.c.bf16 %v1913, %v1913
        %v1918 = vpack.c.bf16 %v1914, %v1914
        %v1919 = vpack.c.bf16 %v1915, %v1915
        %v1920 = vpack.c.bf16 %v1916, %v1916
        %vm1921 = vcmask 64512
        %v1923 = vsel %vm1921, %v1917, 0
        %v1926 = vsel %vm1921, %v1763, 0
        %1928 = vmatprep.subr.bf16.mxu0 0
        %1929 = vmatpush1.bf16.xpose.msra.mxu0 %v1926
        %1930 = vmatprep.subr.bf16.mxu0 0
        %1931 = vmatpush1.bf16.xpose.msra.mxu0 0
        %1932 = vmatprep.subr.bf16.mxu0 0
        %1933 = vmatpush1.bf16.xpose.msra.mxu0 0
        %1934 = vmatprep.subr.bf16.mxu0 0
        %1935 = vmatpush1.bf16.xpose.msra.mxu0 0
        %1936 = vmatprep.subr.bf16.mxu0 0
        %1937 = vmatpush1.bf16.xpose.msra.mxu0 0
        %1938 = vmatprep.subr.bf16.mxu0 0
        %1939 = vmatpush1.bf16.xpose.msra.mxu0 0
        %1940 = vmatprep.subr.bf16.mxu0 0
        %1941 = vmatpush1.bf16.xpose.msra.mxu0 0
        %1942 = vmatprep.subr.bf16.mxu0 0
        %1943 = vmatpush1.bf16.xpose.msra.mxu0 0
        %1944 = vmatprep.subr.bf16.mxu0 0
        %1945 = vmatpush1.bf16.xpose.msra.mxu0 0
        %1946 = vmatprep.subr.bf16.mxu0 0
        %1947 = vmatpush1.bf16.xpose.msra.mxu0 0
        %1948 = vmatprep.subr.bf16.mxu0 0
        %1949 = vmatpush1.bf16.xpose.msra.mxu0 0
        %1950 = vmatprep.subr.bf16.mxu0 0
        %1951 = vmatpush1.bf16.xpose.msra.mxu0 0
        %1952 = vmatprep.subr.bf16.mxu0 0
        %1953 = vmatpush1.bf16.xpose.msra.mxu0 0
        %1954 = vmatprep.subr.bf16.mxu0 0
        %1955 = vmatpush1.bf16.xpose.msra.mxu0 0
        %1956 = vmatprep.subr.bf16.mxu0 0
        %1957 = vmatpush1.bf16.xpose.msra.mxu0 0
        %1958 = vmatprep.subr.bf16.mxu0 0
        %1959 = vmatpush1.bf16.xpose.msra.mxu0 0
        %1960 = vmatprep.mubr.bf16.mxu0 0
        %1961 = vmatmul.mubr.bf16.gmra.mrb[0].mxu0 %v1923
        %v1962 = vpop.f32.mrb[0].mxu0
        %v1963 = vadd.f32 0.0, %v1962
        %v1964 = vpop.f32.mrb[0].mxu0
        %v1965 = vpop.f32.mrb[0].mxu0
        %v1966 = vpop.f32.mrb[0].mxu0
        %1967 = vdwg.mxu0
        %v1969 = vsel %vm1921, %v1918, 0
        %v1972 = vsel %vm1921, %v1764, 0
        %1974 = vmatprep.subr.bf16.mxu0 0
        %1975 = vmatpush1.bf16.xpose.msra.mxu0 %v1972
        %1976 = vmatprep.subr.bf16.mxu0 0
        %1977 = vmatpush1.bf16.xpose.msra.mxu0 0
        %1978 = vmatprep.subr.bf16.mxu0 0
        %1979 = vmatpush1.bf16.xpose.msra.mxu0 0
        %1980 = vmatprep.subr.bf16.mxu0 0
        %1981 = vmatpush1.bf16.xpose.msra.mxu0 0
        %1982 = vmatprep.subr.bf16.mxu0 0
        %1983 = vmatpush1.bf16.xpose.msra.mxu0 0
        %1984 = vmatprep.subr.bf16.mxu0 0
        %1985 = vmatpush1.bf16.xpose.msra.mxu0 0
        %1986 = vmatprep.subr.bf16.mxu0 0
        %1987 = vmatpush1.bf16.xpose.msra.mxu0 0
        %1988 = vmatprep.subr.bf16.mxu0 0
        %1989 = vmatpush1.bf16.xpose.msra.mxu0 0
        %1990 = vmatprep.subr.bf16.mxu0 0
        %1991 = vmatpush1.bf16.xpose.msra.mxu0 0
        %1992 = vmatprep.subr.bf16.mxu0 0
        %1993 = vmatpush1.bf16.xpose.msra.mxu0 0
        %1994 = vmatprep.subr.bf16.mxu0 0
        %1995 = vmatpush1.bf16.xpose.msra.mxu0 0
        %1996 = vmatprep.subr.bf16.mxu0 0
        %1997 = vmatpush1.bf16.xpose.msra.mxu0 0
        %1998 = vmatprep.subr.bf16.mxu0 0
        %1999 = vmatpush1.bf16.xpose.msra.mxu0 0
        %2000 = vmatprep.subr.bf16.mxu0 0
        %2001 = vmatpush1.bf16.xpose.msra.mxu0 0
        %2002 = vmatprep.subr.bf16.mxu0 0
        %2003 = vmatpush1.bf16.xpose.msra.mxu0 0
        %2004 = vmatprep.subr.bf16.mxu0 0
        %2005 = vmatpush1.bf16.xpose.msra.mxu0 0
        %2006 = vmatprep.mubr.bf16.mxu0 0
        %2007 = vmatmul.mubr.bf16.gmra.mrb[0].mxu0 %v1969
        %v2008 = vpop.f32.mrb[0].mxu0
        %v2009 = vadd.f32 0.0, %v2008
        %v2010 = vpop.f32.mrb[0].mxu0
        %v2011 = vpop.f32.mrb[0].mxu0
        %v2012 = vpop.f32.mrb[0].mxu0
        %2013 = vdwg.mxu0
        %v2015 = vsel %vm1921, %v1919, 0
        %v2018 = vsel %vm1921, %v1765, 0
        %2020 = vmatprep.subr.bf16.mxu0 0
        %2021 = vmatpush1.bf16.xpose.msra.mxu0 %v2018
        %2022 = vmatprep.subr.bf16.mxu0 0
        %2023 = vmatpush1.bf16.xpose.msra.mxu0 0
        %2024 = vmatprep.subr.bf16.mxu0 0
        %2025 = vmatpush1.bf16.xpose.msra.mxu0 0
        %2026 = vmatprep.subr.bf16.mxu0 0
        %2027 = vmatpush1.bf16.xpose.msra.mxu0 0
        %2028 = vmatprep.subr.bf16.mxu0 0
        %2029 = vmatpush1.bf16.xpose.msra.mxu0 0
        %2030 = vmatprep.subr.bf16.mxu0 0
        %2031 = vmatpush1.bf16.xpose.msra.mxu0 0
        %2032 = vmatprep.subr.bf16.mxu0 0
        %2033 = vmatpush1.bf16.xpose.msra.mxu0 0
        %2034 = vmatprep.subr.bf16.mxu0 0
        %2035 = vmatpush1.bf16.xpose.msra.mxu0 0
        %2036 = vmatprep.subr.bf16.mxu0 0
        %2037 = vmatpush1.bf16.xpose.msra.mxu0 0
        %2038 = vmatprep.subr.bf16.mxu0 0
        %2039 = vmatpush1.bf16.xpose.msra.mxu0 0
        %2040 = vmatprep.subr.bf16.mxu0 0
        %2041 = vmatpush1.bf16.xpose.msra.mxu0 0
        %2042 = vmatprep.subr.bf16.mxu0 0
        %2043 = vmatpush1.bf16.xpose.msra.mxu0 0
        %2044 = vmatprep.subr.bf16.mxu0 0
        %2045 = vmatpush1.bf16.xpose.msra.mxu0 0
        %2046 = vmatprep.subr.bf16.mxu0 0
        %2047 = vmatpush1.bf16.xpose.msra.mxu0 0
        %2048 = vmatprep.subr.bf16.mxu0 0
        %2049 = vmatpush1.bf16.xpose.msra.mxu0 0
        %2050 = vmatprep.subr.bf16.mxu0 0
        %2051 = vmatpush1.bf16.xpose.msra.mxu0 0
        %2052 = vmatprep.mubr.bf16.mxu0 0
        %2053 = vmatmul.mubr.bf16.gmra.mrb[0].mxu0 %v2015
        %v2054 = vpop.f32.mrb[0].mxu0
        %v2055 = vadd.f32 0.0, %v2054
        %v2056 = vpop.f32.mrb[0].mxu0
        %v2057 = vpop.f32.mrb[0].mxu0
        %v2058 = vpop.f32.mrb[0].mxu0
        %2059 = vdwg.mxu0
        %v2061 = vsel %vm1921, %v1920, 0
        %v2064 = vsel %vm1921, %v1766, 0
        %2066 = vmatprep.subr.bf16.mxu0 0
        %2067 = vmatpush1.bf16.xpose.msra.mxu0 %v2064
        %2068 = vmatprep.subr.bf16.mxu0 0
        %2069 = vmatpush1.bf16.xpose.msra.mxu0 0
        %2070 = vmatprep.subr.bf16.mxu0 0
        %2071 = vmatpush1.bf16.xpose.msra.mxu0 0
        %2072 = vmatprep.subr.bf16.mxu0 0
        %2073 = vmatpush1.bf16.xpose.msra.mxu0 0
        %2074 = vmatprep.subr.bf16.mxu0 0
        %2075 = vmatpush1.bf16.xpose.msra.mxu0 0
        %2076 = vmatprep.subr.bf16.mxu0 0
        %2077 = vmatpush1.bf16.xpose.msra.mxu0 0
        %2078 = vmatprep.subr.bf16.mxu0 0
        %2079 = vmatpush1.bf16.xpose.msra.mxu0 0
        %2080 = vmatprep.subr.bf16.mxu0 0
        %2081 = vmatpush1.bf16.xpose.msra.mxu0 0
        %2082 = vmatprep.subr.bf16.mxu0 0
        %2083 = vmatpush1.bf16.xpose.msra.mxu0 0
        %2084 = vmatprep.subr.bf16.mxu0 0
        %2085 = vmatpush1.bf16.xpose.msra.mxu0 0
        %2086 = vmatprep.subr.bf16.mxu0 0
        %2087 = vmatpush1.bf16.xpose.msra.mxu0 0
        %2088 = vmatprep.subr.bf16.mxu0 0
        %2089 = vmatpush1.bf16.xpose.msra.mxu0 0
        %2090 = vmatprep.subr.bf16.mxu0 0
        %2091 = vmatpush1.bf16.xpose.msra.mxu0 0
        %2092 = vmatprep.subr.bf16.mxu0 0
        %2093 = vmatpush1.bf16.xpose.msra.mxu0 0
        %2094 = vmatprep.subr.bf16.mxu0 0
        %2095 = vmatpush1.bf16.xpose.msra.mxu0 0
        %2096 = vmatprep.subr.bf16.mxu0 0
        %2097 = vmatpush1.bf16.xpose.msra.mxu0 0
        %2098 = vmatprep.mubr.bf16.mxu0 0
        %2099 = vmatmul.mubr.bf16.gmra.mrb[0].mxu0 %v2061
        %v2100 = vpop.f32.mrb[0].mxu0
        %v2101 = vadd.f32 0.0, %v2100
        %v2102 = vpop.f32.mrb[0].mxu0
        %v2103 = vpop.f32.mrb[0].mxu0
        %v2104 = vpop.f32.mrb[0].mxu0
        %2105 = vdwg.mxu0
        %v2106 = vmul.f32 %v1963, 0.35355338
        %v2107 = vmul.f32 %v2009, 0.35355338
        %v2108 = vmul.f32 %v2055, 0.35355338
        %v2109 = vmul.f32 %v2101, 0.35355338
        %v2110 = vlaneseq
        %v2111 = vshrl.u32 %v2110, 7
        %v2112 = vstv %s830
        %v2113 = vadd.s32 %v2112, %v2111
        %v2114 = vlaneseq
        %v2115 = vand.u32 %v2114, 127
        %vm2116 = vcmp.gt.s32.totalorder %v2115, %v2113
        %v2117 = vsel %vm2116, -1e+09, 0.0
        %v2118 = vadd.f32 %v2106, %v2117
        %v2119 = vadd.f32 %v2107, %v2117
        %v2120 = vadd.f32 %v2108, %v2117
        %v2121 = vadd.f32 %v2109, %v2117
        %v2122 = vsel %vm1921, %v2118, -inf
        %2123 = vmax.xlane.f32.xlu0 %v2122
        %v2124 = vpop.xlane.xlu0 %2123
        %v2125 = vsel %vm1921, %v2119, -inf
        %2126 = vmax.xlane.f32.xlu0 %v2125
        %v2127 = vpop.xlane.xlu0 %2126
        %v2128 = vsel %vm1921, %v2120, -inf
        %2129 = vmax.xlane.f32.xlu0 %v2128
        %v2130 = vpop.xlane.xlu0 %2129
        %v2131 = vsel %vm1921, %v2121, -inf
        %2132 = vmax.xlane.f32.xlu0 %v2131
        %v2133 = vpop.xlane.xlu0 %2132
        %v2134 = vsub.f32 %v2118, %v2124
        %v2135 = vsub.f32 %v2119, %v2127
        %v2136 = vsub.f32 %v2120, %v2130
        %v2137 = vsub.f32 %v2121, %v2133
        %v2138 = vmul.f32 %v2134, 1.442695
        %v2139 = vpow.pop %v2138
        %v2140 = vmul.f32 %v2135, 1.442695
        %v2141 = vpow.pop %v2140
        %v2142 = vmul.f32 %v2136, 1.442695
        %v2143 = vpow.pop %v2142
        %v2144 = vmul.f32 %v2137, 1.442695
        %v2145 = vpow.pop %v2144
        %v2146 = vsel %vm1921, %v2139, 0.0
        %2147 = vadd.xlane.f32.xlu0 %v2146
        %v2148 = vpop.xlane.xlu0 %2147
        %v2149 = vsel %vm1921, %v2141, 0.0
        %2150 = vadd.xlane.f32.xlu0 %v2149
        %v2151 = vpop.xlane.xlu0 %2150
        %v2152 = vsel %vm1921, %v2143, 0.0
        %2153 = vadd.xlane.f32.xlu0 %v2152
        %v2154 = vpop.xlane.xlu0 %2153
        %v2155 = vsel %vm1921, %v2145, 0.0
        %2156 = vadd.xlane.f32.xlu0 %v2155
        %v2157 = vpop.xlane.xlu0 %2156
        %v2158 = vrcp.pop %v2148
        %v2159 = vrcp.pop %v2151
        %v2160 = vrcp.pop %v2154
        %v2161 = vrcp.pop %v2157
        %v2162 = vmul.f32 %v2139, %v2158
        %v2163 = vmul.f32 %v2141, %v2159
        %v2164 = vmul.f32 %v2143, %v2160
        %v2165 = vmul.f32 %v2145, %v2161
        %v2166 = vpack.c.bf16 %v2162, %v2162
        %v2167 = vpack.c.bf16 %v2163, %v2163
        %v2168 = vpack.c.bf16 %v2164, %v2164
        %v2169 = vpack.c.bf16 %v2165, %v2165
        %v2171 = vsel %vm1921, %v2166, 0
        %vm2173 = vcmask 1043456
        %v2175 = vsel %vm2173, %v1767, 0
        %2177 = vmatprep.subr.bf16.mxu0 0
        %2178 = vmatpush1.bf16.msra.mxu0 %v2175
        %2179 = vmatprep.subr.bf16.mxu0 0
        %2180 = vmatpush1.bf16.msra.mxu0 0
        %2181 = vmatprep.subr.bf16.mxu0 0
        %2182 = vmatpush1.bf16.msra.mxu0 0
        %2183 = vmatprep.subr.bf16.mxu0 0
        %2184 = vmatpush1.bf16.msra.mxu0 0
        %2185 = vmatprep.subr.bf16.mxu0 0
        %2186 = vmatpush1.bf16.msra.mxu0 0
        %2187 = vmatprep.subr.bf16.mxu0 0
        %2188 = vmatpush1.bf16.msra.mxu0 0
        %2189 = vmatprep.subr.bf16.mxu0 0
        %2190 = vmatpush1.bf16.msra.mxu0 0
        %2191 = vmatprep.subr.bf16.mxu0 0
        %2192 = vmatpush1.bf16.msra.mxu0 0
        %2193 = vmatprep.subr.bf16.mxu0 0
        %2194 = vmatpush1.bf16.msra.mxu0 0
        %2195 = vmatprep.subr.bf16.mxu0 0
        %2196 = vmatpush1.bf16.msra.mxu0 0
        %2197 = vmatprep.subr.bf16.mxu0 0
        %2198 = vmatpush1.bf16.msra.mxu0 0
        %2199 = vmatprep.subr.bf16.mxu0 0
        %2200 = vmatpush1.bf16.msra.mxu0 0
        %2201 = vmatprep.subr.bf16.mxu0 0
        %2202 = vmatpush1.bf16.msra.mxu0 0
        %2203 = vmatprep.subr.bf16.mxu0 0
        %2204 = vmatpush1.bf16.msra.mxu0 0
        %2205 = vmatprep.subr.bf16.mxu0 0
        %2206 = vmatpush1.bf16.msra.mxu0 0
        %2207 = vmatprep.subr.bf16.mxu0 0
        %2208 = vmatpush1.bf16.msra.mxu0 0
        %2209 = vmatprep.mubr.bf16.mxu0 0
        %2210 = vmatmul.mubr.bf16.gmra.mrb[0].mxu0 %v2171
        %v2211 = vpop.f32.mrb[0].mxu0
        %v2212 = vadd.f32 0.0, %v2211
        %v2213 = vpop.f32.mrb[0].mxu0
        %v2214 = vpop.f32.mrb[0].mxu0
        %v2215 = vpop.f32.mrb[0].mxu0
        %2216 = vdwg.mxu0
        %v2218 = vsel %vm1921, %v2167, 0
        %v2221 = vsel %vm2173, %v1768, 0
        %2223 = vmatprep.subr.bf16.mxu0 0
        %2224 = vmatpush1.bf16.msra.mxu0 %v2221
        %2225 = vmatprep.subr.bf16.mxu0 0
        %2226 = vmatpush1.bf16.msra.mxu0 0
        %2227 = vmatprep.subr.bf16.mxu0 0
        %2228 = vmatpush1.bf16.msra.mxu0 0
        %2229 = vmatprep.subr.bf16.mxu0 0
        %2230 = vmatpush1.bf16.msra.mxu0 0
        %2231 = vmatprep.subr.bf16.mxu0 0
        %2232 = vmatpush1.bf16.msra.mxu0 0
        %2233 = vmatprep.subr.bf16.mxu0 0
        %2234 = vmatpush1.bf16.msra.mxu0 0
        %2235 = vmatprep.subr.bf16.mxu0 0
        %2236 = vmatpush1.bf16.msra.mxu0 0
        %2237 = vmatprep.subr.bf16.mxu0 0
        %2238 = vmatpush1.bf16.msra.mxu0 0
        %2239 = vmatprep.subr.bf16.mxu0 0
        %2240 = vmatpush1.bf16.msra.mxu0 0
        %2241 = vmatprep.subr.bf16.mxu0 0
        %2242 = vmatpush1.bf16.msra.mxu0 0
        %2243 = vmatprep.subr.bf16.mxu0 0
        %2244 = vmatpush1.bf16.msra.mxu0 0
        %2245 = vmatprep.subr.bf16.mxu0 0
        %2246 = vmatpush1.bf16.msra.mxu0 0
        %2247 = vmatprep.subr.bf16.mxu0 0
        %2248 = vmatpush1.bf16.msra.mxu0 0
        %2249 = vmatprep.subr.bf16.mxu0 0
        %2250 = vmatpush1.bf16.msra.mxu0 0
        %2251 = vmatprep.subr.bf16.mxu0 0
        %2252 = vmatpush1.bf16.msra.mxu0 0
        %2253 = vmatprep.subr.bf16.mxu0 0
        %2254 = vmatpush1.bf16.msra.mxu0 0
        %2255 = vmatprep.mubr.bf16.mxu0 0
        %2256 = vmatmul.mubr.bf16.gmra.mrb[0].mxu0 %v2218
        %v2257 = vpop.f32.mrb[0].mxu0
        %v2258 = vadd.f32 0.0, %v2257
        %v2259 = vpop.f32.mrb[0].mxu0
        %v2260 = vpop.f32.mrb[0].mxu0
        %v2261 = vpop.f32.mrb[0].mxu0
        %2262 = vdwg.mxu0
        %v2264 = vsel %vm1921, %v2168, 0
        %v2267 = vsel %vm2173, %v1769, 0
        %2269 = vmatprep.subr.bf16.mxu0 0
        %2270 = vmatpush1.bf16.msra.mxu0 %v2267
        %2271 = vmatprep.subr.bf16.mxu0 0
        %2272 = vmatpush1.bf16.msra.mxu0 0
        %2273 = vmatprep.subr.bf16.mxu0 0
        %2274 = vmatpush1.bf16.msra.mxu0 0
        %2275 = vmatprep.subr.bf16.mxu0 0
        %2276 = vmatpush1.bf16.msra.mxu0 0
        %2277 = vmatprep.subr.bf16.mxu0 0
        %2278 = vmatpush1.bf16.msra.mxu0 0
        %2279 = vmatprep.subr.bf16.mxu0 0
        %2280 = vmatpush1.bf16.msra.mxu0 0
        %2281 = vmatprep.subr.bf16.mxu0 0
        %2282 = vmatpush1.bf16.msra.mxu0 0
        %2283 = vmatprep.subr.bf16.mxu0 0
        %2284 = vmatpush1.bf16.msra.mxu0 0
        %2285 = vmatprep.subr.bf16.mxu0 0
        %2286 = vmatpush1.bf16.msra.mxu0 0
        %2287 = vmatprep.subr.bf16.mxu0 0
        %2288 = vmatpush1.bf16.msra.mxu0 0
        %2289 = vmatprep.subr.bf16.mxu0 0
        %2290 = vmatpush1.bf16.msra.mxu0 0
        %2291 = vmatprep.subr.bf16.mxu0 0
        %2292 = vmatpush1.bf16.msra.mxu0 0
        %2293 = vmatprep.subr.bf16.mxu0 0
        %2294 = vmatpush1.bf16.msra.mxu0 0
        %2295 = vmatprep.subr.bf16.mxu0 0
        %2296 = vmatpush1.bf16.msra.mxu0 0
        %2297 = vmatprep.subr.bf16.mxu0 0
        %2298 = vmatpush1.bf16.msra.mxu0 0
        %2299 = vmatprep.subr.bf16.mxu0 0
        %2300 = vmatpush1.bf16.msra.mxu0 0
        %2301 = vmatprep.mubr.bf16.mxu0 0
        %2302 = vmatmul.mubr.bf16.gmra.mrb[0].mxu0 %v2264
        %v2303 = vpop.f32.mrb[0].mxu0
        %v2304 = vadd.f32 0.0, %v2303
        %v2305 = vpop.f32.mrb[0].mxu0
        %v2306 = vpop.f32.mrb[0].mxu0
        %v2307 = vpop.f32.mrb[0].mxu0
        %2308 = vdwg.mxu0
        %v2310 = vsel %vm1921, %v2169, 0
        %v2313 = vsel %vm2173, %v1770, 0
        %2315 = vmatprep.subr.bf16.mxu0 0
        %2316 = vmatpush1.bf16.msra.mxu0 %v2313
        %2317 = vmatprep.subr.bf16.mxu0 0
        %2318 = vmatpush1.bf16.msra.mxu0 0
        %2319 = vmatprep.subr.bf16.mxu0 0
        %2320 = vmatpush1.bf16.msra.mxu0 0
        %2321 = vmatprep.subr.bf16.mxu0 0
        %2322 = vmatpush1.bf16.msra.mxu0 0
        %2323 = vmatprep.subr.bf16.mxu0 0
        %2324 = vmatpush1.bf16.msra.mxu0 0
        %2325 = vmatprep.subr.bf16.mxu0 0
        %2326 = vmatpush1.bf16.msra.mxu0 0
        %2327 = vmatprep.subr.bf16.mxu0 0
        %2328 = vmatpush1.bf16.msra.mxu0 0
        %2329 = vmatprep.subr.bf16.mxu0 0
        %2330 = vmatpush1.bf16.msra.mxu0 0
        %2331 = vmatprep.subr.bf16.mxu0 0
        %2332 = vmatpush1.bf16.msra.mxu0 0
        %2333 = vmatprep.subr.bf16.mxu0 0
        %2334 = vmatpush1.bf16.msra.mxu0 0
        %2335 = vmatprep.subr.bf16.mxu0 0
        %2336 = vmatpush1.bf16.msra.mxu0 0
        %2337 = vmatprep.subr.bf16.mxu0 0
        %2338 = vmatpush1.bf16.msra.mxu0 0
        %2339 = vmatprep.subr.bf16.mxu0 0
        %2340 = vmatpush1.bf16.msra.mxu0 0
        %2341 = vmatprep.subr.bf16.mxu0 0
        %2342 = vmatpush1.bf16.msra.mxu0 0
        %2343 = vmatprep.subr.bf16.mxu0 0
        %2344 = vmatpush1.bf16.msra.mxu0 0
        %2345 = vmatprep.subr.bf16.mxu0 0
        %2346 = vmatpush1.bf16.msra.mxu0 0
        %2347 = vmatprep.mubr.bf16.mxu0 0
        %2348 = vmatmul.mubr.bf16.gmra.mrb[0].mxu0 %v2310
        %v2349 = vpop.f32.mrb[0].mxu0
        %v2350 = vadd.f32 0.0, %v2349
        %v2351 = vpop.f32.mrb[0].mxu0
        %v2352 = vpop.f32.mrb[0].mxu0
        %v2353 = vpop.f32.mrb[0].mxu0
        %2354 = vdwg.mxu0
        %v2355 = vcombine.low %v2212, %v2304
        %v2356 = vcombine.high %v2212, %v2304
        %v2358 = vunpack.c.l.s4 1983009808
        %v2359 = vunpack.c.0.s8 %v2358
        %v2360 = vlaneseq
        %v2361 = vshrl.u32 %v2360, 7
        %v2362 = vsub.s32 %v2359, %v2361
        %v2363 = vrot.slane %v2355, %v2362
        %v2365 = vunpack.c.l.s4 1983009808
        %v2366 = vunpack.c.0.s8 %v2365
        %v2367 = vlaneseq
        %v2368 = vshrl.u32 %v2367, 7
        %v2369 = vsub.s32 %v2366, %v2368
        %v2370 = vrot.slane %v2356, %v2369
        %v2371 = vcombine.low %v2258, %v2350
        %v2372 = vcombine.high %v2258, %v2350
        %v2374 = vunpack.c.l.s4 1983009808
        %v2375 = vunpack.c.0.s8 %v2374
        %v2376 = vlaneseq
        %v2377 = vshrl.u32 %v2376, 7
        %v2378 = vsub.s32 %v2375, %v2377
        %v2379 = vrot.slane %v2371, %v2378
        %v2381 = vunpack.c.l.s4 1983009808
        %v2382 = vunpack.c.0.s8 %v2381
        %v2383 = vlaneseq
        %v2384 = vshrl.u32 %v2383, 7
        %v2385 = vsub.s32 %v2382, %v2384
        %v2386 = vrot.slane %v2372, %v2385
        %v2387 = vcombine.low %v2363, %v2379
        %v2388 = vcombine.high %v2363, %v2379
        %v2390 = vunpack.c.l.s4 1934713408
        %v2391 = vunpack.c.0.s8 %v2390
        %v2392 = vlaneseq
        %v2393 = vshrl.u32 %v2392, 7
        %v2394 = vsub.s32 %v2391, %v2393
        %v2395 = vrot.slane %v2387, %v2394
        %v2397 = vunpack.c.l.s4 1934713408
        %v2398 = vunpack.c.0.s8 %v2397
        %v2399 = vlaneseq
        %v2400 = vshrl.u32 %v2399, 7
        %v2401 = vsub.s32 %v2398, %v2400
        %v2402 = vrot.slane %v2388, %v2401
        %v2403 = vcombine.low %v2370, %v2386
        %v2404 = vcombine.high %v2370, %v2386
        %v2406 = vunpack.c.l.s4 1934713408
        %v2407 = vunpack.c.0.s8 %v2406
        %v2408 = vlaneseq
        %v2409 = vshrl.u32 %v2408, 7
        %v2410 = vsub.s32 %v2407, %v2409
        %v2411 = vrot.slane %v2403, %v2410
        %v2413 = vunpack.c.l.s4 1934713408
        %v2414 = vunpack.c.0.s8 %v2413
        %v2415 = vlaneseq
        %v2416 = vshrl.u32 %v2415, 7
        %v2417 = vsub.s32 %v2414, %v2416
        %v2418 = vrot.slane %v2404, %v2417
        %v2419 = vcombine.high %v2395, 0.0
        %v2420 = vcombine.high %v2402, 0.0
        %v2421 = vcombine.high %v2411, 0.0
        %v2422 = vcombine.high %v2418, 0.0
        %v2423 = vcombine.low %v2395, %v2402
        %v2425 = vunpack.c.l.s4 1983009808
        %v2426 = vunpack.c.0.s8 %v2425
        %v2427 = vlaneseq
        %v2428 = vshrl.u32 %v2427, 7
        %v2429 = vsub.s32 %v2426, %v2428
        %v2430 = vrot.slane %v2423, %v2429
        %v2431 = vcombine.low %v2419, %v2420
        %v2433 = vunpack.c.l.s4 1983009808
        %v2434 = vunpack.c.0.s8 %v2433
        %v2435 = vlaneseq
        %v2436 = vshrl.u32 %v2435, 7
        %v2437 = vsub.s32 %v2434, %v2436
        %v2438 = vrot.slane %v2431, %v2437
        %v2439 = vcombine.low %v2411, %v2418
        %v2441 = vunpack.c.l.s4 1983009808
        %v2442 = vunpack.c.0.s8 %v2441
        %v2443 = vlaneseq
        %v2444 = vshrl.u32 %v2443, 7
        %v2445 = vsub.s32 %v2442, %v2444
        %v2446 = vrot.slane %v2439, %v2445
        %v2447 = vcombine.low %v2421, %v2422
        %v2449 = vunpack.c.l.s4 1983009808
        %v2450 = vunpack.c.0.s8 %v2449
        %v2451 = vlaneseq
        %v2452 = vshrl.u32 %v2451, 7
        %v2453 = vsub.s32 %v2450, %v2452
        %v2454 = vrot.slane %v2447, %v2453
        %v2455 = vcombine.low %v2430, %v2438
        %v2456 = vcombine.high %v2430, %v2438
        %v2458 = vunpack.c.l.s4 1934713408
        %v2459 = vunpack.c.0.s8 %v2458
        %v2460 = vlaneseq
        %v2461 = vshrl.u32 %v2460, 7
        %v2462 = vsub.s32 %v2459, %v2461
        %v2463 = vrot.slane %v2455, %v2462
        %v2465 = vunpack.c.l.s4 1934713408
        %v2466 = vunpack.c.0.s8 %v2465
        %v2467 = vlaneseq
        %v2468 = vshrl.u32 %v2467, 7
        %v2469 = vsub.s32 %v2466, %v2468
        %v2470 = vrot.slane %v2456, %v2469
        %v2471 = vcombine.low %v2446, %v2454
        %v2472 = vcombine.high %v2446, %v2454
        %v2474 = vunpack.c.l.s4 1934713408
        %v2475 = vunpack.c.0.s8 %v2474
        %v2476 = vlaneseq
        %v2477 = vshrl.u32 %v2476, 7
        %v2478 = vsub.s32 %v2475, %v2477
        %v2479 = vrot.slane %v2471, %v2478
        %v2481 = vunpack.c.l.s4 1934713408
        %v2482 = vunpack.c.0.s8 %v2481
        %v2483 = vlaneseq
        %v2484 = vshrl.u32 %v2483, 7
        %v2485 = vsub.s32 %v2482, %v2484
        %v2486 = vrot.slane %v2472, %v2485
        %v2487 = vcombine.low %v2463, %v2479
        %v2488 = vcombine.high %v2463, %v2479
        %v2489 = vcombine.low %v2470, %v2486
        %v2490 = vcombine.high %v2470, %v2486
        %2492 = vrot.lane.b32.xlu0 %v2488, 8
        %v2493 = vpop.permute.xlu0 %2492
        %2496 = vrot.lane.b32.xlu0 %v2489, 16
        %v2497 = vpop.permute.xlu0 %2496
        %2500 = vrot.lane.b32.xlu0 %v2490, 24
        %v2501 = vpop.permute.xlu0 %2500
        %v2503 = vsel %vm1921, %v2487, %v2493
        %vm2504 = vcmask 130048
        %v2505 = vsel %vm2504, %v2503, %v2497
        %vm2506 = vcmask 195584
        %v2507 = vsel %vm2506, %v2505, %v2501
        %v2508 = vld [vmem:[#allocation6] sm:$0xf]
        %v2509 = vld [vmem:[#allocation6 + $0x4] sm:$0xf]
        %v2510 = vld [vmem:[#allocation6 + $0x8] sm:$0xf]
        %v2511 = vld [vmem:[#allocation6 + $0xc] sm:$0xf]
        %v2512 = vpack.c.bf16 %v2507, %v2507
        %v2513 = vld [vmem:[#allocation9] sm:$0x1]
        %v2515 = vlaneseq
        %v2516 = vshrl.u32 %v2515, 7
        %v2517 = vsub.s32 0, %v2516
        %v2518 = vrot.slane %v2513, %v2517
        %v2524 = vunpack.c.l.b16 %v2508
        %v2525 = vunpack.c.l.b16 %v2509
        %v2526 = vunpack.c.l.b16 %v2510
        %v2527 = vunpack.c.l.b16 %v2511
        %v2528 = vpack.c.b16 %v2525, %v2524
        %v2529 = vpack.c.b16 %v2527, %v2526
        %v2533 = vsel %vm1719, %v2512, 0
        %2535 = vmatprep.subr.bf16.mxu0 0
        %2536 = vmatpush1.bf16.msra.mxu0 %v2528
        %2537 = vmatprep.subr.bf16.mxu0 0
        %2538 = vmatpush1.bf16.msra.mxu0 %v2529
        %2539 = vmatprep.subr.bf16.mxu0 0
        %2540 = vmatpush1.bf16.msra.mxu0 0
        %2541 = vmatprep.subr.bf16.mxu0 0
        %2542 = vmatpush1.bf16.msra.mxu0 0
        %2543 = vmatprep.subr.bf16.mxu0 0
        %2544 = vmatpush1.bf16.msra.mxu0 0
        %2545 = vmatprep.subr.bf16.mxu0 0
        %2546 = vmatpush1.bf16.msra.mxu0 0
        %2547 = vmatprep.subr.bf16.mxu0 0
        %2548 = vmatpush1.bf16.msra.mxu0 0
        %2549 = vmatprep.subr.bf16.mxu0 0
        %2550 = vmatpush1.bf16.msra.mxu0 0
        %2551 = vmatprep.subr.bf16.mxu0 0
        %2552 = vmatpush1.bf16.msra.mxu0 0
        %2553 = vmatprep.subr.bf16.mxu0 0
        %2554 = vmatpush1.bf16.msra.mxu0 0
        %2555 = vmatprep.subr.bf16.mxu0 0
        %2556 = vmatpush1.bf16.msra.mxu0 0
        %2557 = vmatprep.subr.bf16.mxu0 0
        %2558 = vmatpush1.bf16.msra.mxu0 0
        %2559 = vmatprep.subr.bf16.mxu0 0
        %2560 = vmatpush1.bf16.msra.mxu0 0
        %2561 = vmatprep.subr.bf16.mxu0 0
        %2562 = vmatpush1.bf16.msra.mxu0 0
        %2563 = vmatprep.subr.bf16.mxu0 0
        %2564 = vmatpush1.bf16.msra.mxu0 0
        %2565 = vmatprep.subr.bf16.mxu0 0
        %2566 = vmatpush1.bf16.msra.mxu0 0
        %2567 = vmatprep.mubr.bf16.mxu0 0
        %2568 = vmatmul.mubr.bf16.gmra.mrb[0].mxu0 %v2533
        %v2569 = vpop.f32.mrb[0].mxu0
        %v2570 = vadd.f32 %v2518, %v2569
        %v2571 = vpop.f32.mrb[0].mxu0
        %v2572 = vpop.f32.mrb[0].mxu0
        %v2573 = vpop.f32.mrb[0].mxu0
        %2574 = vdwg.mxu0
        %v2575 = vadd.f32 %v2570, %v1694
        %v2576 = vld [vmem:[#allocation11] sm:$0x1]
        %v2577 = vld [vmem:[#allocation12] sm:$0x1]
        %v2578 = vsel %vm1719, %v2575, 0.0
        %2579 = vadd.xlane.f32.xlu0 %v2578
        %v2580 = vpop.xlane.xlu0 %2579
        %v2581 = vrcp.pop 32.0
        %v2582 = vmul.f32 %v2580, %v2581
        %v2583 = vsub.f32 %v2575, %v2582
        %v2584 = vmul.f32 %v2583, %v2583
        %v2585 = vsel %vm1719, %v2584, 0.0
        %2586 = vadd.xlane.f32.xlu0 %v2585
        %v2587 = vpop.xlane.xlu0 %2586
        %v2588 = vmul.f32 %v2587, %v2581
        %v2589 = vadd.f32 %v2588, 1e-05
        %v2590 = vrsqrt.pop %v2589
        %v2591 = vmul.f32 %v2583, %v2590
        %v2593 = vlaneseq
        %v2594 = vshrl.u32 %v2593, 7
        %v2595 = vsub.s32 0, %v2594
        %v2596 = vrot.slane %v2576, %v2595
        %v2598 = vmul.f32 %v2596, %v2591
        %v2600 = vlaneseq
        %v2601 = vshrl.u32 %v2600, 7
        %v2602 = vsub.s32 0, %v2601
        %v2603 = vrot.slane %v2577, %v2602
        %v2605 = vadd.f32 %v2598, %v2603
        %v2606 = vld [vmem:[%s10] sm:$0xf]
        %v2607 = vld [vmem:[%s10 + $0x4] sm:$0xf]
        %v2608 = vld [vmem:[%s10 + $0x8] sm:$0xf]
        %v2609 = vld [vmem:[%s10 + $0xc] sm:$0xf]
        %v2610 = vpack.c.bf16 %v2605, %v2605
        %v2611 = vld [vmem:[#allocation17] sm:$0x1]
        %v2613 = vlaneseq
        %v2614 = vshrl.u32 %v2613, 7
        %v2615 = vsub.s32 0, %v2614
        %v2616 = vrot.slane %v2611, %v2615
        %v2622 = vunpack.c.l.b16 %v2606
        %v2623 = vunpack.c.l.b16 %v2607
        %v2624 = vunpack.c.l.b16 %v2608
        %v2625 = vunpack.c.l.b16 %v2609
        %v2626 = vpack.c.b16 %v2623, %v2622
        %v2627 = vpack.c.b16 %v2625, %v2624
        %v2631 = vsel %vm1719, %v2610, 0
        %2633 = vmatprep.subr.bf16.mxu0 0
        %2634 = vmatpush1.bf16.msra.mxu0 %v2626
        %2635 = vmatprep.subr.bf16.mxu0 0
        %2636 = vmatpush1.bf16.msra.mxu0 %v2627
        %2637 = vmatprep.subr.bf16.mxu0 0
        %2638 = vmatpush1.bf16.msra.mxu0 0
        %2639 = vmatprep.subr.bf16.mxu0 0
        %2640 = vmatpush1.bf16.msra.mxu0 0
        %2641 = vmatprep.subr.bf16.mxu0 0
        %2642 = vmatpush1.bf16.msra.mxu0 0
        %2643 = vmatprep.subr.bf16.mxu0 0
        %2644 = vmatpush1.bf16.msra.mxu0 0
        %2645 = vmatprep.subr.bf16.mxu0 0
        %2646 = vmatpush1.bf16.msra.mxu0 0
        %2647 = vmatprep.subr.bf16.mxu0 0
        %2648 = vmatpush1.bf16.msra.mxu0 0
        %2649 = vmatprep.subr.bf16.mxu0 0
        %2650 = vmatpush1.bf16.msra.mxu0 0
        %2651 = vmatprep.subr.bf16.mxu0 0
        %2652 = vmatpush1.bf16.msra.mxu0 0
        %2653 = vmatprep.subr.bf16.mxu0 0
        %2654 = vmatpush1.bf16.msra.mxu0 0
        %2655 = vmatprep.subr.bf16.mxu0 0
        %2656 = vmatpush1.bf16.msra.mxu0 0
        %2657 = vmatprep.subr.bf16.mxu0 0
        %2658 = vmatpush1.bf16.msra.mxu0 0
        %2659 = vmatprep.subr.bf16.mxu0 0
        %2660 = vmatpush1.bf16.msra.mxu0 0
        %2661 = vmatprep.subr.bf16.mxu0 0
        %2662 = vmatpush1.bf16.msra.mxu0 0
        %2663 = vmatprep.subr.bf16.mxu0 0
        %2664 = vmatpush1.bf16.msra.mxu0 0
        %2665 = vmatprep.mubr.bf16.mxu0 0
        %2666 = vmatmul.mubr.bf16.gmra.mrb[0].mxu0 %v2631
        %v2667 = vpop.f32.mrb[0].mxu0
        %v2668 = vadd.f32 %v2616, %v2667
        %v2669 = vpop.f32.mrb[0].mxu0
        %v2670 = vpop.f32.mrb[0].mxu0
        %v2671 = vpop.f32.mrb[0].mxu0
        %2672 = vdwg.mxu0
        %v2673 = vld [vmem:[#allocation4] sm:$0xf]
        %v2674 = vld [vmem:[#allocation4 + $0x4] sm:$0xf]
        %v2675 = vld [vmem:[#allocation4 + $0x8] sm:$0xf]
        %v2676 = vld [vmem:[#allocation4 + $0xc] sm:$0xf]
        %v2677 = vld [vmem:[#allocation5] sm:$0xf]
        %v2678 = vld [vmem:[#allocation5 + $0x4] sm:$0xf]
        %v2679 = vld [vmem:[#allocation5 + $0x8] sm:$0xf]
        %v2680 = vld [vmem:[#allocation5 + $0xc] sm:$0xf]
        %2682 = vrot.lane.b32.xlu0 %v2668, 120
        %v2683 = vpop.permute.xlu0 %2682
        %2685 = vrot.lane.b32.xlu0 %v2668, 112
        %v2686 = vpop.permute.xlu0 %2685
        %2688 = vrot.lane.b32.xlu0 %v2668, 104
        %v2689 = vpop.permute.xlu0 %2688
        %v2691 = vcombine.low %v2668, %v2686
        %v2692 = vcombine.high %v2668, %v2686
        %v2694 = vunpack.c.l.s4 1983009808
        %v2695 = vunpack.c.0.s8 %v2694
        %v2696 = vlaneseq
        %v2697 = vshrl.u32 %v2696, 7
        %v2698 = vsub.s32 %v2695, %v2697
        %v2699 = vrot.slane %v2691, %v2698
        %v2701 = vunpack.c.l.s4 1983009808
        %v2702 = vunpack.c.0.s8 %v2701
        %v2703 = vlaneseq
        %v2704 = vshrl.u32 %v2703, 7
        %v2705 = vsub.s32 %v2702, %v2704
        %v2706 = vrot.slane %v2692, %v2705
        %v2707 = vcombine.low %v2683, %v2689
        %v2708 = vcombine.high %v2683, %v2689
        %v2710 = vunpack.c.l.s4 1983009808
        %v2711 = vunpack.c.0.s8 %v2710
        %v2712 = vlaneseq
        %v2713 = vshrl.u32 %v2712, 7
        %v2714 = vsub.s32 %v2711, %v2713
        %v2715 = vrot.slane %v2707, %v2714
        %v2717 = vunpack.c.l.s4 1983009808
        %v2718 = vunpack.c.0.s8 %v2717
        %v2719 = vlaneseq
        %v2720 = vshrl.u32 %v2719, 7
        %v2721 = vsub.s32 %v2718, %v2720
        %v2722 = vrot.slane %v2708, %v2721
        %v2723 = vcombine.low %v2699, %v2715
        %v2724 = vcombine.high %v2699, %v2715
        %v2726 = vunpack.c.l.s4 1934713408
        %v2727 = vunpack.c.0.s8 %v2726
        %v2728 = vlaneseq
        %v2729 = vshrl.u32 %v2728, 7
        %v2730 = vsub.s32 %v2727, %v2729
        %v2731 = vrot.slane %v2723, %v2730
        %v2733 = vunpack.c.l.s4 1934713408
        %v2734 = vunpack.c.0.s8 %v2733
        %v2735 = vlaneseq
        %v2736 = vshrl.u32 %v2735, 7
        %v2737 = vsub.s32 %v2734, %v2736
        %v2738 = vrot.slane %v2724, %v2737
        %v2739 = vcombine.low %v2706, %v2722
        %v2740 = vcombine.high %v2706, %v2722
        %v2742 = vunpack.c.l.s4 1934713408
        %v2743 = vunpack.c.0.s8 %v2742
        %v2744 = vlaneseq
        %v2745 = vshrl.u32 %v2744, 7
        %v2746 = vsub.s32 %v2743, %v2745
        %v2747 = vrot.slane %v2739, %v2746
        %v2749 = vunpack.c.l.s4 1934713408
        %v2750 = vunpack.c.0.s8 %v2749
        %v2751 = vlaneseq
        %v2752 = vshrl.u32 %v2751, 7
        %v2753 = vsub.s32 %v2750, %v2752
        %v2754 = vrot.slane %v2740, %v2753
        %v2755 = vcombine.high %v2731, 0.0
        %v2756 = vcombine.high %v2738, 0.0
        %v2757 = vcombine.high %v2747, 0.0
        %v2758 = vcombine.high %v2754, 0.0
        %v2759 = vcombine.low %v2731, %v2738
        %v2761 = vunpack.c.l.s4 1983009808
        %v2762 = vunpack.c.0.s8 %v2761
        %v2763 = vlaneseq
        %v2764 = vshrl.u32 %v2763, 7
        %v2765 = vsub.s32 %v2762, %v2764
        %v2766 = vrot.slane %v2759, %v2765
        %v2767 = vcombine.low %v2755, %v2756
        %v2769 = vunpack.c.l.s4 1983009808
        %v2770 = vunpack.c.0.s8 %v2769
        %v2771 = vlaneseq
        %v2772 = vshrl.u32 %v2771, 7
        %v2773 = vsub.s32 %v2770, %v2772
        %v2774 = vrot.slane %v2767, %v2773
        %v2775 = vcombine.low %v2747, %v2754
        %v2777 = vunpack.c.l.s4 1983009808
        %v2778 = vunpack.c.0.s8 %v2777
        %v2779 = vlaneseq
        %v2780 = vshrl.u32 %v2779, 7
        %v2781 = vsub.s32 %v2778, %v2780
        %v2782 = vrot.slane %v2775, %v2781
        %v2783 = vcombine.low %v2757, %v2758
        %v2785 = vunpack.c.l.s4 1983009808
        %v2786 = vunpack.c.0.s8 %v2785
        %v2787 = vlaneseq
        %v2788 = vshrl.u32 %v2787, 7
        %v2789 = vsub.s32 %v2786, %v2788
        %v2790 = vrot.slane %v2783, %v2789
        %v2791 = vcombine.low %v2766, %v2774
        %v2792 = vcombine.high %v2766, %v2774
        %v2794 = vunpack.c.l.s4 1934713408
        %v2795 = vunpack.c.0.s8 %v2794
        %v2796 = vlaneseq
        %v2797 = vshrl.u32 %v2796, 7
        %v2798 = vsub.s32 %v2795, %v2797
        %v2799 = vrot.slane %v2791, %v2798
        %v2801 = vunpack.c.l.s4 1934713408
        %v2802 = vunpack.c.0.s8 %v2801
        %v2803 = vlaneseq
        %v2804 = vshrl.u32 %v2803, 7
        %v2805 = vsub.s32 %v2802, %v2804
        %v2806 = vrot.slane %v2792, %v2805
        %v2807 = vcombine.low %v2782, %v2790
        %v2808 = vcombine.high %v2782, %v2790
        %v2810 = vunpack.c.l.s4 1934713408
        %v2811 = vunpack.c.0.s8 %v2810
        %v2812 = vlaneseq
        %v2813 = vshrl.u32 %v2812, 7
        %v2814 = vsub.s32 %v2811, %v2813
        %v2815 = vrot.slane %v2807, %v2814
        %v2817 = vunpack.c.l.s4 1934713408
        %v2818 = vunpack.c.0.s8 %v2817
        %v2819 = vlaneseq
        %v2820 = vshrl.u32 %v2819, 7
        %v2821 = vsub.s32 %v2818, %v2820
        %v2822 = vrot.slane %v2808, %v2821
        %v2823 = vcombine.low %v2799, %v2815
        %v2824 = vcombine.high %v2799, %v2815
        %v2825 = vcombine.low %v2806, %v2822
        %v2826 = vcombine.high %v2806, %v2822
        %v2827 = vpack.c.bf16 %v2823, %v2823
        %v2828 = vpack.c.bf16 %v2824, %v2824
        %v2829 = vpack.c.bf16 %v2825, %v2825
        %v2830 = vpack.c.bf16 %v2826, %v2826
        %v2832 = vsel %vm1921, %v2827, 0
        %v2835 = vsel %vm1921, %v2673, 0
        %2837 = vmatprep.subr.bf16.mxu0 0
        %2838 = vmatpush1.bf16.xpose.msra.mxu0 %v2835
        %2839 = vmatprep.subr.bf16.mxu0 0
        %2840 = vmatpush1.bf16.xpose.msra.mxu0 0
        %2841 = vmatprep.subr.bf16.mxu0 0
        %2842 = vmatpush1.bf16.xpose.msra.mxu0 0
        %2843 = vmatprep.subr.bf16.mxu0 0
        %2844 = vmatpush1.bf16.xpose.msra.mxu0 0
        %2845 = vmatprep.subr.bf16.mxu0 0
        %2846 = vmatpush1.bf16.xpose.msra.mxu0 0
        %2847 = vmatprep.subr.bf16.mxu0 0
        %2848 = vmatpush1.bf16.xpose.msra.mxu0 0
        %2849 = vmatprep.subr.bf16.mxu0 0
        %2850 = vmatpush1.bf16.xpose.msra.mxu0 0
        %2851 = vmatprep.subr.bf16.mxu0 0
        %2852 = vmatpush1.bf16.xpose.msra.mxu0 0
        %2853 = vmatprep.subr.bf16.mxu0 0
        %2854 = vmatpush1.bf16.xpose.msra.mxu0 0
        %2855 = vmatprep.subr.bf16.mxu0 0
        %2856 = vmatpush1.bf16.xpose.msra.mxu0 0
        %2857 = vmatprep.subr.bf16.mxu0 0
        %2858 = vmatpush1.bf16.xpose.msra.mxu0 0
        %2859 = vmatprep.subr.bf16.mxu0 0
        %2860 = vmatpush1.bf16.xpose.msra.mxu0 0
        %2861 = vmatprep.subr.bf16.mxu0 0
        %2862 = vmatpush1.bf16.xpose.msra.mxu0 0
        %2863 = vmatprep.subr.bf16.mxu0 0
        %2864 = vmatpush1.bf16.xpose.msra.mxu0 0
        %2865 = vmatprep.subr.bf16.mxu0 0
        %2866 = vmatpush1.bf16.xpose.msra.mxu0 0
        %2867 = vmatprep.subr.bf16.mxu0 0
        %2868 = vmatpush1.bf16.xpose.msra.mxu0 0
        %2869 = vmatprep.mubr.bf16.mxu0 0
        %2870 = vmatmul.mubr.bf16.gmra.mrb[0].mxu0 %v2832
        %v2871 = vpop.f32.mrb[0].mxu0
        %v2872 = vadd.f32 0.0, %v2871
        %v2873 = vpop.f32.mrb[0].mxu0
        %v2874 = vpop.f32.mrb[0].mxu0
        %v2875 = vpop.f32.mrb[0].mxu0
        %2876 = vdwg.mxu0
        %v2878 = vsel %vm1921, %v2828, 0
        %v2881 = vsel %vm1921, %v2674, 0
        %2883 = vmatprep.subr.bf16.mxu0 0
        %2884 = vmatpush1.bf16.xpose.msra.mxu0 %v2881
        %2885 = vmatprep.subr.bf16.mxu0 0
        %2886 = vmatpush1.bf16.xpose.msra.mxu0 0
        %2887 = vmatprep.subr.bf16.mxu0 0
        %2888 = vmatpush1.bf16.xpose.msra.mxu0 0
        %2889 = vmatprep.subr.bf16.mxu0 0
        %2890 = vmatpush1.bf16.xpose.msra.mxu0 0
        %2891 = vmatprep.subr.bf16.mxu0 0
        %2892 = vmatpush1.bf16.xpose.msra.mxu0 0
        %2893 = vmatprep.subr.bf16.mxu0 0
        %2894 = vmatpush1.bf16.xpose.msra.mxu0 0
        %2895 = vmatprep.subr.bf16.mxu0 0
        %2896 = vmatpush1.bf16.xpose.msra.mxu0 0
        %2897 = vmatprep.subr.bf16.mxu0 0
        %2898 = vmatpush1.bf16.xpose.msra.mxu0 0
        %2899 = vmatprep.subr.bf16.mxu0 0
        %2900 = vmatpush1.bf16.xpose.msra.mxu0 0
        %2901 = vmatprep.subr.bf16.mxu0 0
        %2902 = vmatpush1.bf16.xpose.msra.mxu0 0
        %2903 = vmatprep.subr.bf16.mxu0 0
        %2904 = vmatpush1.bf16.xpose.msra.mxu0 0
        %2905 = vmatprep.subr.bf16.mxu0 0
        %2906 = vmatpush1.bf16.xpose.msra.mxu0 0
        %2907 = vmatprep.subr.bf16.mxu0 0
        %2908 = vmatpush1.bf16.xpose.msra.mxu0 0
        %2909 = vmatprep.subr.bf16.mxu0 0
        %2910 = vmatpush1.bf16.xpose.msra.mxu0 0
        %2911 = vmatprep.subr.bf16.mxu0 0
        %2912 = vmatpush1.bf16.xpose.msra.mxu0 0
        %2913 = vmatprep.subr.bf16.mxu0 0
        %2914 = vmatpush1.bf16.xpose.msra.mxu0 0
        %2915 = vmatprep.mubr.bf16.mxu0 0
        %2916 = vmatmul.mubr.bf16.gmra.mrb[0].mxu0 %v2878
        %v2917 = vpop.f32.mrb[0].mxu0
        %v2918 = vadd.f32 0.0, %v2917
        %v2919 = vpop.f32.mrb[0].mxu0
        %v2920 = vpop.f32.mrb[0].mxu0
        %v2921 = vpop.f32.mrb[0].mxu0
        %2922 = vdwg.mxu0
        %v2924 = vsel %vm1921, %v2829, 0
        %v2927 = vsel %vm1921, %v2675, 0
        %2929 = vmatprep.subr.bf16.mxu0 0
        %2930 = vmatpush1.bf16.xpose.msra.mxu0 %v2927
        %2931 = vmatprep.subr.bf16.mxu0 0
        %2932 = vmatpush1.bf16.xpose.msra.mxu0 0
        %2933 = vmatprep.subr.bf16.mxu0 0
        %2934 = vmatpush1.bf16.xpose.msra.mxu0 0
        %2935 = vmatprep.subr.bf16.mxu0 0
        %2936 = vmatpush1.bf16.xpose.msra.mxu0 0
        %2937 = vmatprep.subr.bf16.mxu0 0
        %2938 = vmatpush1.bf16.xpose.msra.mxu0 0
        %2939 = vmatprep.subr.bf16.mxu0 0
        %2940 = vmatpush1.bf16.xpose.msra.mxu0 0
        %2941 = vmatprep.subr.bf16.mxu0 0
        %2942 = vmatpush1.bf16.xpose.msra.mxu0 0
        %2943 = vmatprep.subr.bf16.mxu0 0
        %2944 = vmatpush1.bf16.xpose.msra.mxu0 0
        %2945 = vmatprep.subr.bf16.mxu0 0
        %2946 = vmatpush1.bf16.xpose.msra.mxu0 0
        %2947 = vmatprep.subr.bf16.mxu0 0
        %2948 = vmatpush1.bf16.xpose.msra.mxu0 0
        %2949 = vmatprep.subr.bf16.mxu0 0
        %2950 = vmatpush1.bf16.xpose.msra.mxu0 0
        %2951 = vmatprep.subr.bf16.mxu0 0
        %2952 = vmatpush1.bf16.xpose.msra.mxu0 0
        %2953 = vmatprep.subr.bf16.mxu0 0
        %2954 = vmatpush1.bf16.xpose.msra.mxu0 0
        %2955 = vmatprep.subr.bf16.mxu0 0
        %2956 = vmatpush1.bf16.xpose.msra.mxu0 0
        %2957 = vmatprep.subr.bf16.mxu0 0
        %2958 = vmatpush1.bf16.xpose.msra.mxu0 0
        %2959 = vmatprep.subr.bf16.mxu0 0
        %2960 = vmatpush1.bf16.xpose.msra.mxu0 0
        %2961 = vmatprep.mubr.bf16.mxu0 0
        %2962 = vmatmul.mubr.bf16.gmra.mrb[0].mxu0 %v2924
        %v2963 = vpop.f32.mrb[0].mxu0
        %v2964 = vadd.f32 0.0, %v2963
        %v2965 = vpop.f32.mrb[0].mxu0
        %v2966 = vpop.f32.mrb[0].mxu0
        %v2967 = vpop.f32.mrb[0].mxu0
        %2968 = vdwg.mxu0
        %v2970 = vsel %vm1921, %v2830, 0
        %v2973 = vsel %vm1921, %v2676, 0
        %2975 = vmatprep.subr.bf16.mxu0 0
        %2976 = vmatpush1.bf16.xpose.msra.mxu0 %v2973
        %2977 = vmatprep.subr.bf16.mxu0 0
        %2978 = vmatpush1.bf16.xpose.msra.mxu0 0
        %2979 = vmatprep.subr.bf16.mxu0 0
        %2980 = vmatpush1.bf16.xpose.msra.mxu0 0
        %2981 = vmatprep.subr.bf16.mxu0 0
        %2982 = vmatpush1.bf16.xpose.msra.mxu0 0
        %2983 = vmatprep.subr.bf16.mxu0 0
        %2984 = vmatpush1.bf16.xpose.msra.mxu0 0
        %2985 = vmatprep.subr.bf16.mxu0 0
        %2986 = vmatpush1.bf16.xpose.msra.mxu0 0
        %2987 = vmatprep.subr.bf16.mxu0 0
        %2988 = vmatpush1.bf16.xpose.msra.mxu0 0
        %2989 = vmatprep.subr.bf16.mxu0 0
        %2990 = vmatpush1.bf16.xpose.msra.mxu0 0
        %2991 = vmatprep.subr.bf16.mxu0 0
        %2992 = vmatpush1.bf16.xpose.msra.mxu0 0
        %2993 = vmatprep.subr.bf16.mxu0 0
        %2994 = vmatpush1.bf16.xpose.msra.mxu0 0
        %2995 = vmatprep.subr.bf16.mxu0 0
        %2996 = vmatpush1.bf16.xpose.msra.mxu0 0
        %2997 = vmatprep.subr.bf16.mxu0 0
        %2998 = vmatpush1.bf16.xpose.msra.mxu0 0
        %2999 = vmatprep.subr.bf16.mxu0 0
        %3000 = vmatpush1.bf16.xpose.msra.mxu0 0
        %3001 = vmatprep.subr.bf16.mxu0 0
        %3002 = vmatpush1.bf16.xpose.msra.mxu0 0
        %3003 = vmatprep.subr.bf16.mxu0 0
        %3004 = vmatpush1.bf16.xpose.msra.mxu0 0
        %3005 = vmatprep.subr.bf16.mxu0 0
        %3006 = vmatpush1.bf16.xpose.msra.mxu0 0
        %3007 = vmatprep.mubr.bf16.mxu0 0
        %3008 = vmatmul.mubr.bf16.gmra.mrb[0].mxu0 %v2970
        %v3009 = vpop.f32.mrb[0].mxu0
        %v3010 = vadd.f32 0.0, %v3009
        %v3011 = vpop.f32.mrb[0].mxu0
        %v3012 = vpop.f32.mrb[0].mxu0
        %v3013 = vpop.f32.mrb[0].mxu0
        %3014 = vdwg.mxu0
        %v3015 = vmul.f32 %v2872, 0.35355338
        %v3016 = vmul.f32 %v2918, 0.35355338
        %v3017 = vmul.f32 %v2964, 0.35355338
        %v3018 = vmul.f32 %v3010, 0.35355338
        %v3019 = vsel %vm1921, %v3015, -inf
        %3020 = vmax.xlane.f32.xlu0 %v3019
        %v3021 = vpop.xlane.xlu0 %3020
        %v3022 = vsel %vm1921, %v3016, -inf
        %3023 = vmax.xlane.f32.xlu0 %v3022
        %v3024 = vpop.xlane.xlu0 %3023
        %v3025 = vsel %vm1921, %v3017, -inf
        %3026 = vmax.xlane.f32.xlu0 %v3025
        %v3027 = vpop.xlane.xlu0 %3026
        %v3028 = vsel %vm1921, %v3018, -inf
        %3029 = vmax.xlane.f32.xlu0 %v3028
        %v3030 = vpop.xlane.xlu0 %3029
        %v3031 = vsub.f32 %v3015, %v3021
        %v3032 = vsub.f32 %v3016, %v3024
        %v3033 = vsub.f32 %v3017, %v3027
        %v3034 = vsub.f32 %v3018, %v3030
        %v3035 = vmul.f32 %v3031, 1.442695
        %v3036 = vpow.pop %v3035
        %v3037 = vmul.f32 %v3032, 1.442695
        %v3038 = vpow.pop %v3037
        %v3039 = vmul.f32 %v3033, 1.442695
        %v3040 = vpow.pop %v3039
        %v3041 = vmul.f32 %v3034, 1.442695
        %v3042 = vpow.pop %v3041
        %v3043 = vsel %vm1921, %v3036, 0.0
        %3044 = vadd.xlane.f32.xlu0 %v3043
        %v3045 = vpop.xlane.xlu0 %3044
        %v3046 = vsel %vm1921, %v3038, 0.0
        %3047 = vadd.xlane.f32.xlu0 %v3046
        %v3048 = vpop.xlane.xlu0 %3047
        %v3049 = vsel %vm1921, %v3040, 0.0
        %3050 = vadd.xlane.f32.xlu0 %v3049
        %v3051 = vpop.xlane.xlu0 %3050
        %v3052 = vsel %vm1921, %v3042, 0.0
        %3053 = vadd.xlane.f32.xlu0 %v3052
        %v3054 = vpop.xlane.xlu0 %3053
        %v3055 = vrcp.pop %v3045
        %v3056 = vrcp.pop %v3048
        %v3057 = vrcp.pop %v3051
        %v3058 = vrcp.pop %v3054
        %v3059 = vmul.f32 %v3036, %v3055
        %v3060 = vmul.f32 %v3038, %v3056
        %v3061 = vmul.f32 %v3040, %v3057
        %v3062 = vmul.f32 %v3042, %v3058
        %v3063 = vpack.c.bf16 %v3059, %v3059
        %v3064 = vpack.c.bf16 %v3060, %v3060
        %v3065 = vpack.c.bf16 %v3061, %v3061
        %v3066 = vpack.c.bf16 %v3062, %v3062
        %v3068 = vsel %vm1921, %v3063, 0
        %v3071 = vsel %vm2173, %v2677, 0
        %3073 = vmatprep.subr.bf16.mxu0 0
        %3074 = vmatpush1.bf16.msra.mxu0 %v3071
        %3075 = vmatprep.subr.bf16.mxu0 0
        %3076 = vmatpush1.bf16.msra.mxu0 0
        %3077 = vmatprep.subr.bf16.mxu0 0
        %3078 = vmatpush1.bf16.msra.mxu0 0
        %3079 = vmatprep.subr.bf16.mxu0 0
        %3080 = vmatpush1.bf16.msra.mxu0 0
        %3081 = vmatprep.subr.bf16.mxu0 0
        %3082 = vmatpush1.bf16.msra.mxu0 0
        %3083 = vmatprep.subr.bf16.mxu0 0
        %3084 = vmatpush1.bf16.msra.mxu0 0
        %3085 = vmatprep.subr.bf16.mxu0 0
        %3086 = vmatpush1.bf16.msra.mxu0 0
        %3087 = vmatprep.subr.bf16.mxu0 0
        %3088 = vmatpush1.bf16.msra.mxu0 0
        %3089 = vmatprep.subr.bf16.mxu0 0
        %3090 = vmatpush1.bf16.msra.mxu0 0
        %3091 = vmatprep.subr.bf16.mxu0 0
        %3092 = vmatpush1.bf16.msra.mxu0 0
        %3093 = vmatprep.subr.bf16.mxu0 0
        %3094 = vmatpush1.bf16.msra.mxu0 0
        %3095 = vmatprep.subr.bf16.mxu0 0
        %3096 = vmatpush1.bf16.msra.mxu0 0
        %3097 = vmatprep.subr.bf16.mxu0 0
        %3098 = vmatpush1.bf16.msra.mxu0 0
        %3099 = vmatprep.subr.bf16.mxu0 0
        %3100 = vmatpush1.bf16.msra.mxu0 0
        %3101 = vmatprep.subr.bf16.mxu0 0
        %3102 = vmatpush1.bf16.msra.mxu0 0
        %3103 = vmatprep.subr.bf16.mxu0 0
        %3104 = vmatpush1.bf16.msra.mxu0 0
        %3105 = vmatprep.mubr.bf16.mxu0 0
        %3106 = vmatmul.mubr.bf16.gmra.mrb[0].mxu0 %v3068
        %v3107 = vpop.f32.mrb[0].mxu0
        %v3108 = vadd.f32 0.0, %v3107
        %v3109 = vpop.f32.mrb[0].mxu0
        %v3110 = vpop.f32.mrb[0].mxu0
        %v3111 = vpop.f32.mrb[0].mxu0
        %3112 = vdwg.mxu0
        %v3114 = vsel %vm1921, %v3064, 0
        %v3117 = vsel %vm2173, %v2678, 0
        %3119 = vmatprep.subr.bf16.mxu0 0
        %3120 = vmatpush1.bf16.msra.mxu0 %v3117
        %3121 = vmatprep.subr.bf16.mxu0 0
        %3122 = vmatpush1.bf16.msra.mxu0 0
        %3123 = vmatprep.subr.bf16.mxu0 0
        %3124 = vmatpush1.bf16.msra.mxu0 0
        %3125 = vmatprep.subr.bf16.mxu0 0
        %3126 = vmatpush1.bf16.msra.mxu0 0
        %3127 = vmatprep.subr.bf16.mxu0 0
        %3128 = vmatpush1.bf16.msra.mxu0 0
        %3129 = vmatprep.subr.bf16.mxu0 0
        %3130 = vmatpush1.bf16.msra.mxu0 0
        %3131 = vmatprep.subr.bf16.mxu0 0
        %3132 = vmatpush1.bf16.msra.mxu0 0
        %3133 = vmatprep.subr.bf16.mxu0 0
        %3134 = vmatpush1.bf16.msra.mxu0 0
        %3135 = vmatprep.subr.bf16.mxu0 0
        %3136 = vmatpush1.bf16.msra.mxu0 0
        %3137 = vmatprep.subr.bf16.mxu0 0
        %3138 = vmatpush1.bf16.msra.mxu0 0
        %3139 = vmatprep.subr.bf16.mxu0 0
        %3140 = vmatpush1.bf16.msra.mxu0 0
        %3141 = vmatprep.subr.bf16.mxu0 0
        %3142 = vmatpush1.bf16.msra.mxu0 0
        %3143 = vmatprep.subr.bf16.mxu0 0
        %3144 = vmatpush1.bf16.msra.mxu0 0
        %3145 = vmatprep.subr.bf16.mxu0 0
        %3146 = vmatpush1.bf16.msra.mxu0 0
        %3147 = vmatprep.subr.bf16.mxu0 0
        %3148 = vmatpush1.bf16.msra.mxu0 0
        %3149 = vmatprep.subr.bf16.mxu0 0
        %3150 = vmatpush1.bf16.msra.mxu0 0
        %3151 = vmatprep.mubr.bf16.mxu0 0
        %3152 = vmatmul.mubr.bf16.gmra.mrb[0].mxu0 %v3114
        %v3153 = vpop.f32.mrb[0].mxu0
        %v3154 = vadd.f32 0.0, %v3153
        %v3155 = vpop.f32.mrb[0].mxu0
        %v3156 = vpop.f32.mrb[0].mxu0
        %v3157 = vpop.f32.mrb[0].mxu0
        %3158 = vdwg.mxu0
        %v3160 = vsel %vm1921, %v3065, 0
        %v3163 = vsel %vm2173, %v2679, 0
        %3165 = vmatprep.subr.bf16.mxu0 0
        %3166 = vmatpush1.bf16.msra.mxu0 %v3163
        %3167 = vmatprep.subr.bf16.mxu0 0
        %3168 = vmatpush1.bf16.msra.mxu0 0
        %3169 = vmatprep.subr.bf16.mxu0 0
        %3170 = vmatpush1.bf16.msra.mxu0 0
        %3171 = vmatprep.subr.bf16.mxu0 0
        %3172 = vmatpush1.bf16.msra.mxu0 0
        %3173 = vmatprep.subr.bf16.mxu0 0
        %3174 = vmatpush1.bf16.msra.mxu0 0
        %3175 = vmatprep.subr.bf16.mxu0 0
        %3176 = vmatpush1.bf16.msra.mxu0 0
        %3177 = vmatprep.subr.bf16.mxu0 0
        %3178 = vmatpush1.bf16.msra.mxu0 0
        %3179 = vmatprep.subr.bf16.mxu0 0
        %3180 = vmatpush1.bf16.msra.mxu0 0
        %3181 = vmatprep.subr.bf16.mxu0 0
        %3182 = vmatpush1.bf16.msra.mxu0 0
        %3183 = vmatprep.subr.bf16.mxu0 0
        %3184 = vmatpush1.bf16.msra.mxu0 0
        %3185 = vmatprep.subr.bf16.mxu0 0
        %3186 = vmatpush1.bf16.msra.mxu0 0
        %3187 = vmatprep.subr.bf16.mxu0 0
        %3188 = vmatpush1.bf16.msra.mxu0 0
        %3189 = vmatprep.subr.bf16.mxu0 0
        %3190 = vmatpush1.bf16.msra.mxu0 0
        %3191 = vmatprep.subr.bf16.mxu0 0
        %3192 = vmatpush1.bf16.msra.mxu0 0
        %3193 = vmatprep.subr.bf16.mxu0 0
        %3194 = vmatpush1.bf16.msra.mxu0 0
        %3195 = vmatprep.subr.bf16.mxu0 0
        %3196 = vmatpush1.bf16.msra.mxu0 0
        %3197 = vmatprep.mubr.bf16.mxu0 0
        %3198 = vmatmul.mubr.bf16.gmra.mrb[0].mxu0 %v3160
        %v3199 = vpop.f32.mrb[0].mxu0
        %v3200 = vadd.f32 0.0, %v3199
        %v3201 = vpop.f32.mrb[0].mxu0
        %v3202 = vpop.f32.mrb[0].mxu0
        %v3203 = vpop.f32.mrb[0].mxu0
        %3204 = vdwg.mxu0
        %v3206 = vsel %vm1921, %v3066, 0
        %v3209 = vsel %vm2173, %v2680, 0
        %3211 = vmatprep.subr.bf16.mxu0 0
        %3212 = vmatpush1.bf16.msra.mxu0 %v3209
        %3213 = vmatprep.subr.bf16.mxu0 0
        %3214 = vmatpush1.bf16.msra.mxu0 0
        %3215 = vmatprep.subr.bf16.mxu0 0
        %3216 = vmatpush1.bf16.msra.mxu0 0
        %3217 = vmatprep.subr.bf16.mxu0 0
        %3218 = vmatpush1.bf16.msra.mxu0 0
        %3219 = vmatprep.subr.bf16.mxu0 0
        %3220 = vmatpush1.bf16.msra.mxu0 0
        %3221 = vmatprep.subr.bf16.mxu0 0
        %3222 = vmatpush1.bf16.msra.mxu0 0
        %3223 = vmatprep.subr.bf16.mxu0 0
        %3224 = vmatpush1.bf16.msra.mxu0 0
        %3225 = vmatprep.subr.bf16.mxu0 0
        %3226 = vmatpush1.bf16.msra.mxu0 0
        %3227 = vmatprep.subr.bf16.mxu0 0
        %3228 = vmatpush1.bf16.msra.mxu0 0
        %3229 = vmatprep.subr.bf16.mxu0 0
        %3230 = vmatpush1.bf16.msra.mxu0 0
        %3231 = vmatprep.subr.bf16.mxu0 0
        %3232 = vmatpush1.bf16.msra.mxu0 0
        %3233 = vmatprep.subr.bf16.mxu0 0
        %3234 = vmatpush1.bf16.msra.mxu0 0
        %3235 = vmatprep.subr.bf16.mxu0 0
        %3236 = vmatpush1.bf16.msra.mxu0 0
        %3237 = vmatprep.subr.bf16.mxu0 0
        %3238 = vmatpush1.bf16.msra.mxu0 0
        %3239 = vmatprep.subr.bf16.mxu0 0
        %3240 = vmatpush1.bf16.msra.mxu0 0
        %3241 = vmatprep.subr.bf16.mxu0 0
        %3242 = vmatpush1.bf16.msra.mxu0 0
        %3243 = vmatprep.mubr.bf16.mxu0 0
        %3244 = vmatmul.mubr.bf16.gmra.mrb[0].mxu0 %v3206
        %v3245 = vpop.f32.mrb[0].mxu0
        %v3246 = vadd.f32 0.0, %v3245
        %v3247 = vpop.f32.mrb[0].mxu0
        %v3248 = vpop.f32.mrb[0].mxu0
        %v3249 = vpop.f32.mrb[0].mxu0
        %3250 = vdwg.mxu0
        %v3251 = vcombine.low %v3108, %v3200
        %v3252 = vcombine.high %v3108, %v3200
        %v3254 = vunpack.c.l.s4 1983009808
        %v3255 = vunpack.c.0.s8 %v3254
        %v3256 = vlaneseq
        %v3257 = vshrl.u32 %v3256, 7
        %v3258 = vsub.s32 %v3255, %v3257
        %v3259 = vrot.slane %v3251, %v3258
        %v3261 = vunpack.c.l.s4 1983009808
        %v3262 = vunpack.c.0.s8 %v3261
        %v3263 = vlaneseq
        %v3264 = vshrl.u32 %v3263, 7
        %v3265 = vsub.s32 %v3262, %v3264
        %v3266 = vrot.slane %v3252, %v3265
        %v3267 = vcombine.low %v3154, %v3246
        %v3268 = vcombine.high %v3154, %v3246
        %v3270 = vunpack.c.l.s4 1983009808
        %v3271 = vunpack.c.0.s8 %v3270
        %v3272 = vlaneseq
        %v3273 = vshrl.u32 %v3272, 7
        %v3274 = vsub.s32 %v3271, %v3273
        %v3275 = vrot.slane %v3267, %v3274
        %v3277 = vunpack.c.l.s4 1983009808
        %v3278 = vunpack.c.0.s8 %v3277
        %v3279 = vlaneseq
        %v3280 = vshrl.u32 %v3279, 7
        %v3281 = vsub.s32 %v3278, %v3280
        %v3282 = vrot.slane %v3268, %v3281
        %v3283 = vcombine.low %v3259, %v3275
        %v3284 = vcombine.high %v3259, %v3275
        %v3286 = vunpack.c.l.s4 1934713408
        %v3287 = vunpack.c.0.s8 %v3286
        %v3288 = vlaneseq
        %v3289 = vshrl.u32 %v3288, 7
        %v3290 = vsub.s32 %v3287, %v3289
        %v3291 = vrot.slane %v3283, %v3290
        %v3293 = vunpack.c.l.s4 1934713408
        %v3294 = vunpack.c.0.s8 %v3293
        %v3295 = vlaneseq
        %v3296 = vshrl.u32 %v3295, 7
        %v3297 = vsub.s32 %v3294, %v3296
        %v3298 = vrot.slane %v3284, %v3297
        %v3299 = vcombine.low %v3266, %v3282
        %v3300 = vcombine.high %v3266, %v3282
        %v3302 = vunpack.c.l.s4 1934713408
        %v3303 = vunpack.c.0.s8 %v3302
        %v3304 = vlaneseq
        %v3305 = vshrl.u32 %v3304, 7
        %v3306 = vsub.s32 %v3303, %v3305
        %v3307 = vrot.slane %v3299, %v3306
        %v3309 = vunpack.c.l.s4 1934713408
        %v3310 = vunpack.c.0.s8 %v3309
        %v3311 = vlaneseq
        %v3312 = vshrl.u32 %v3311, 7
        %v3313 = vsub.s32 %v3310, %v3312
        %v3314 = vrot.slane %v3300, %v3313
        %v3315 = vcombine.high %v3291, 0.0
        %v3316 = vcombine.high %v3298, 0.0
        %v3317 = vcombine.high %v3307, 0.0
        %v3318 = vcombine.high %v3314, 0.0
        %v3319 = vcombine.low %v3291, %v3298
        %v3321 = vunpack.c.l.s4 1983009808
        %v3322 = vunpack.c.0.s8 %v3321
        %v3323 = vlaneseq
        %v3324 = vshrl.u32 %v3323, 7
        %v3325 = vsub.s32 %v3322, %v3324
        %v3326 = vrot.slane %v3319, %v3325
        %v3327 = vcombine.low %v3315, %v3316
        %v3329 = vunpack.c.l.s4 1983009808
        %v3330 = vunpack.c.0.s8 %v3329
        %v3331 = vlaneseq
        %v3332 = vshrl.u32 %v3331, 7
        %v3333 = vsub.s32 %v3330, %v3332
        %v3334 = vrot.slane %v3327, %v3333
        %v3335 = vcombine.low %v3307, %v3314
        %v3337 = vunpack.c.l.s4 1983009808
        %v3338 = vunpack.c.0.s8 %v3337
        %v3339 = vlaneseq
        %v3340 = vshrl.u32 %v3339, 7
        %v3341 = vsub.s32 %v3338, %v3340
        %v3342 = vrot.slane %v3335, %v3341
        %v3343 = vcombine.low %v3317, %v3318
        %v3345 = vunpack.c.l.s4 1983009808
        %v3346 = vunpack.c.0.s8 %v3345
        %v3347 = vlaneseq
        %v3348 = vshrl.u32 %v3347, 7
        %v3349 = vsub.s32 %v3346, %v3348
        %v3350 = vrot.slane %v3343, %v3349
        %v3351 = vcombine.low %v3326, %v3334
        %v3352 = vcombine.high %v3326, %v3334
        %v3354 = vunpack.c.l.s4 1934713408
        %v3355 = vunpack.c.0.s8 %v3354
        %v3356 = vlaneseq
        %v3357 = vshrl.u32 %v3356, 7
        %v3358 = vsub.s32 %v3355, %v3357
        %v3359 = vrot.slane %v3351, %v3358
        %v3361 = vunpack.c.l.s4 1934713408
        %v3362 = vunpack.c.0.s8 %v3361
        %v3363 = vlaneseq
        %v3364 = vshrl.u32 %v3363, 7
        %v3365 = vsub.s32 %v3362, %v3364
        %v3366 = vrot.slane %v3352, %v3365
        %v3367 = vcombine.low %v3342, %v3350
        %v3368 = vcombine.high %v3342, %v3350
        %v3370 = vunpack.c.l.s4 1934713408
        %v3371 = vunpack.c.0.s8 %v3370
        %v3372 = vlaneseq
        %v3373 = vshrl.u32 %v3372, 7
        %v3374 = vsub.s32 %v3371, %v3373
        %v3375 = vrot.slane %v3367, %v3374
        %v3377 = vunpack.c.l.s4 1934713408
        %v3378 = vunpack.c.0.s8 %v3377
        %v3379 = vlaneseq
        %v3380 = vshrl.u32 %v3379, 7
        %v3381 = vsub.s32 %v3378, %v3380
        %v3382 = vrot.slane %v3368, %v3381
        %v3383 = vcombine.low %v3359, %v3375
        %v3384 = vcombine.high %v3359, %v3375
        %v3385 = vcombine.low %v3366, %v3382
        %v3386 = vcombine.high %v3366, %v3382
        %3388 = vrot.lane.b32.xlu0 %v3384, 8
        %v3389 = vpop.permute.xlu0 %3388
        %3392 = vrot.lane.b32.xlu0 %v3385, 16
        %v3393 = vpop.permute.xlu0 %3392
        %3396 = vrot.lane.b32.xlu0 %v3386, 24
        %v3397 = vpop.permute.xlu0 %3396
        %v3399 = vsel %vm1921, %v3383, %v3389
        %v3400 = vsel %vm2504, %v3399, %v3393
        %v3401 = vsel %vm2506, %v3400, %v3397
        %v3402 = vld [vmem:[#allocation18] sm:$0xf]
        %v3403 = vld [vmem:[#allocation18 + $0x4] sm:$0xf]
        %v3404 = vld [vmem:[#allocation18 + $0x8] sm:$0xf]
        %v3405 = vld [vmem:[#allocation18 + $0xc] sm:$0xf]
        %v3406 = vpack.c.bf16 %v3401, %v3401
        %v3407 = vld [vmem:[#allocation20] sm:$0x1]
        %v3409 = vlaneseq
        %v3410 = vshrl.u32 %v3409, 7
        %v3411 = vsub.s32 0, %v3410
        %v3412 = vrot.slane %v3407, %v3411
        %v3418 = vunpack.c.l.b16 %v3402
        %v3419 = vunpack.c.l.b16 %v3403
        %v3420 = vunpack.c.l.b16 %v3404
        %v3421 = vunpack.c.l.b16 %v3405
        %v3422 = vpack.c.b16 %v3419, %v3418
        %v3423 = vpack.c.b16 %v3421, %v3420
        %v3427 = vsel %vm1719, %v3406, 0
        %3429 = vmatprep.subr.bf16.mxu0 0
        %3430 = vmatpush1.bf16.msra.mxu0 %v3422
        %3431 = vmatprep.subr.bf16.mxu0 0
        %3432 = vmatpush1.bf16.msra.mxu0 %v3423
        %3433 = vmatprep.subr.bf16.mxu0 0
        %3434 = vmatpush1.bf16.msra.mxu0 0
        %3435 = vmatprep.subr.bf16.mxu0 0
        %3436 = vmatpush1.bf16.msra.mxu0 0
        %3437 = vmatprep.subr.bf16.mxu0 0
        %3438 = vmatpush1.bf16.msra.mxu0 0
        %3439 = vmatprep.subr.bf16.mxu0 0
        %3440 = vmatpush1.bf16.msra.mxu0 0
        %3441 = vmatprep.subr.bf16.mxu0 0
        %3442 = vmatpush1.bf16.msra.mxu0 0
        %3443 = vmatprep.subr.bf16.mxu0 0
        %3444 = vmatpush1.bf16.msra.mxu0 0
        %3445 = vmatprep.subr.bf16.mxu0 0
        %3446 = vmatpush1.bf16.msra.mxu0 0
        %3447 = vmatprep.subr.bf16.mxu0 0
        %3448 = vmatpush1.bf16.msra.mxu0 0
        %3449 = vmatprep.subr.bf16.mxu0 0
        %3450 = vmatpush1.bf16.msra.mxu0 0
        %3451 = vmatprep.subr.bf16.mxu0 0
        %3452 = vmatpush1.bf16.msra.mxu0 0
        %3453 = vmatprep.subr.bf16.mxu0 0
        %3454 = vmatpush1.bf16.msra.mxu0 0
        %3455 = vmatprep.subr.bf16.mxu0 0
        %3456 = vmatpush1.bf16.msra.mxu0 0
        %3457 = vmatprep.subr.bf16.mxu0 0
        %3458 = vmatpush1.bf16.msra.mxu0 0
        %3459 = vmatprep.subr.bf16.mxu0 0
        %3460 = vmatpush1.bf16.msra.mxu0 0
        %3461 = vmatprep.mubr.bf16.mxu0 0
        %3462 = vmatmul.mubr.bf16.gmra.mrb[0].mxu0 %v3427
        %v3463 = vpop.f32.mrb[0].mxu0
        %v3464 = vadd.f32 %v3412, %v3463
        %v3465 = vpop.f32.mrb[0].mxu0
        %v3466 = vpop.f32.mrb[0].mxu0
        %v3467 = vpop.f32.mrb[0].mxu0
        %3468 = vdwg.mxu0
        %v3469 = vadd.f32 %v3464, %v2605
        %v3470 = vld [vmem:[%s14] sm:$0x1]
        %v3471 = vld [vmem:[%s15] sm:$0x1]
        %v3472 = vsel %vm1719, %v3469, 0.0
        %3473 = vadd.xlane.f32.xlu0 %v3472
        %v3474 = vpop.xlane.xlu0 %3473
        %v3475 = vmul.f32 %v3474, %v2581
        %v3476 = vsub.f32 %v3469, %v3475
        %v3477 = vmul.f32 %v3476, %v3476
        %v3478 = vsel %vm1719, %v3477, 0.0
        %3479 = vadd.xlane.f32.xlu0 %v3478
        %v3480 = vpop.xlane.xlu0 %3479
        %v3481 = vmul.f32 %v3480, %v2581
        %v3482 = vadd.f32 %v3481, 1e-05
        %v3483 = vrsqrt.pop %v3482
        %v3484 = vmul.f32 %v3476, %v3483
        %v3486 = vlaneseq
        %v3487 = vshrl.u32 %v3486, 7
        %v3488 = vsub.s32 0, %v3487
        %v3489 = vrot.slane %v3470, %v3488
        %v3491 = vmul.f32 %v3489, %v3484
        %v3493 = vlaneseq
        %v3494 = vshrl.u32 %v3493, 7
        %v3495 = vsub.s32 0, %v3494
        %v3496 = vrot.slane %v3471, %v3495
        %v3498 = vadd.f32 %v3491, %v3496
        %v3499 = vld [vmem:[%s16] sm:$0xf]
        %v3500 = vld [vmem:[%s16 + $0x4] sm:$0xf]
        %v3501 = vld [vmem:[%s16 + $0x8] sm:$0xf]
        %v3502 = vld [vmem:[%s16 + $0xc] sm:$0xf]
        %v3503 = vpack.c.bf16 %v3498, %v3498
        %v3504 = vld [vmem:[%s17] sm:$0x1]
        %v3506 = vlaneseq
        %v3507 = vshrl.u32 %v3506, 7
        %v3508 = vsub.s32 0, %v3507
        %v3509 = vrot.slane %v3504, %v3508
        %v3515 = vunpack.c.l.b16 %v3499
        %v3516 = vunpack.c.l.b16 %v3500
        %v3517 = vunpack.c.l.b16 %v3501
        %v3518 = vunpack.c.l.b16 %v3502
        %v3519 = vpack.c.b16 %v3516, %v3515
        %v3520 = vpack.c.b16 %v3518, %v3517
        %v3524 = vsel %vm1719, %v3503, 0
        %3526 = vmatprep.subr.bf16.mxu0 0
        %3527 = vmatpush1.bf16.msra.mxu0 %v3519
        %3528 = vmatprep.subr.bf16.mxu0 0
        %3529 = vmatpush1.bf16.msra.mxu0 %v3520
        %3530 = vmatprep.subr.bf16.mxu0 0
        %3531 = vmatpush1.bf16.msra.mxu0 0
        %3532 = vmatprep.subr.bf16.mxu0 0
        %3533 = vmatpush1.bf16.msra.mxu0 0
        %3534 = vmatprep.subr.bf16.mxu0 0
        %3535 = vmatpush1.bf16.msra.mxu0 0
        %3536 = vmatprep.subr.bf16.mxu0 0
        %3537 = vmatpush1.bf16.msra.mxu0 0
        %3538 = vmatprep.subr.bf16.mxu0 0
        %3539 = vmatpush1.bf16.msra.mxu0 0
        %3540 = vmatprep.subr.bf16.mxu0 0
        %3541 = vmatpush1.bf16.msra.mxu0 0
        %3542 = vmatprep.subr.bf16.mxu0 0
        %3543 = vmatpush1.bf16.msra.mxu0 0
        %3544 = vmatprep.subr.bf16.mxu0 0
        %3545 = vmatpush1.bf16.msra.mxu0 0
        %3546 = vmatprep.subr.bf16.mxu0 0
        %3547 = vmatpush1.bf16.msra.mxu0 0
        %3548 = vmatprep.subr.bf16.mxu0 0
        %3549 = vmatpush1.bf16.msra.mxu0 0
        %3550 = vmatprep.subr.bf16.mxu0 0
        %3551 = vmatpush1.bf16.msra.mxu0 0
        %3552 = vmatprep.subr.bf16.mxu0 0
        %3553 = vmatpush1.bf16.msra.mxu0 0
        %3554 = vmatprep.subr.bf16.mxu0 0
        %3555 = vmatpush1.bf16.msra.mxu0 0
        %3556 = vmatprep.subr.bf16.mxu0 0
        %3557 = vmatpush1.bf16.msra.mxu0 0
        %3558 = vmatprep.mubr.bf16.mxu0 0
        %3559 = vmatmul.mubr.bf16.gmra.mrb[0].mxu0 %v3524
        %v3560 = vpop.f32.mrb[0].mxu0
        %v3561 = vadd.f32 %v3509, %v3560
        %v3562 = vpop.f32.mrb[0].mxu0
        %v3563 = vpop.f32.mrb[0].mxu0
        %v3564 = vpop.f32.mrb[0].mxu0
        %3565 = vdwg.mxu0
        %v3566 = vmax.f32 %v3561, 0.0
        %v3567 = vld [vmem:[%s18] sm:$0xf]
        %v3568 = vld [vmem:[%s18 + $0x4] sm:$0xf]
        %v3569 = vld [vmem:[%s18 + $0x8] sm:$0xf]
        %v3570 = vld [vmem:[%s18 + $0xc] sm:$0xf]
        %v3571 = vld [vmem:[%s18 + $0x10] sm:$0xf]
        %v3572 = vld [vmem:[%s18 + $0x14] sm:$0xf]
        %v3573 = vld [vmem:[%s18 + $0x18] sm:$0xf]
        %v3574 = vld [vmem:[%s18 + $0x1c] sm:$0xf]
        %v3575 = vpack.c.bf16 %v3566, %v3566
        %v3576 = vld [vmem:[%s19] sm:$0x1]
        %v3578 = vlaneseq
        %v3579 = vshrl.u32 %v3578, 7
        %v3580 = vsub.s32 0, %v3579
        %v3581 = vrot.slane %v3576, %v3580
        %v3591 = vunpack.c.l.b16 %v3567
        %v3592 = vunpack.c.l.b16 %v3568
        %v3593 = vunpack.c.l.b16 %v3569
        %v3594 = vunpack.c.l.b16 %v3570
        %v3595 = vunpack.c.l.b16 %v3571
        %v3596 = vunpack.c.l.b16 %v3572
        %v3597 = vunpack.c.l.b16 %v3573
        %v3598 = vunpack.c.l.b16 %v3574
        %v3599 = vpack.c.b16 %v3592, %v3591
        %v3600 = vpack.c.b16 %v3594, %v3593
        %v3601 = vpack.c.b16 %v3596, %v3595
        %v3602 = vpack.c.b16 %v3598, %v3597
        %vm3607 = vcmask 523264
        %v3609 = vsel %vm3607, %v3575, 0
        %3611 = vmatprep.subr.bf16.mxu0 0
        %3612 = vmatpush1.bf16.msra.mxu0 %v3599
        %3613 = vmatprep.subr.bf16.mxu0 0
        %3614 = vmatpush1.bf16.msra.mxu0 %v3600
        %3615 = vmatprep.subr.bf16.mxu0 0
        %3616 = vmatpush1.bf16.msra.mxu0 %v3601
        %3617 = vmatprep.subr.bf16.mxu0 0
        %3618 = vmatpush1.bf16.msra.mxu0 %v3602
        %3619 = vmatprep.subr.bf16.mxu0 0
        %3620 = vmatpush1.bf16.msra.mxu0 0
        %3621 = vmatprep.subr.bf16.mxu0 0
        %3622 = vmatpush1.bf16.msra.mxu0 0
        %3623 = vmatprep.subr.bf16.mxu0 0
        %3624 = vmatpush1.bf16.msra.mxu0 0
        %3625 = vmatprep.subr.bf16.mxu0 0
        %3626 = vmatpush1.bf16.msra.mxu0 0
        %3627 = vmatprep.subr.bf16.mxu0 0
        %3628 = vmatpush1.bf16.msra.mxu0 0
        %3629 = vmatprep.subr.bf16.mxu0 0
        %3630 = vmatpush1.bf16.msra.mxu0 0
        %3631 = vmatprep.subr.bf16.mxu0 0
        %3632 = vmatpush1.bf16.msra.mxu0 0
        %3633 = vmatprep.subr.bf16.mxu0 0
        %3634 = vmatpush1.bf16.msra.mxu0 0
        %3635 = vmatprep.subr.bf16.mxu0 0
        %3636 = vmatpush1.bf16.msra.mxu0 0
        %3637 = vmatprep.subr.bf16.mxu0 0
        %3638 = vmatpush1.bf16.msra.mxu0 0
        %3639 = vmatprep.subr.bf16.mxu0 0
        %3640 = vmatpush1.bf16.msra.mxu0 0
        %3641 = vmatprep.subr.bf16.mxu0 0
        %3642 = vmatpush1.bf16.msra.mxu0 0
        %3643 = vmatprep.mubr.bf16.mxu0 0
        %3644 = vmatmul.mubr.bf16.gmra.mrb[0].mxu0 %v3609
        %v3645 = vpop.f32.mrb[0].mxu0
        %v3646 = vadd.f32 %v3581, %v3645
        %v3647 = vpop.f32.mrb[0].mxu0
        %v3648 = vpop.f32.mrb[0].mxu0
        %v3649 = vpop.f32.mrb[0].mxu0
        %3650 = vdwg.mxu0
        %v3651 = vadd.f32 %v3646, %v3498
        %v3652 = vld [vmem:[%s20] sm:$0x1]
        %v3653 = vld [vmem:[%s21] sm:$0x1]
        %v3654 = vsel %vm1719, %v3651, 0.0
        %3655 = vadd.xlane.f32.xlu0 %v3654
        %v3656 = vpop.xlane.xlu0 %3655
        %v3657 = vmul.f32 %v3656, %v2581
        %v3658 = vsub.f32 %v3651, %v3657
        %v3659 = vmul.f32 %v3658, %v3658
        %v3660 = vsel %vm1719, %v3659, 0.0
        %3661 = vadd.xlane.f32.xlu0 %v3660
        %v3662 = vpop.xlane.xlu0 %3661
        %v3663 = vmul.f32 %v3662, %v2581
        %v3664 = vadd.f32 %v3663, 1e-05
        %v3665 = vrsqrt.pop %v3664
        %v3666 = vmul.f32 %v3658, %v3665
        %v3668 = vlaneseq
        %v3669 = vshrl.u32 %v3668, 7
        %v3670 = vsub.s32 0, %v3669
        %v3671 = vrot.slane %v3652, %v3670
        %v3673 = vmul.f32 %v3671, %v3666
        %v3675 = vlaneseq
        %v3676 = vshrl.u32 %v3675, 7
        %v3677 = vsub.s32 0, %v3676
        %v3678 = vrot.slane %v3653, %v3677
        %v3680 = vadd.f32 %v3673, %v3678
        %3681 = vst.msk [vmem:[%s820] sm:$0xff] %vm1719, %v3680
        %s3682 = sand.u32 %s535, 1
        %s3683 = scalar_lea.sflag [#allocation8], %s3682
        %s3684 = sand.u32 %s535, 1
        %s3685 = smul.addr %s3684, 8
        %s3686 = scalar_lea.vmem [#allocation21], %s3685
        // Predicated region
        $region149: #{tpu_custom_call.1} parent=107 // pred_check
          %p3687 = pneg %p545
        $region150: #{tpu_custom_call.1} parent=107 // pred_check_branch
          %3689 = sbr.rel (%p3687) target = $region152
        $region151: #{tpu_custom_call.1} parent=107 // pred_region
          %s3691 = ssub.s32 128, 128
          %3692 = vsyncadd %s3683, %s3691
          %s3693 = sadd.s32 %s46, %s45
          %s3694 = smul.addr %s3693, 128
          %s3695 = scalar_lea.hbm %s22, %s3694
          %s3697 = sshll.u32 %s3686, 4
          %s3698 = int_to_ptr.vmem [resolvable:$true] %s3697
          %3700 = dma.vmem_to_hbm [thread:$0]  %s3698, 128, %s3695, %s3683
        $region152: #{tpu_custom_call.1} parent=107 // pred_fallthru
          _
      $region108: #{tpu_custom_call.1} parent=5 // pred_fallthru
        _
      %p3701 = scmp.le.s32.totalorder 2, %s36
      // Predicated region
      $region153: #{tpu_custom_call.1} parent=5 // pred_check
        %p3702 = pneg %p3701
      $region154: #{tpu_custom_call.1} parent=5 // pred_check_branch
        %3704 = sbr.rel (%p3702) target = $region156
      $region155: #{tpu_custom_call.1} parent=5 // pred_region
        %s3705 = ssub.s32 %s36, 2
        // Predicated region
        $region157: #{tpu_custom_call.1} parent=155 // pred_check
          %p3706 = pneg %p551
        $region158: #{tpu_custom_call.1} parent=155 // pred_check_branch
          %3708 = sbr.rel (%p3706) target = $region160
        $region159: #{tpu_custom_call.1} parent=155 // pred_region
          %s3709 = sand.u32 %s536, 1
          %s3710 = scalar_lea.sflag [#allocation8], %s3709
          %s3711 = sand.u32 %s536, 1
          %s3712 = smul.addr %s3711, 8
          %s3713 = scalar_lea.vmem [#allocation21], %s3712
          %3714 = dma.done %s3710, 128
        $region160: #{tpu_custom_call.1} parent=155 // pred_fallthru
          _
      $region156: #{tpu_custom_call.1} parent=5 // pred_fallthru
        _
    $region6: #{tpu_custom_call.1} parent=1 // loop_footer
      %s40 = sadd.s32 1, %s36
    $region7: #{tpu_custom_call.1} parent=1 // loop_footer_branch
      %35 = sbr.rel target = $region3
    $region8: #{tpu_custom_call.1} parent=1 // loop_exit
      _
    %3715 = vsyncpa [#allocation7], 1
    %s3716 = scalar_lea.sflag [#allocation7], 1
    %3717 = vsyncpa %s3716, 1
    %3718 = vsyncpa [#allocation10], 1
    %3719 = vsyncpa [#allocation13], 1
    %3720 = vsyncpa [#allocation16], 1
    %3721 = vsyncpa [#allocation19], 1
    %3722 = vsyncpa [#allocation8], 1
    %s3723 = scalar_lea.sflag [#allocation8], 1
    %3724 = vsyncpa %s3723, 1

</llo_original>
